<compile_context>
chip_gen: v5e
topology: v5e:2x2
jax: 0.10.0
libtpu: 0.0.40
codegen_flags: <defaults>
</compile_context>

<pallas_src>
import functools

import jax
import jax.numpy as jnp
from jax.experimental import pallas as pl
from jax.experimental.pallas import tpu as pltpu


_NEG_BIG = -1e9  # large finite negative (not -inf) for cross-window scores


# ----------------------------------------------------------------------------
# Pallas kernel: one grid step = packs_per_step packs of pack_rows rows each.
#   fused QKV projection + block-diagonal packed multi-head attention
#   (scaled QK^T + combined rel-pos-bias/mask/block-diag bias + softmax)
#   + per-head-accumulated output projection.
# ----------------------------------------------------------------------------
def _window_attn_kernel(x_ref, wqkv_ref, bqkv_ref, wproj_ref, bproj_ref,
                        bias_ref, o_ref, qkv_ref, *, num_heads, head_dim,
                        pack_rows, packs_per_step, compute_dtype):
    C = num_heads * head_dim
    P = pack_rows

    # ---- fused QKV projection for the whole step (one lane-dense matmul) ----
    qkv = jnp.dot(x_ref[...].astype(compute_dtype), wqkv_ref[...],
                  preferred_element_type=jnp.float32)            # (R, 3C) f32
    # Stage once as bf16 in VMEM (full-lane-width store, bounds live range).
    qkv_ref[...] = (qkv + bqkv_ref[...]).astype(compute_dtype)   # (R, 3C) bf16

    # ---- block-diagonal packed attention, one (P, P) tile per head/pack ----
    for pk in range(packs_per_step):
        r0 = pk * P
        y = jnp.zeros((P, C), jnp.float32)          # full-width f32 accumulator
        for h in range(num_heads):
            lo = h * head_dim
            q = qkv_ref[r0:r0 + P, lo:lo + head_dim]                  # (P, dh)
            k = qkv_ref[r0:r0 + P, C + lo:C + lo + head_dim]          # (P, dh)
            v = qkv_ref[r0:r0 + P, 2 * C + lo:2 * C + lo + head_dim]  # (P, dh)

            # scale is pre-folded into the Q columns of wqkv/bqkv.
            s = jax.lax.dot_general(q, k, (((1,), (1,)), ((), ())),
                                    preferred_element_type=jnp.float32)  # (P,P)
            # rel-pos bias + mask + (-1e9 on cross-window entries), precombined
            s = s + bias_ref[h]

            # numerically stable softmax (f32 math; v5e has no bf16 VPU/EUP)
            s = s - jnp.max(s, axis=-1, keepdims=True)
            p = jnp.exp(s)
            p = p * pl.reciprocal(jnp.sum(p, axis=-1, keepdims=True),
                                  approx=True)

            # TODO(synk): attn_drop / proj_drop are identity at p=0.0 (eval).
            o_h = jnp.dot(p.astype(compute_dtype), v,
                          preferred_element_type=jnp.float32)          # (P, dh)
            # Fold head output straight into the output projection: no masked
            # 32-lane scratch stores, no f32 (R, C) scratch round-trip.
            y = y + jnp.dot(o_h.astype(compute_dtype),
                            wproj_ref[lo:lo + head_dim, :],
                            preferred_element_type=jnp.float32)        # (P, C)

        o_ref[r0:r0 + P, :] = (y + bproj_ref[...]).astype(o_ref.dtype)


def _choose_packing(B_, N, nW, pack_rows=256, step_rows=512):
    """Pick (G, K): windows per pack and packs per grid step.

    Constraints: G divides B_; if a mask is used, G is a multiple of nW so
    every pack sees the identical window-id pattern (0..nW-1 repeated), which
    lets a single (nH, G*N, G*N) bias block serve all packs; the grid keeps
    >=2 steps when possible (v7x has 2 TensorCores)."""
    G = nW if nW is not None else 1
    while (G * 2) <= B_ and B_ % (G * 2) == 0 and (G * 2) * N <= pack_rows:
        G *= 2
    packs = B_ // G
    K = 1
    while (packs % (K * 2) == 0 and (K * 2) * G * N <= step_rows
           and packs // (K * 2) >= 2):
        K *= 2
    return G, K


def prepare_kernel_params(params, num_heads, compute_dtype=jnp.bfloat16):
    """One-time parameter transform: fold the attention scale into the Q
    columns of the QKV projection and cast weights to the MXU dtype."""
    wqkv, bqkv = params["wqkv"], params["bqkv"]
    wproj, bproj = params["wproj"], params["bproj"]
    C = wproj.shape[0]
    head_dim = C // num_heads
    scale = head_dim ** (-0.5)

    col_scale = jnp.concatenate(
        [jnp.full((C,), scale, jnp.float32), jnp.ones((2 * C,), jnp.float32)])
    return {
        "wqkv": (wqkv * col_scale[None, :]).astype(compute_dtype),
        "bqkv": (bqkv * col_scale).reshape(1, 3 * C).astype(jnp.float32),
        "wproj": wproj.astype(compute_dtype),
        "bproj": bproj.reshape(1, C).astype(jnp.float32),
    }


def window_attention_pallas(x, kparams, rel_pos_bias, mask, num_heads,
                            pack_rows=256, step_rows=512,
                            compute_dtype=jnp.bfloat16, out_dtype=None):
    """x: (B_, N, C); rel_pos_bias: (nH, N, N); mask: (nW, N, N) or None."""
    B_, N, C = x.shape
    nH = num_heads
    head_dim = C // nH
    assert nH * head_dim == C
    out_dtype = out_dtype or x.dtype   # TODO(synk): bf16 out halves v5e stores

    nW = None
    if mask is not None:
        nW = mask.shape[0]
        assert B_ % nW == 0

    G, K = _choose_packing(B_, N, nW, pack_rows, step_rows)
    P = G * N                 # rows per pack = block-diagonal attention tile
    R = K * P                 # rows per grid step
    total_rows = B_ * N
    assert total_rows % R == 0
    assert (R % 8 == 0) or (R == total_rows), "step rows must be 8-aligned"

    # ---- precombined lane-dense bias block: (nH, P, P) f32 ----
    # diagonal NxN blocks = rel-pos-bias (+ per-window mask); off-diagonal
    # (cross-window) entries = -1e9 so softmax zeroes them out.
    if mask is not None:
        slot_win = jnp.arange(G) % nW            # window id of each pack slot
        blocks = (rel_pos_bias[:, None, :, :].astype(jnp.float32)
                  + mask[slot_win][None, :, :, :].astype(jnp.float32))
    else:
        blocks = jnp.broadcast_to(
            rel_pos_bias[:, None, :, :].astype(jnp.float32), (nH, G, N, N))
    diag = jnp.eye(G, dtype=bool)[None, :, None, :, None]       # (1,G,1,G,1)
    bias = jnp.where(diag, blocks[:, :, :, None, :], _NEG_BIG)  # (nH,G,N,G,N)
    bias = bias.reshape(nH, P, P)

    # lane-dense 2-D row layout; reshape is free (contiguous) in the wrapper.
    x2d = x.reshape(total_rows, C).astype(compute_dtype)

    kernel = functools.partial(
        _window_attn_kernel, num_heads=nH, head_dim=head_dim,
        pack_rows=P, packs_per_step=K, compute_dtype=compute_dtype)

    out2d = pl.pallas_call(
        kernel,
        out_shape=jax.ShapeDtypeStruct((total_rows, C), out_dtype),
        grid_spec=pltpu.PrefetchScalarGridSpec(
            num_scalar_prefetch=0,
            grid=(total_rows // R,),
            in_specs=[
                pl.BlockSpec((R, C), lambda i: (i, 0)),          # x rows
                pl.BlockSpec((C, 3 * C), lambda i: (0, 0)),      # wqkv (bf16)
                pl.BlockSpec((1, 3 * C), lambda i: (0, 0)),      # bqkv (f32)
                pl.BlockSpec((C, C), lambda i: (0, 0)),          # wproj (bf16)
                pl.BlockSpec((1, C), lambda i: (0, 0)),          # bproj (f32)
                pl.BlockSpec((nH, P, P), lambda i: (0, 0, 0)),   # packed bias
            ],
            out_specs=pl.BlockSpec((R, C), lambda i: (i, 0)),
            scratch_shapes=[pltpu.VMEM((R, 3 * C), compute_dtype)],
        ),
        compiler_params=pltpu.CompilerParams(
            dimension_semantics=("parallel",),
            vmem_limit_bytes=32 * 1024 * 1024),
    )(x2d, kparams["wqkv"], kparams["bqkv"], kparams["wproj"],
      kparams["bproj"], bias)
    return out2d.reshape(B_, N, C)


# ----------------------------------------------------------------------------
# Parameter / buffer construction (deterministic, mirrors nn.Module __init__)
# ----------------------------------------------------------------------------
def make_params(key, dim, window_size, num_heads):
    Wh, Ww = window_size
    k1, k2, k3, k4, k5 = jax.random.split(key, 5)
    return {
        "wqkv": jax.random.normal(k1, (dim, 3 * dim), jnp.float32) * 0.02,
        "bqkv": jax.random.normal(k2, (3 * dim,), jnp.float32) * 0.02,
        "wproj": jax.random.normal(k3, (dim, dim), jnp.float32) * 0.02,
        "bproj": jax.random.normal(k4, (dim,), jnp.float32) * 0.02,
        # trunc_normal_(std=0.02) approximated by plain normal (synthetic init)
        "rpb_table": jax.random.normal(
            k5, ((2 * Wh - 1) * (2 * Ww - 1), num_heads), jnp.float32) * 0.02,
    }


def relative_position_index(window_size):
    Wh, Ww = window_size
    coords = jnp.stack(jnp.meshgrid(jnp.arange(Wh), jnp.arange(Ww),
                                    indexing="ij"))                    # (2,Wh,Ww)
    coords_flatten = coords.reshape(2, -1)                             # (2, N)
    rel = coords_flatten[:, :, None] - coords_flatten[:, None, :]      # (2,N,N)
    rel = jnp.transpose(rel, (1, 2, 0))                                # (N,N,2)
    rel = rel.at[:, :, 0].add(Wh - 1)
    rel = rel.at[:, :, 1].add(Ww - 1)
    rel = rel.at[:, :, 0].multiply(2 * Ww - 1)
    return rel.sum(-1)                                                 # (N,N)


def gather_rel_pos_bias(table, index, num_heads):
    N = index.shape[0]
    bias = table[index.reshape(-1)].reshape(N, N, num_heads)
    return jnp.transpose(bias, (2, 0, 1)).astype(jnp.float32)          # (nH,N,N)


# ----------------------------------------------------------------------------
# Pure-JAX f32 reference (mirrors the PyTorch forward) for verification
# ----------------------------------------------------------------------------
def window_attention_ref(x, params, rel_pos_bias, mask, num_heads):
    B_, N, C = x.shape
    head_dim = C // num_heads
    scale = head_dim ** (-0.5)
    qkv = x @ params["wqkv"] + params["bqkv"]
    qkv = qkv.reshape(B_, N, 3, num_heads, head_dim).transpose(2, 0, 3, 1, 4)
    q, k, v = qkv[0], qkv[1], qkv[2]
    q = q * scale
    attn = jnp.einsum("bhnd,bhmd->bhnm", q, k)
    attn = attn + rel_pos_bias[None]
    if mask is not None:
        nW = mask.shape[0]
        attn = attn.reshape(B_ // nW, nW, num_heads, N, N) + mask[None, :, None]
        attn = attn.reshape(B_, num_heads, N, N)
    attn = jax.nn.softmax(attn, axis=-1)
    out = jnp.einsum("bhnm,bhmd->bhnd", attn, v)
    out = out.transpose(0, 2, 1, 3).reshape(B_, N, C)
    return out @ params["wproj"] + params["bproj"]


if __name__ == "__main__":
    # Swin-like small config: head_dim=32, C=128 keeps everything lane-dense.
    dim = 128
    num_heads = 4
    window_size = (4, 4)
    N = window_size[0] * window_size[1]            # 16 tokens / window
    batch = 8
    nW = 4
    B_ = batch * nW                                # 32 windows total

    key = jax.random.PRNGKey(0)
    kx, km, kp = jax.random.split(key, 3)

    x = jax.random.normal(kx, (B_, N, dim), jnp.float32)

    # 0 / -100 attention mask, like a shifted-window mask
    mask = (jax.random.uniform(km, (nW, N, N)) > 0.8).astype(jnp.float32) * (-100.0)

    params = make_params(kp, dim, window_size, num_heads)
    rpi = relative_position_index(window_size)
    rel_pos_bias = gather_rel_pos_bias(params["rpb_table"], rpi, num_heads)

    kparams = prepare_kernel_params(params, num_heads)

    # masked path
    out = jax.block_until_ready(
        window_attention_pallas(x, kparams, rel_pos_bias, mask, num_heads))
    ref = window_attention_ref(x, params, rel_pos_bias, mask, num_heads)
    err = float(jnp.max(jnp.abs(out - ref)))
    assert jnp.allclose(out, ref, atol=1e-2, rtol=1e-2), err

    # mask=None path
    out2 = jax.block_until_ready(
        window_attention_pallas(x, kparams, rel_pos_bias, None, num_heads))
    ref2 = window_attention_ref(x, params, rel_pos_bias, None, num_heads)
    err2 = float(jnp.max(jnp.abs(out2 - ref2)))
    assert jnp.allclose(out2, ref2, atol=1e-2, rtol=1e-2), err2

    print("KERNEL_OK")
</pallas_src>

<mosaic_0001>
module attributes {stable_mosaic.version = 11 : i64} {
  func.func @_window_attn_kernel(%arg0: i32, %arg1: memref<256x128xbf16, #tpu.memory_space<vmem>>, %arg2: memref<128x384xbf16, #tpu.memory_space<vmem>>, %arg3: memref<1x384xf32, #tpu.memory_space<vmem>>, %arg4: memref<128x128xbf16, #tpu.memory_space<vmem>>, %arg5: memref<1x128xf32, #tpu.memory_space<vmem>>, %arg6: memref<4x256x256xf32, #tpu.memory_space<vmem>>, %arg7: memref<256x128xf32, #tpu.memory_space<vmem>>, %arg8: memref<256x384xbf16, #tpu.memory_space<vmem>>) attributes {dimension_semantics = [#tpu.dimension_semantics<parallel>], iteration_bounds = array<i64: 2>, scalar_prefetch = 0 : i64, scratch_operands = 1 : i64, tpu.core_type = #tpu.core_type<tc>, window_params = [{transform_indices = @transform_0, window_bounds = array<i64: 256, 128>}, {pipeline_mode = #tpu.pipeline_mode<synchronous>, transform_indices = @transform_1, window_bounds = array<i64: 128, 384>}, {pipeline_mode = #tpu.pipeline_mode<synchronous>, transform_indices = @transform_2, window_bounds = array<i64: 1, 384>}, {pipeline_mode = #tpu.pipeline_mode<synchronous>, transform_indices = @transform_3, window_bounds = array<i64: 128, 128>}, {pipeline_mode = #tpu.pipeline_mode<synchronous>, transform_indices = @transform_4, window_bounds = array<i64: 1, 128>}, {pipeline_mode = #tpu.pipeline_mode<synchronous>, transform_indices = @transform_5, window_bounds = array<i64: 4, 256, 256>}, {transform_indices = @transform_6, window_bounds = array<i64: 256, 128>}]} {
    %c0 = arith.constant 0 : index
    %c0_0 = arith.constant 0 : index
    %0 = vector.load %arg1[%c0, %c0_0] : memref<256x128xbf16, #tpu.memory_space<vmem>>, vector<256x128xbf16>
    %c0_1 = arith.constant 0 : index
    %c0_2 = arith.constant 0 : index
    %1 = vector.load %arg2[%c0_1, %c0_2] : memref<128x384xbf16, #tpu.memory_space<vmem>>, vector<128x384xbf16>
    %cst = arith.constant dense<0.000000e+00> : vector<256x384xf32>
    %2 = tpu.matmul %0, %1, %cst {dimension_numbers = #tpu.dot_dimension_numbers<[1], [0], [0], [1], [0, 0, 1, 1], [], []>} : vector<256x128xbf16>, vector<128x384xbf16>, vector<256x384xf32> -> vector<256x384xf32>
    %c0_3 = arith.constant 0 : index
    %c0_4 = arith.constant 0 : index
    %3 = vector.load %arg3[%c0_3, %c0_4] : memref<1x384xf32, #tpu.memory_space<vmem>>, vector<1x384xf32>
    %4 = vector.broadcast %3 : vector<1x384xf32> to vector<256x384xf32>
    %5 = arith.addf %2, %4 : vector<256x384xf32>
    %6 = arith.truncf %5 : vector<256x384xf32> to vector<256x384xbf16>
    %c0_5 = arith.constant 0 : index
    %c0_6 = arith.constant 0 : index
    %7 = vector.load %arg8[%c0_5, %c0_6] : memref<256x384xbf16, #tpu.memory_space<vmem>>, vector<256x384xbf16>
    tpu.vector_store %arg8[%c0_5, %c0_6], %6 {strides = array<i32>} : memref<256x384xbf16, #tpu.memory_space<vmem>>, vector<256x384xbf16>,
    %cst_7 = arith.constant 0.000000e+00 : f32
    %8 = vector.broadcast %cst_7 : f32 to vector<256x128xf32>
    %c0_8 = arith.constant 0 : index
    %c0_9 = arith.constant 0 : index
    %9 = vector.load %arg8[%c0_8, %c0_9] : memref<256x384xbf16, #tpu.memory_space<vmem>>, vector<256x32xbf16>
    %c0_10 = arith.constant 0 : index
    %c128 = arith.constant 128 : index
    %10 = vector.load %arg8[%c0_10, %c128] : memref<256x384xbf16, #tpu.memory_space<vmem>>, vector<256x32xbf16>
    %c0_11 = arith.constant 0 : index
    %c256 = arith.constant 256 : index
    %11 = vector.load %arg8[%c0_11, %c256] : memref<256x384xbf16, #tpu.memory_space<vmem>>, vector<256x32xbf16>
    %cst_12 = arith.constant dense<0.000000e+00> : vector<256x256xf32>
    %12 = tpu.matmul %9, %10, %cst_12 {dimension_numbers = #tpu.dot_dimension_numbers<[1], [1], [0], [0], [0, 0, 1, 0], [], []>} : vector<256x32xbf16>, vector<256x32xbf16>, vector<256x256xf32> -> vector<256x256xf32>
    %c0_13 = arith.constant 0 : index
    %c0_14 = arith.constant 0 : index
    %c0_15 = arith.constant 0 : index
    %13 = vector.load %arg6[%c0_13, %c0_14, %c0_15] : memref<4x256x256xf32, #tpu.memory_space<vmem>>, vector<1x256x256xf32>
    %14 = vector.shape_cast %13 : vector<1x256x256xf32> to vector<256x256xf32>
    %15 = arith.addf %12, %14 : vector<256x256xf32>
    %cst_16 = arith.constant dense<0xFF800000> : vector<256xf32>
    %16 = vector.multi_reduction <maximumf>, %15, %cst_16 [1] : vector<256x256xf32> to vector<256xf32>
    %17 = vector.shape_cast %16 : vector<256xf32> to vector<256x1xf32>
    %18 = vector.broadcast %17 : vector<256x1xf32> to vector<256x256xf32>
    %19 = arith.subf %15, %18 : vector<256x256xf32>
    %20 = math.exp %19 : vector<256x256xf32>
    %cst_17 = arith.constant dense<0.000000e+00> : vector<256xf32>
    %21 = vector.multi_reduction <add>, %20, %cst_17 [1] : vector<256x256xf32> to vector<256xf32>
    %22 = vector.shape_cast %21 : vector<256xf32> to vector<256x1xf32>
    %23 = tpu.reciprocal %22 {approx = true} : vector<256x1xf32> -> vector<256x1xf32>
    %24 = vector.broadcast %23 : vector<256x1xf32> to vector<256x256xf32>
    %25 = arith.mulf %20, %24 : vector<256x256xf32>
    %26 = arith.truncf %25 : vector<256x256xf32> to vector<256x256xbf16>
    %cst_18 = arith.constant dense<0.000000e+00> : vector<256x32xf32>
    %27 = tpu.matmul %26, %11, %cst_18 {dimension_numbers = #tpu.dot_dimension_numbers<[1], [0], [0], [1], [0, 0, 1, 1], [], []>} : vector<256x256xbf16>, vector<256x32xbf16>, vector<256x32xf32> -> vector<256x32xf32>
    %28 = arith.truncf %27 : vector<256x32xf32> to vector<256x32xbf16>
    %c0_19 = arith.constant 0 : index
    %c0_20 = arith.constant 0 : index
    %29 = vector.load %arg4[%c0_19, %c0_20] : memref<128x128xbf16, #tpu.memory_space<vmem>>, vector<32x128xbf16>
    %cst_21 = arith.constant dense<0.000000e+00> : vector<256x128xf32>
    %30 = tpu.matmul %28, %29, %cst_21 {dimension_numbers = #tpu.dot_dimension_numbers<[1], [0], [0], [1], [0, 0, 1, 1], [], []>} : vector<256x32xbf16>, vector<32x128xbf16>, vector<256x128xf32> -> vector<256x128xf32>
    %31 = arith.addf %8, %30 : vector<256x128xf32>
    %c0_22 = arith.constant 0 : index
    %c32 = arith.constant 32 : index
    %32 = vector.load %arg8[%c0_22, %c32] : memref<256x384xbf16, #tpu.memory_space<vmem>>, vector<256x32xbf16>
    %c0_23 = arith.constant 0 : index
    %c160 = arith.constant 160 : index
    %33 = vector.load %arg8[%c0_23, %c160] : memref<256x384xbf16, #tpu.memory_space<vmem>>, vector<256x32xbf16>
    %c0_24 = arith.constant 0 : index
    %c288 = arith.constant 288 : index
    %34 = vector.load %arg8[%c0_24, %c288] : memref<256x384xbf16, #tpu.memory_space<vmem>>, vector<256x32xbf16>
    %cst_25 = arith.constant dense<0.000000e+00> : vector<256x256xf32>
    %35 = tpu.matmul %32, %33, %cst_25 {dimension_numbers = #tpu.dot_dimension_numbers<[1], [1], [0], [0], [0, 0, 1, 0], [], []>} : vector<256x32xbf16>, vector<256x32xbf16>, vector<256x256xf32> -> vector<256x256xf32>
    %c1 = arith.constant 1 : index
    %c0_26 = arith.constant 0 : index
    %c0_27 = arith.constant 0 : index
    %36 = vector.load %arg6[%c1, %c0_26, %c0_27] : memref<4x256x256xf32, #tpu.memory_space<vmem>>, vector<1x256x256xf32>
    %37 = vector.shape_cast %36 : vector<1x256x256xf32> to vector<256x256xf32>
    %38 = arith.addf %35, %37 : vector<256x256xf32>
    %cst_28 = arith.constant dense<0xFF800000> : vector<256xf32>
    %39 = vector.multi_reduction <maximumf>, %38, %cst_28 [1] : vector<256x256xf32> to vector<256xf32>
    %40 = vector.shape_cast %39 : vector<256xf32> to vector<256x1xf32>
    %41 = vector.broadcast %40 : vector<256x1xf32> to vector<256x256xf32>
    %42 = arith.subf %38, %41 : vector<256x256xf32>
    %43 = math.exp %42 : vector<256x256xf32>
    %cst_29 = arith.constant dense<0.000000e+00> : vector<256xf32>
    %44 = vector.multi_reduction <add>, %43, %cst_29 [1] : vector<256x256xf32> to vector<256xf32>
    %45 = vector.shape_cast %44 : vector<256xf32> to vector<256x1xf32>
    %46 = tpu.reciprocal %45 {approx = true} : vector<256x1xf32> -> vector<256x1xf32>
    %47 = vector.broadcast %46 : vector<256x1xf32> to vector<256x256xf32>
    %48 = arith.mulf %43, %47 : vector<256x256xf32>
    %49 = arith.truncf %48 : vector<256x256xf32> to vector<256x256xbf16>
    %cst_30 = arith.constant dense<0.000000e+00> : vector<256x32xf32>
    %50 = tpu.matmul %49, %34, %cst_30 {dimension_numbers = #tpu.dot_dimension_numbers<[1], [0], [0], [1], [0, 0, 1, 1], [], []>} : vector<256x256xbf16>, vector<256x32xbf16>, vector<256x32xf32> -> vector<256x32xf32>
    %51 = arith.truncf %50 : vector<256x32xf32> to vector<256x32xbf16>
    %c32_31 = arith.constant 32 : index
    %c0_32 = arith.constant 0 : index
    %52 = vector.load %arg4[%c32_31, %c0_32] : memref<128x128xbf16, #tpu.memory_space<vmem>>, vector<32x128xbf16>
    %cst_33 = arith.constant dense<0.000000e+00> : vector<256x128xf32>
    %53 = tpu.matmul %51, %52, %cst_33 {dimension_numbers = #tpu.dot_dimension_numbers<[1], [0], [0], [1], [0, 0, 1, 1], [], []>} : vector<256x32xbf16>, vector<32x128xbf16>, vector<256x128xf32> -> vector<256x128xf32>
    %54 = arith.addf %31, %53 : vector<256x128xf32>
    %c0_34 = arith.constant 0 : index
    %c64 = arith.constant 64 : index
    %55 = vector.load %arg8[%c0_34, %c64] : memref<256x384xbf16, #tpu.memory_space<vmem>>, vector<256x32xbf16>
    %c0_35 = arith.constant 0 : index
    %c192 = arith.constant 192 : index
    %56 = vector.load %arg8[%c0_35, %c192] : memref<256x384xbf16, #tpu.memory_space<vmem>>, vector<256x32xbf16>
    %c0_36 = arith.constant 0 : index
    %c320 = arith.constant 320 : index
    %57 = vector.load %arg8[%c0_36, %c320] : memref<256x384xbf16, #tpu.memory_space<vmem>>, vector<256x32xbf16>
    %cst_37 = arith.constant dense<0.000000e+00> : vector<256x256xf32>
    %58 = tpu.matmul %55, %56, %cst_37 {dimension_numbers = #tpu.dot_dimension_numbers<[1], [1], [0], [0], [0, 0, 1, 0], [], []>} : vector<256x32xbf16>, vector<256x32xbf16>, vector<256x256xf32> -> vector<256x256xf32>
    %c2 = arith.constant 2 : index
    %c0_38 = arith.constant 0 : index
    %c0_39 = arith.constant 0 : index
    %59 = vector.load %arg6[%c2, %c0_38, %c0_39] : memref<4x256x256xf32, #tpu.memory_space<vmem>>, vector<1x256x256xf32>
    %60 = vector.shape_cast %59 : vector<1x256x256xf32> to vector<256x256xf32>
    %61 = arith.addf %58, %60 : vector<256x256xf32>
    %cst_40 = arith.constant dense<0xFF800000> : vector<256xf32>
    %62 = vector.multi_reduction <maximumf>, %61, %cst_40 [1] : vector<256x256xf32> to vector<256xf32>
    %63 = vector.shape_cast %62 : vector<256xf32> to vector<256x1xf32>
    %64 = vector.broadcast %63 : vector<256x1xf32> to vector<256x256xf32>
    %65 = arith.subf %61, %64 : vector<256x256xf32>
    %66 = math.exp %65 : vector<256x256xf32>
    %cst_41 = arith.constant dense<0.000000e+00> : vector<256xf32>
    %67 = vector.multi_reduction <add>, %66, %cst_41 [1] : vector<256x256xf32> to vector<256xf32>
    %68 = vector.shape_cast %67 : vector<256xf32> to vector<256x1xf32>
    %69 = tpu.reciprocal %68 {approx = true} : vector<256x1xf32> -> vector<256x1xf32>
    %70 = vector.broadcast %69 : vector<256x1xf32> to vector<256x256xf32>
    %71 = arith.mulf %66, %70 : vector<256x256xf32>
    %72 = arith.truncf %71 : vector<256x256xf32> to vector<256x256xbf16>
    %cst_42 = arith.constant dense<0.000000e+00> : vector<256x32xf32>
    %73 = tpu.matmul %72, %57, %cst_42 {dimension_numbers = #tpu.dot_dimension_numbers<[1], [0], [0], [1], [0, 0, 1, 1], [], []>} : vector<256x256xbf16>, vector<256x32xbf16>, vector<256x32xf32> -> vector<256x32xf32>
    %74 = arith.truncf %73 : vector<256x32xf32> to vector<256x32xbf16>
    %c64_43 = arith.constant 64 : index
    %c0_44 = arith.constant 0 : index
    %75 = vector.load %arg4[%c64_43, %c0_44] : memref<128x128xbf16, #tpu.memory_space<vmem>>, vector<32x128xbf16>
    %cst_45 = arith.constant dense<0.000000e+00> : vector<256x128xf32>
    %76 = tpu.matmul %74, %75, %cst_45 {dimension_numbers = #tpu.dot_dimension_numbers<[1], [0], [0], [1], [0, 0, 1, 1], [], []>} : vector<256x32xbf16>, vector<32x128xbf16>, vector<256x128xf32> -> vector<256x128xf32>
    %77 = arith.addf %54, %76 : vector<256x128xf32>
    %c0_46 = arith.constant 0 : index
    %c96 = arith.constant 96 : index
    %78 = vector.load %arg8[%c0_46, %c96] : memref<256x384xbf16, #tpu.memory_space<vmem>>, vector<256x32xbf16>
    %c0_47 = arith.constant 0 : index
    %c224 = arith.constant 224 : index
    %79 = vector.load %arg8[%c0_47, %c224] : memref<256x384xbf16, #tpu.memory_space<vmem>>, vector<256x32xbf16>
    %c0_48 = arith.constant 0 : index
    %c352 = arith.constant 352 : index
    %80 = vector.load %arg8[%c0_48, %c352] : memref<256x384xbf16, #tpu.memory_space<vmem>>, vector<256x32xbf16>
    %cst_49 = arith.constant dense<0.000000e+00> : vector<256x256xf32>
    %81 = tpu.matmul %78, %79, %cst_49 {dimension_numbers = #tpu.dot_dimension_numbers<[1], [1], [0], [0], [0, 0, 1, 0], [], []>} : vector<256x32xbf16>, vector<256x32xbf16>, vector<256x256xf32> -> vector<256x256xf32>
    %c3 = arith.constant 3 : index
    %c0_50 = arith.constant 0 : index
    %c0_51 = arith.constant 0 : index
    %82 = vector.load %arg6[%c3, %c0_50, %c0_51] : memref<4x256x256xf32, #tpu.memory_space<vmem>>, vector<1x256x256xf32>
    %83 = vector.shape_cast %82 : vector<1x256x256xf32> to vector<256x256xf32>
    %84 = arith.addf %81, %83 : vector<256x256xf32>
    %cst_52 = arith.constant dense<0xFF800000> : vector<256xf32>
    %85 = vector.multi_reduction <maximumf>, %84, %cst_52 [1] : vector<256x256xf32> to vector<256xf32>
    %86 = vector.shape_cast %85 : vector<256xf32> to vector<256x1xf32>
    %87 = vector.broadcast %86 : vector<256x1xf32> to vector<256x256xf32>
    %88 = arith.subf %84, %87 : vector<256x256xf32>
    %89 = math.exp %88 : vector<256x256xf32>
    %cst_53 = arith.constant dense<0.000000e+00> : vector<256xf32>
    %90 = vector.multi_reduction <add>, %89, %cst_53 [1] : vector<256x256xf32> to vector<256xf32>
    %91 = vector.shape_cast %90 : vector<256xf32> to vector<256x1xf32>
    %92 = tpu.reciprocal %91 {approx = true} : vector<256x1xf32> -> vector<256x1xf32>
    %93 = vector.broadcast %92 : vector<256x1xf32> to vector<256x256xf32>
    %94 = arith.mulf %89, %93 : vector<256x256xf32>
    %95 = arith.truncf %94 : vector<256x256xf32> to vector<256x256xbf16>
    %cst_54 = arith.constant dense<0.000000e+00> : vector<256x32xf32>
    %96 = tpu.matmul %95, %80, %cst_54 {dimension_numbers = #tpu.dot_dimension_numbers<[1], [0], [0], [1], [0, 0, 1, 1], [], []>} : vector<256x256xbf16>, vector<256x32xbf16>, vector<256x32xf32> -> vector<256x32xf32>
    %97 = arith.truncf %96 : vector<256x32xf32> to vector<256x32xbf16>
    %c96_55 = arith.constant 96 : index
    %c0_56 = arith.constant 0 : index
    %98 = vector.load %arg4[%c96_55, %c0_56] : memref<128x128xbf16, #tpu.memory_space<vmem>>, vector<32x128xbf16>
    %cst_57 = arith.constant dense<0.000000e+00> : vector<256x128xf32>
    %99 = tpu.matmul %97, %98, %cst_57 {dimension_numbers = #tpu.dot_dimension_numbers<[1], [0], [0], [1], [0, 0, 1, 1], [], []>} : vector<256x32xbf16>, vector<32x128xbf16>, vector<256x128xf32> -> vector<256x128xf32>
    %100 = arith.addf %77, %99 : vector<256x128xf32>
    %c0_58 = arith.constant 0 : index
    %c0_59 = arith.constant 0 : index
    %101 = vector.load %arg5[%c0_58, %c0_59] : memref<1x128xf32, #tpu.memory_space<vmem>>, vector<1x128xf32>
    %102 = vector.broadcast %101 : vector<1x128xf32> to vector<256x128xf32>
    %103 = arith.addf %100, %102 : vector<256x128xf32>
    %c0_60 = arith.constant 0 : index
    %c0_61 = arith.constant 0 : index
    %104 = vector.load %arg7[%c0_60, %c0_61] : memref<256x128xf32, #tpu.memory_space<vmem>>, vector<256x128xf32>
    tpu.vector_store %arg7[%c0_60, %c0_61], %103 {strides = array<i32>} : memref<256x128xf32, #tpu.memory_space<vmem>>, vector<256x128xf32>,
    return
  }
  func.func @transform_0(%arg0: i32) -> (i32, i32) {
    %c0_i32 = arith.constant 0 : i32
    %c0_i32_0 = arith.constant 0 : i32
    return %arg0, %c0_i32 : i32, i32
  }
  func.func @transform_1(%arg0: i32) -> (i32, i32) {
    %c0_i32 = arith.constant 0 : i32
    %c0_i32_0 = arith.constant 0 : i32
    %c0_i32_1 = arith.constant 0 : i32
    return %c0_i32, %c0_i32_0 : i32, i32
  }
  func.func @transform_2(%arg0: i32) -> (i32, i32) {
    %c0_i32 = arith.constant 0 : i32
    %c0_i32_0 = arith.constant 0 : i32
    %c0_i32_1 = arith.constant 0 : i32
    return %c0_i32, %c0_i32_0 : i32, i32
  }
  func.func @transform_3(%arg0: i32) -> (i32, i32) {
    %c0_i32 = arith.constant 0 : i32
    %c0_i32_0 = arith.constant 0 : i32
    %c0_i32_1 = arith.constant 0 : i32
    return %c0_i32, %c0_i32_0 : i32, i32
  }
  func.func @transform_4(%arg0: i32) -> (i32, i32) {
    %c0_i32 = arith.constant 0 : i32
    %c0_i32_0 = arith.constant 0 : i32
    %c0_i32_1 = arith.constant 0 : i32
    return %c0_i32, %c0_i32_0 : i32, i32
  }
  func.func @transform_5(%arg0: i32) -> (i32, i32, i32) {
    %c0_i32 = arith.constant 0 : i32
    %c0_i32_0 = arith.constant 0 : i32
    %c0_i32_1 = arith.constant 0 : i32
    %c0_i32_2 = arith.constant 0 : i32
    return %c0_i32, %c0_i32_0, %c0_i32_1 : i32, i32, i32
  }
  func.func @transform_6(%arg0: i32) -> (i32, i32) {
    %c0_i32 = arith.constant 0 : i32
    %c0_i32_0 = arith.constant 0 : i32
    return %arg0, %c0_i32 : i32, i32
  }
}

</mosaic_0001>

<llo_original>
// kernel: tpu_custom_call.1
$region0: #{tpu_custom_call.1}
  #allocation0 [shape = 'u32[]', space=smem, size = 0x4, offset = 0x4, fixed_abs, tag = 'smem constant byte address 0x4 - core index']
  #allocation1 [shape = 'u32[72,128]{1,0:T(1,128)}', space=vmem, size = 0x9000, scoped, tag = 'internal scratch']
  #allocation2 [shape = 'bf16[256,384]{1,0:T(8,128)(2,1)}', space=vmem, size = 0x30000, scoped, tag = 'scratch operand']
  %s0 = inlined_call_operand.hbm [shape: bf16[512,128], index: 0, kind: input, shape index: {}]
  %s1 = inlined_call_operand.hbm [shape: bf16[128,384], index: 1, kind: input, shape index: {}]
  %s2 = inlined_call_operand.hbm [shape: f32[1,384], index: 2, kind: input, shape index: {}]
  %s3 = inlined_call_operand.hbm [shape: bf16[128,128], index: 3, kind: input, shape index: {}]
  %s4 = inlined_call_operand.vmem [shape: f32[1,128], index: 4, kind: input, shape index: {}]
  %s5 = inlined_call_operand.hbm [shape: f32[4,256,256], index: 5, kind: input, shape index: {}]
  %s6 = inlined_call_operand.hbm [shape: f32[512,128], index: 6, kind: output, shape index: {}]
  %s7 = sld [smem:[#allocation0]]
  $region77: #{tpu_custom_call.1} parent=0
    _
  %s9 = ssub.s32 1, %s7
  %s10 = scalar_select 0, %s9, %s7
  $region1: #{tpu_custom_call.1} parent=0
    #allocation3 [shape = 'u8[131072]{0}', space=vmem, size = 0x20000, scoped, tag = 'input window, operand 0']
    #allocation4 [shape = 's32[2]{0}', space=sflag, size = 0x8, scoped, tag = 'scoped memory for tpu_custom_call.1']
    #allocation5 [shape = 's32[2]{0}', space=sflag, size = 0x8, scoped, tag = 'scoped memory for tpu_custom_call.1']
    #allocation6 [shape = 'u8[98304]{0}', space=vmem, size = 0x18000, scoped, tag = 'input window, operand 1, single buffered']
    #allocation7 [shape = 's32[1]{0}', space=sflag, size = 0x4, scoped, tag = 'scoped memory for tpu_custom_call.1']
    #allocation8 [shape = 'u8[1536]{0}', space=vmem, size = 0x800, scoped, tag = 'input window, operand 2, single buffered']
    #allocation9 [shape = 'u8[32768]{0}', space=vmem, size = 0x8000, scoped, tag = 'input window, operand 3, single buffered']
    #allocation10 [shape = 's32[1]{0}', space=sflag, size = 0x4, scoped, tag = 'scoped memory for tpu_custom_call.1']
    #allocation11 [shape = 'u8[1048576]{0}', space=vmem, size = 0x100000, scoped, tag = 'input window, operand 5, single buffered']
    #allocation12 [shape = 'u8[262144]{0}', space=vmem, size = 0x40000, scoped, tag = 'output window, operand 0']
    %11 = vsyncpa [#allocation4], 0
    %s12 = scalar_lea.sflag [#allocation4], 1
    %13 = vsyncpa %s12, 0
    %14 = vsyncpa [#allocation7], 0
    %15 = vsyncpa [#allocation10], 0
    %16 = vsyncpa [#allocation5], 0
    %s17 = scalar_lea.sflag [#allocation5], 1
    %18 = vsyncpa %s17, 0
    loop: start=0, step=1, limit=4
    $region2: #{tpu_custom_call.1} parent=1 // loop_pre_header
      _
    $region3: #{tpu_custom_call.1} parent=1 // loop_header
      %s20 = sphi 0, %s24
      %p21 = scmp.ge.s32.totalorder %s20, 4
      %s30 = sphi 0, %s32
      %s33 = sphi 0, %s30
      %s34 = sphi 0, %s33
      %s50 = sphi 0, %s34
      %s54 = sphi 0, %s54
      %s56 = sphi 0, %s54
      %s57 = sphi 0, %s56
      %s71 = sphi 0, %s57
      %s75 = sphi 0, %s75
      %s77 = sphi 0, %s75
      %s78 = sphi 0, %s77
      %s92 = sphi 0, %s78
      %s96 = sphi 0, %s96
      %s98 = sphi 0, %s96
      %s99 = sphi 0, %s98
      %s113 = sphi 0, %s99
      %s117 = sphi 0, %s117
      %s119 = sphi 0, %s117
      %s120 = sphi 0, %s119
      %s134 = sphi 0, %s120
      %s138 = sphi 0, %s138
      %s140 = sphi 0, %s138
      %s141 = sphi 0, %s140
      %s155 = sphi 0, %s141
      %s161 = sphi 0, %s163
      %s164 = sphi 0, %s161
      %s165 = sphi 0, %s164
      %s181 = sphi 0, %s165
    $region4: #{tpu_custom_call.1} parent=1 // loop_header_branch
      %23 = sbr.rel (%p21) target = $region8
    $region5: #{tpu_custom_call.1} parent=1 // loop_body
      %s25 = ssub.s32 %s20, 1
      %s26 = ssub.s32 %s20, 2
      %s27 = sadd.s32 %s20, 1
      %s28 = ssub.s32 %s20, %s27
      %p29 = scmp.eq.s32.totalorder %s28, 0
      %s31 = sadd.s32 %s30, 1
      %s32 = scalar_select %p29, %s30, %s31
      %p35 = pneg %p29
      %p36 = scmp.eq.s32.totalorder %s20, 1
      %p37 = por %p35, %p36
      %p38 = scmp.ne.s32.totalorder %s30, %s33
      %p39 = scmp.eq.s32.totalorder %s20, 0
      %p40 = por %p38, %p39
      %p41 = scmp.ne.s32.totalorder %s30, %s33
      %p42 = scmp.eq.s32.totalorder %s25, 1
      %p43 = por %p41, %p42
      %p44 = scmp.ne.s32.totalorder %s33, %s34
      %p45 = scmp.eq.s32.totalorder %s25, 0
      %p46 = por %p44, %p45
      %p47 = scmp.ne.s32.totalorder %s33, %s34
      %p48 = scmp.eq.s32.totalorder %s26, 1
      %p49 = por %p47, %p48
      %p51 = scmp.ne.s32.totalorder %s34, %s50
      %p52 = scmp.eq.s32.totalorder %s26, 0
      %p53 = por %p51, %p52
      %s55 = sadd.s32 %s54, 1
      %p58 = scmp.eq.s32.totalorder %s20, 1
      %p59 = scmp.ne.s32.totalorder %s54, %s56
      %p60 = scmp.eq.s32.totalorder %s20, 0
      %p61 = por %p59, %p60
      %p62 = scmp.ne.s32.totalorder %s54, %s56
      %p63 = scmp.eq.s32.totalorder %s25, 1
      %p64 = por %p62, %p63
      %p65 = scmp.ne.s32.totalorder %s56, %s57
      %p66 = scmp.eq.s32.totalorder %s25, 0
      %p67 = por %p65, %p66
      %p68 = scmp.ne.s32.totalorder %s56, %s57
      %p69 = scmp.eq.s32.totalorder %s26, 1
      %p70 = por %p68, %p69
      %p72 = scmp.ne.s32.totalorder %s57, %s71
      %p73 = scmp.eq.s32.totalorder %s26, 0
      %p74 = por %p72, %p73
      %s76 = sadd.s32 %s75, 1
      %p79 = scmp.eq.s32.totalorder %s20, 1
      %p80 = scmp.ne.s32.totalorder %s75, %s77
      %p81 = scmp.eq.s32.totalorder %s20, 0
      %p82 = por %p80, %p81
      %p83 = scmp.ne.s32.totalorder %s75, %s77
      %p84 = scmp.eq.s32.totalorder %s25, 1
      %p85 = por %p83, %p84
      %p86 = scmp.ne.s32.totalorder %s77, %s78
      %p87 = scmp.eq.s32.totalorder %s25, 0
      %p88 = por %p86, %p87
      %p89 = scmp.ne.s32.totalorder %s77, %s78
      %p90 = scmp.eq.s32.totalorder %s26, 1
      %p91 = por %p89, %p90
      %p93 = scmp.ne.s32.totalorder %s78, %s92
      %p94 = scmp.eq.s32.totalorder %s26, 0
      %p95 = por %p93, %p94
      %s97 = sadd.s32 %s96, 1
      %p100 = scmp.eq.s32.totalorder %s20, 1
      %p101 = scmp.ne.s32.totalorder %s96, %s98
      %p102 = scmp.eq.s32.totalorder %s20, 0
      %p103 = por %p101, %p102
      %p104 = scmp.ne.s32.totalorder %s96, %s98
      %p105 = scmp.eq.s32.totalorder %s25, 1
      %p106 = por %p104, %p105
      %p107 = scmp.ne.s32.totalorder %s98, %s99
      %p108 = scmp.eq.s32.totalorder %s25, 0
      %p109 = por %p107, %p108
      %p110 = scmp.ne.s32.totalorder %s98, %s99
      %p111 = scmp.eq.s32.totalorder %s26, 1
      %p112 = por %p110, %p111
      %p114 = scmp.ne.s32.totalorder %s99, %s113
      %p115 = scmp.eq.s32.totalorder %s26, 0
      %p116 = por %p114, %p115
      %s118 = sadd.s32 %s117, 1
      %p121 = scmp.eq.s32.totalorder %s20, 1
      %p122 = scmp.ne.s32.totalorder %s117, %s119
      %p123 = scmp.eq.s32.totalorder %s20, 0
      %p124 = por %p122, %p123
      %p125 = scmp.ne.s32.totalorder %s117, %s119
      %p126 = scmp.eq.s32.totalorder %s25, 1
      %p127 = por %p125, %p126
      %p128 = scmp.ne.s32.totalorder %s119, %s120
      %p129 = scmp.eq.s32.totalorder %s25, 0
      %p130 = por %p128, %p129
      %p131 = scmp.ne.s32.totalorder %s119, %s120
      %p132 = scmp.eq.s32.totalorder %s26, 1
      %p133 = por %p131, %p132
      %p135 = scmp.ne.s32.totalorder %s120, %s134
      %p136 = scmp.eq.s32.totalorder %s26, 0
      %p137 = por %p135, %p136
      %s139 = sadd.s32 %s138, 1
      %p142 = scmp.eq.s32.totalorder %s20, 1
      %p143 = scmp.ne.s32.totalorder %s138, %s140
      %p144 = scmp.eq.s32.totalorder %s20, 0
      %p145 = por %p143, %p144
      %p146 = scmp.ne.s32.totalorder %s138, %s140
      %p147 = scmp.eq.s32.totalorder %s25, 1
      %p148 = por %p146, %p147
      %p149 = scmp.ne.s32.totalorder %s140, %s141
      %p150 = scmp.eq.s32.totalorder %s25, 0
      %p151 = por %p149, %p150
      %p152 = scmp.ne.s32.totalorder %s140, %s141
      %p153 = scmp.eq.s32.totalorder %s26, 1
      %p154 = por %p152, %p153
      %p156 = scmp.ne.s32.totalorder %s141, %s155
      %p157 = scmp.eq.s32.totalorder %s26, 0
      %p158 = por %p156, %p157
      %s159 = ssub.s32 %s20, %s27
      %p160 = scmp.eq.s32.totalorder %s159, 0
      %s162 = sadd.s32 %s161, 1
      %s163 = scalar_select %p160, %s161, %s162
      %p166 = pneg %p160
      %p167 = scmp.eq.s32.totalorder %s20, 1
      %p168 = por %p166, %p167
      %p169 = scmp.ne.s32.totalorder %s161, %s164
      %p170 = scmp.eq.s32.totalorder %s20, 0
      %p171 = por %p169, %p170
      %p172 = scmp.ne.s32.totalorder %s161, %s164
      %p173 = scmp.eq.s32.totalorder %s25, 1
      %p174 = por %p172, %p173
      %p175 = scmp.ne.s32.totalorder %s164, %s165
      %p176 = scmp.eq.s32.totalorder %s25, 0
      %p177 = por %p175, %p176
      %p178 = scmp.ne.s32.totalorder %s164, %s165
      %p179 = scmp.eq.s32.totalorder %s26, 1
      %p180 = por %p178, %p179
      %p182 = scmp.ne.s32.totalorder %s165, %s181
      %p183 = scmp.eq.s32.totalorder %s26, 0
      %p184 = por %p182, %p183
      %p185 = scmp.le.s32.totalorder 1, %s20
      %p186 = scmp.lt.s32.totalorder %s20, 3
      %p187 = pnand %p185, %p186
      %p188 = pneg %p187
      // Predicated region
      $region9: #{tpu_custom_call.1} parent=5 // pred_check
        _
      $region10: #{tpu_custom_call.1} parent=5 // pred_check_branch
        %190 = sbr.rel (%p187) target = $region12
      $region11: #{tpu_custom_call.1} parent=5 // pred_region
        %s191 = ssub.s32 %s20, 1
        // Predicated region
        $region13: #{tpu_custom_call.1} parent=11 // pred_check
          %p192 = pneg %p67
        $region14: #{tpu_custom_call.1} parent=11 // pred_check_branch
          %194 = sbr.rel (%p192) target = $region16
        $region15: #{tpu_custom_call.1} parent=11 // pred_region
          %196 = vsyncadd [#allocation7], 0
          %s197 = sshll.u32 %s1, 4
          %s198 = int_to_ptr.hbm [resolvable:$true] %s197
          %s199 = sshll.u32 [#allocation6], 4
          %s200 = int_to_ptr.vmem [resolvable:$true] %s199
          %205 = dma.hbm_to_vmem [thread:$0]  %s198, 3072, %s200, [#allocation7], 192, 192, 12
        $region16: #{tpu_custom_call.1} parent=11 // pred_fallthru
          _
        // Predicated region
        $region17: #{tpu_custom_call.1} parent=11 // pred_check
          %p206 = pneg %p88
        $region18: #{tpu_custom_call.1} parent=11 // pred_check_branch
          %208 = sbr.rel (%p206) target = $region20
        $region19: #{tpu_custom_call.1} parent=11 // pred_region
          %210 = vsyncadd [#allocation7], 0
          %s212 = sshll.u32 %s2, 4
          %s213 = int_to_ptr.hbm [resolvable:$true] %s212
          %s214 = sshll.u32 [#allocation8], 4
          %s215 = int_to_ptr.vmem [resolvable:$true] %s214
          %217 = dma.hbm_to_vmem [thread:$0]  %s213, 48, %s215, [#allocation7]
        $region20: #{tpu_custom_call.1} parent=11 // pred_fallthru
          _
        // Predicated region
        $region21: #{tpu_custom_call.1} parent=11 // pred_check
          %p218 = pneg %p109
        $region22: #{tpu_custom_call.1} parent=11 // pred_check_branch
          %220 = sbr.rel (%p218) target = $region24
        $region23: #{tpu_custom_call.1} parent=11 // pred_region
          %222 = vsyncadd [#allocation10], 0
          %s223 = sshll.u32 %s3, 4
          %s224 = int_to_ptr.hbm [resolvable:$true] %s223
          %s225 = sshll.u32 [#allocation9], 4
          %s226 = int_to_ptr.vmem [resolvable:$true] %s225
          %231 = dma.hbm_to_vmem [thread:$0]  %s224, 1024, %s226, [#allocation10], 64, 64, 4
        $region24: #{tpu_custom_call.1} parent=11 // pred_fallthru
          _
        // Predicated region
        $region25: #{tpu_custom_call.1} parent=11 // pred_check
          %p232 = pneg %p130
        $region26: #{tpu_custom_call.1} parent=11 // pred_check_branch
          %234 = sbr.rel (%p232) target = $region28
        $region27: #{tpu_custom_call.1} parent=11 // pred_region
          _
        $region28: #{tpu_custom_call.1} parent=11 // pred_fallthru
          _
        // Predicated region
        $region29: #{tpu_custom_call.1} parent=11 // pred_check
          %p235 = pneg %p151
        $region30: #{tpu_custom_call.1} parent=11 // pred_check_branch
          %237 = sbr.rel (%p235) target = $region32
        $region31: #{tpu_custom_call.1} parent=11 // pred_region
          %239 = vsyncadd [#allocation10], 0
          %s240 = sshll.u32 %s5, 4
          %s241 = int_to_ptr.hbm [resolvable:$true] %s240
          %s242 = sshll.u32 [#allocation11], 4
          %s243 = int_to_ptr.vmem [resolvable:$true] %s242
          %248 = dma.hbm_to_vmem [thread:$0]  %s241, 32768, %s243, [#allocation10], 256, 256, 16
        $region32: #{tpu_custom_call.1} parent=11 // pred_fallthru
          _
      $region12: #{tpu_custom_call.1} parent=5 // pred_fallthru
        _
      %p249 = scmp.lt.s32.totalorder %s20, 2
      // Predicated region
      $region33: #{tpu_custom_call.1} parent=5 // pred_check
        %p250 = pneg %p249
      $region34: #{tpu_custom_call.1} parent=5 // pred_check_branch
        %252 = sbr.rel (%p250) target = $region36
      $region35: #{tpu_custom_call.1} parent=5 // pred_region
        // Predicated region
        $region37: #{tpu_custom_call.1} parent=35 // pred_check
          %p253 = pneg %p40
        $region38: #{tpu_custom_call.1} parent=35 // pred_check_branch
          %255 = sbr.rel (%p253) target = $region40
        $region39: #{tpu_custom_call.1} parent=35 // pred_region
          %s256 = sand.u32 %s30, 1
          %s257 = scalar_lea.sflag [#allocation4], %s256
          %s258 = sand.u32 %s30, 1
          %s259 = smul.addr %s258, 128
          %s260 = scalar_lea.vmem [#allocation3], %s259
          %s261 = smul.u32 32, %s20
          %263 = vsyncadd %s257, 0
          %s264 = smul.addr %s261, 4
          %s265 = scalar_lea.hbm %s0, %s264
          %s266 = sshll.u32 %s265, 4
          %s267 = int_to_ptr.hbm [resolvable:$true] %s266
          %s268 = sshll.u32 %s260, 4
          %s269 = int_to_ptr.vmem [resolvable:$true] %s268
          %274 = dma.hbm_to_vmem [thread:$0]  %s267, 2048, %s269, %s257, 64, 64, 4
        $region40: #{tpu_custom_call.1} parent=35 // pred_fallthru
          _
      $region36: #{tpu_custom_call.1} parent=5 // pred_fallthru
        _
      %p275 = scmp.le.s32.totalorder 1, %s20
      %p276 = scmp.lt.s32.totalorder %s20, 3
      %p277 = pnand %p275, %p276
      %p278 = pneg %p277
      // Predicated region
      $region41: #{tpu_custom_call.1} parent=5 // pred_check
        _
      $region42: #{tpu_custom_call.1} parent=5 // pred_check_branch
        %280 = sbr.rel (%p277) target = $region44
      $region43: #{tpu_custom_call.1} parent=5 // pred_region
        %s281 = ssub.s32 %s20, 1
        %s282 = sand.u32 %s33, 1
        %s283 = scalar_lea.sflag [#allocation4], %s282
        %s284 = sand.u32 %s33, 1
        %s285 = smul.addr %s284, 128
        %s286 = scalar_lea.vmem [#allocation3], %s285
        // Predicated region
        $region45: #{tpu_custom_call.1} parent=43 // pred_check
          %p287 = pneg %p46
        $region46: #{tpu_custom_call.1} parent=43 // pred_check_branch
          %289 = sbr.rel (%p287) target = $region48
        $region47: #{tpu_custom_call.1} parent=43 // pred_region
          %291 = dma.done %s283, 2048
        $region48: #{tpu_custom_call.1} parent=43 // pred_fallthru
          _
        // Predicated region
        $region49: #{tpu_custom_call.1} parent=43 // pred_check
          %p292 = pneg %p67
        $region50: #{tpu_custom_call.1} parent=43 // pred_check_branch
          %294 = sbr.rel (%p292) target = $region52
        $region51: #{tpu_custom_call.1} parent=43 // pred_region
          %296 = dma.done [#allocation7], 3072
        $region52: #{tpu_custom_call.1} parent=43 // pred_fallthru
          _
        // Predicated region
        $region53: #{tpu_custom_call.1} parent=43 // pred_check
          %p297 = pneg %p88
        $region54: #{tpu_custom_call.1} parent=43 // pred_check_branch
          %299 = sbr.rel (%p297) target = $region56
        $region55: #{tpu_custom_call.1} parent=43 // pred_region
          %301 = dma.done [#allocation7], 48
        $region56: #{tpu_custom_call.1} parent=43 // pred_fallthru
          _
        // Predicated region
        $region57: #{tpu_custom_call.1} parent=43 // pred_check
          %p302 = pneg %p109
        $region58: #{tpu_custom_call.1} parent=43 // pred_check_branch
          %304 = sbr.rel (%p302) target = $region60
        $region59: #{tpu_custom_call.1} parent=43 // pred_region
          %306 = dma.done [#allocation10], 1024
        $region60: #{tpu_custom_call.1} parent=43 // pred_fallthru
          _
        // Predicated region
        $region61: #{tpu_custom_call.1} parent=43 // pred_check
          %p307 = pneg %p151
        $region62: #{tpu_custom_call.1} parent=43 // pred_check_branch
          %309 = sbr.rel (%p307) target = $region64
        $region63: #{tpu_custom_call.1} parent=43 // pred_region
          %311 = dma.done [#allocation10], 32768
        $region64: #{tpu_custom_call.1} parent=43 // pred_fallthru
          _
        %s312 = sand.u32 %s33, 1
        %s313 = scalar_lea.sflag [#allocation4], %s312
        %s314 = sand.u32 %s33, 1
        %s315 = smul.addr %s314, 128
        %s316 = scalar_lea.vmem [#allocation3], %s315
        %p317 = pneg %p46
        %p318 = pneg %p43
        %p319 = pneg %p67
        %p320 = pneg %p64
        %p321 = pneg %p88
        %p322 = pneg %p85
        %p323 = pneg %p109
        %p324 = pneg %p106
        %p325 = pneg %p130
        %p326 = pneg %p127
        %p327 = pneg %p151
        %p328 = pneg %p148
        %p329 = pneg %p177
        %p330 = pneg %p174
        %s331 = sand.u32 %s164, 1
        %s332 = scalar_lea.sflag [#allocation5], %s331
        %s333 = sand.u32 %s164, 1
        %s334 = smul.addr %s333, 256
        %s335 = scalar_lea.vmem [#allocation12], %s334
        %s336 = smul.u32 32, %s25
        %s337 = smul.u32 32, %s25
        %v339 = vld [vmem:[%s286] sm:$0xf]
        %v340 = vld [vmem:[%s286 + $0x4] sm:$0xf]
        %v341 = vld [vmem:[%s286 + $0x8] sm:$0xf]
        %v342 = vld [vmem:[%s286 + $0xc] sm:$0xf]
        %v343 = vld [vmem:[%s286 + $0x10] sm:$0xf]
        %v344 = vld [vmem:[%s286 + $0x14] sm:$0xf]
        %v345 = vld [vmem:[%s286 + $0x18] sm:$0xf]
        %v346 = vld [vmem:[%s286 + $0x1c] sm:$0xf]
        %v347 = vld [vmem:[%s286 + $0x20] sm:$0xf]
        %v348 = vld [vmem:[%s286 + $0x24] sm:$0xf]
        %v349 = vld [vmem:[%s286 + $0x28] sm:$0xf]
        %v350 = vld [vmem:[%s286 + $0x2c] sm:$0xf]
        %v351 = vld [vmem:[%s286 + $0x30] sm:$0xf]
        %v352 = vld [vmem:[%s286 + $0x34] sm:$0xf]
        %v353 = vld [vmem:[%s286 + $0x38] sm:$0xf]
        %v354 = vld [vmem:[%s286 + $0x3c] sm:$0xf]
        %v355 = vld [vmem:[%s286 + $0x40] sm:$0xf]
        %v356 = vld [vmem:[%s286 + $0x44] sm:$0xf]
        %v357 = vld [vmem:[%s286 + $0x48] sm:$0xf]
        %v358 = vld [vmem:[%s286 + $0x4c] sm:$0xf]
        %v359 = vld [vmem:[%s286 + $0x50] sm:$0xf]
        %v360 = vld [vmem:[%s286 + $0x54] sm:$0xf]
        %v361 = vld [vmem:[%s286 + $0x58] sm:$0xf]
        %v362 = vld [vmem:[%s286 + $0x5c] sm:$0xf]
        %v363 = vld [vmem:[%s286 + $0x60] sm:$0xf]
        %v364 = vld [vmem:[%s286 + $0x64] sm:$0xf]
        %v365 = vld [vmem:[%s286 + $0x68] sm:$0xf]
        %v366 = vld [vmem:[%s286 + $0x6c] sm:$0xf]
        %v367 = vld [vmem:[%s286 + $0x70] sm:$0xf]
        %v368 = vld [vmem:[%s286 + $0x74] sm:$0xf]
        %v369 = vld [vmem:[%s286 + $0x78] sm:$0xf]
        %v370 = vld [vmem:[%s286 + $0x7c] sm:$0xf]
        %v371 = vld [vmem:[#allocation6] sm:$0xff]
        %v372 = vld [vmem:[#allocation6 + $0x8] sm:$0xf]
        %v373 = vld [vmem:[#allocation6 + $0xc] sm:$0xff]
        %v374 = vld [vmem:[#allocation6 + $0x14] sm:$0xf]
        %v375 = vld [vmem:[#allocation6 + $0x18] sm:$0xff]
        %v376 = vld [vmem:[#allocation6 + $0x20] sm:$0xf]
        %v377 = vld [vmem:[#allocation6 + $0x24] sm:$0xff]
        %v378 = vld [vmem:[#allocation6 + $0x2c] sm:$0xf]
        %v379 = vld [vmem:[#allocation6 + $0x30] sm:$0xff]
        %v380 = vld [vmem:[#allocation6 + $0x38] sm:$0xf]
        %v381 = vld [vmem:[#allocation6 + $0x3c] sm:$0xff]
        %v382 = vld [vmem:[#allocation6 + $0x44] sm:$0xf]
        %v383 = vld [vmem:[#allocation6 + $0x48] sm:$0xff]
        %v384 = vld [vmem:[#allocation6 + $0x50] sm:$0xf]
        %v385 = vld [vmem:[#allocation6 + $0x54] sm:$0xff]
        %v386 = vld [vmem:[#allocation6 + $0x5c] sm:$0xf]
        %v387 = vld [vmem:[#allocation6 + $0x60] sm:$0xff]
        %v388 = vld [vmem:[#allocation6 + $0x68] sm:$0xf]
        %v389 = vld [vmem:[#allocation6 + $0x6c] sm:$0xff]
        %v390 = vld [vmem:[#allocation6 + $0x74] sm:$0xf]
        %v391 = vld [vmem:[#allocation6 + $0x78] sm:$0xff]
        %v392 = vld [vmem:[#allocation6 + $0x80] sm:$0xf]
        %v393 = vld [vmem:[#allocation6 + $0x84] sm:$0xff]
        %v394 = vld [vmem:[#allocation6 + $0x8c] sm:$0xf]
        %v395 = vld [vmem:[#allocation6 + $0x90] sm:$0xff]
        %v396 = vld [vmem:[#allocation6 + $0x98] sm:$0xf]
        %v397 = vld [vmem:[#allocation6 + $0x9c] sm:$0xff]
        %v398 = vld [vmem:[#allocation6 + $0xa4] sm:$0xf]
        %v399 = vld [vmem:[#allocation6 + $0xa8] sm:$0xff]
        %v400 = vld [vmem:[#allocation6 + $0xb0] sm:$0xf]
        %v401 = vld [vmem:[#allocation6 + $0xb4] sm:$0xff]
        %v402 = vld [vmem:[#allocation6 + $0xbc] sm:$0xf]
        %v403 = vld [vmem:[#allocation8] sm:$0x7]
        %v405 = vperm.slane %v403, 0
        %v406 = vperm.slane %v403, 1
        %v407 = vperm.slane %v403, 2
        %v443 = vunpack.c.l.b16 %v339
        %v444 = vunpack.c.l.b16 %v340
        %v445 = vunpack.c.l.b16 %v341
        %v446 = vunpack.c.l.b16 %v342
        %v447 = vunpack.c.l.b16 %v343
        %v448 = vunpack.c.l.b16 %v344
        %v449 = vunpack.c.l.b16 %v345
        %v450 = vunpack.c.l.b16 %v346
        %v451 = vunpack.c.l.b16 %v347
        %v452 = vunpack.c.l.b16 %v348
        %v453 = vunpack.c.l.b16 %v349
        %v454 = vunpack.c.l.b16 %v350
        %v455 = vunpack.c.l.b16 %v351
        %v456 = vunpack.c.l.b16 %v352
        %v457 = vunpack.c.l.b16 %v353
        %v458 = vunpack.c.l.b16 %v354
        %v459 = vunpack.c.l.b16 %v355
        %v460 = vunpack.c.l.b16 %v356
        %v461 = vunpack.c.l.b16 %v357
        %v462 = vunpack.c.l.b16 %v358
        %v463 = vunpack.c.l.b16 %v359
        %v464 = vunpack.c.l.b16 %v360
        %v465 = vunpack.c.l.b16 %v361
        %v466 = vunpack.c.l.b16 %v362
        %v467 = vunpack.c.l.b16 %v363
        %v468 = vunpack.c.l.b16 %v364
        %v469 = vunpack.c.l.b16 %v365
        %v470 = vunpack.c.l.b16 %v366
        %v471 = vunpack.c.l.b16 %v367
        %v472 = vunpack.c.l.b16 %v368
        %v473 = vunpack.c.l.b16 %v369
        %v474 = vunpack.c.l.b16 %v370
        %v475 = vpack.c.b16 %v444, %v443
        %v476 = vpack.c.b16 %v446, %v445
        %v477 = vpack.c.b16 %v448, %v447
        %v478 = vpack.c.b16 %v450, %v449
        %v479 = vpack.c.b16 %v452, %v451
        %v480 = vpack.c.b16 %v454, %v453
        %v481 = vpack.c.b16 %v456, %v455
        %v482 = vpack.c.b16 %v458, %v457
        %v483 = vpack.c.b16 %v460, %v459
        %v484 = vpack.c.b16 %v462, %v461
        %v485 = vpack.c.b16 %v464, %v463
        %v486 = vpack.c.b16 %v466, %v465
        %v487 = vpack.c.b16 %v468, %v467
        %v488 = vpack.c.b16 %v470, %v469
        %v489 = vpack.c.b16 %v472, %v471
        %v490 = vpack.c.b16 %v474, %v473
        %v539 = vunpack.c.l.b16 %v371
        %v540 = vunpack.c.h.b16 %v371
        %v541 = vunpack.c.l.b16 %v372
        %v542 = vunpack.c.l.b16 %v373
        %v543 = vunpack.c.h.b16 %v373
        %v544 = vunpack.c.l.b16 %v374
        %v545 = vunpack.c.l.b16 %v375
        %v546 = vunpack.c.h.b16 %v375
        %v547 = vunpack.c.l.b16 %v376
        %v548 = vunpack.c.l.b16 %v377
        %v549 = vunpack.c.h.b16 %v377
        %v550 = vunpack.c.l.b16 %v378
        %v551 = vunpack.c.l.b16 %v379
        %v552 = vunpack.c.h.b16 %v379
        %v553 = vunpack.c.l.b16 %v380
        %v554 = vunpack.c.l.b16 %v381
        %v555 = vunpack.c.h.b16 %v381
        %v556 = vunpack.c.l.b16 %v382
        %v557 = vunpack.c.l.b16 %v383
        %v558 = vunpack.c.h.b16 %v383
        %v559 = vunpack.c.l.b16 %v384
        %v560 = vunpack.c.l.b16 %v385
        %v561 = vunpack.c.h.b16 %v385
        %v562 = vunpack.c.l.b16 %v386
        %v563 = vunpack.c.l.b16 %v387
        %v564 = vunpack.c.h.b16 %v387
        %v565 = vunpack.c.l.b16 %v388
        %v566 = vunpack.c.l.b16 %v389
        %v567 = vunpack.c.h.b16 %v389
        %v568 = vunpack.c.l.b16 %v390
        %v569 = vunpack.c.l.b16 %v391
        %v570 = vunpack.c.h.b16 %v391
        %v571 = vunpack.c.l.b16 %v392
        %v572 = vunpack.c.l.b16 %v393
        %v573 = vunpack.c.h.b16 %v393
        %v574 = vunpack.c.l.b16 %v394
        %v575 = vunpack.c.l.b16 %v395
        %v576 = vunpack.c.h.b16 %v395
        %v577 = vunpack.c.l.b16 %v396
        %v578 = vunpack.c.l.b16 %v397
        %v579 = vunpack.c.h.b16 %v397
        %v580 = vunpack.c.l.b16 %v398
        %v581 = vunpack.c.l.b16 %v399
        %v582 = vunpack.c.h.b16 %v399
        %v583 = vunpack.c.l.b16 %v400
        %v584 = vunpack.c.l.b16 %v401
        %v585 = vunpack.c.h.b16 %v401
        %v586 = vunpack.c.l.b16 %v402
        %v587 = vpack.c.b16 %v542, %v539
        %v588 = vpack.c.b16 %v543, %v540
        %v589 = vpack.c.b16 %v544, %v541
        %v590 = vpack.c.b16 %v548, %v545
        %v591 = vpack.c.b16 %v549, %v546
        %v592 = vpack.c.b16 %v550, %v547
        %v593 = vpack.c.b16 %v554, %v551
        %v594 = vpack.c.b16 %v555, %v552
        %v595 = vpack.c.b16 %v556, %v553
        %v596 = vpack.c.b16 %v560, %v557
        %v597 = vpack.c.b16 %v561, %v558
        %v598 = vpack.c.b16 %v562, %v559
        %v599 = vpack.c.b16 %v566, %v563
        %v600 = vpack.c.b16 %v567, %v564
        %v601 = vpack.c.b16 %v568, %v565
        %v602 = vpack.c.b16 %v572, %v569
        %v603 = vpack.c.b16 %v573, %v570
        %v604 = vpack.c.b16 %v574, %v571
        %v605 = vpack.c.b16 %v578, %v575
        %v606 = vpack.c.b16 %v579, %v576
        %v607 = vpack.c.b16 %v580, %v577
        %v608 = vpack.c.b16 %v584, %v581
        %v609 = vpack.c.b16 %v585, %v582
        %v610 = vpack.c.b16 %v586, %v583
        %635 = vmatpush.bf16.msra.mxu0 %v608
        %636 = vmatpush.bf16.msra.mxu0 %v605
        %637 = vmatpush.bf16.msra.mxu0 %v602
        %638 = vmatpush.bf16.msra.mxu0 %v599
        %639 = vmatpush.bf16.msra.mxu0 %v596
        %640 = vmatpush.bf16.msra.mxu0 %v593
        %641 = vmatpush.bf16.msra.mxu0 %v590
        %642 = vmatpush.bf16.msra.mxu0 %v587
        %643 = vmatmul.bf16.gmra.mxu0 %v475
        %v644 = vpop.f32.mrf.mxu0
        %v645 = vadd.f32 %v405, %v644
        %v646 = vpop.f32.mrf.mxu0
        %v647 = vadd.f32 %v405, %v646
        %648 = vmatmul.bf16.gmra.mxu0 %v476
        %v649 = vpop.f32.mrf.mxu0
        %v650 = vadd.f32 %v405, %v649
        %v651 = vpop.f32.mrf.mxu0
        %v652 = vadd.f32 %v405, %v651
        %653 = vmatmul.bf16.gmra.mxu0 %v477
        %v654 = vpop.f32.mrf.mxu0
        %v655 = vadd.f32 %v405, %v654
        %v656 = vpop.f32.mrf.mxu0
        %v657 = vadd.f32 %v405, %v656
        %658 = vmatmul.bf16.gmra.mxu0 %v478
        %v659 = vpop.f32.mrf.mxu0
        %v660 = vadd.f32 %v405, %v659
        %v661 = vpop.f32.mrf.mxu0
        %v662 = vadd.f32 %v405, %v661
        %663 = vmatmul.bf16.gmra.mxu0 %v479
        %v664 = vpop.f32.mrf.mxu0
        %v665 = vadd.f32 %v405, %v664
        %v666 = vpop.f32.mrf.mxu0
        %v667 = vadd.f32 %v405, %v666
        %668 = vmatmul.bf16.gmra.mxu0 %v480
        %v669 = vpop.f32.mrf.mxu0
        %v670 = vadd.f32 %v405, %v669
        %v671 = vpop.f32.mrf.mxu0
        %v672 = vadd.f32 %v405, %v671
        %673 = vmatmul.bf16.gmra.mxu0 %v481
        %v674 = vpop.f32.mrf.mxu0
        %v675 = vadd.f32 %v405, %v674
        %v676 = vpop.f32.mrf.mxu0
        %v677 = vadd.f32 %v405, %v676
        %678 = vmatmul.bf16.gmra.mxu0 %v482
        %v679 = vpop.f32.mrf.mxu0
        %v680 = vadd.f32 %v405, %v679
        %v681 = vpop.f32.mrf.mxu0
        %v682 = vadd.f32 %v405, %v681
        %683 = vmatmul.bf16.gmra.mxu0 %v483
        %v684 = vpop.f32.mrf.mxu0
        %v685 = vadd.f32 %v405, %v684
        %v686 = vpop.f32.mrf.mxu0
        %v687 = vadd.f32 %v405, %v686
        %688 = vmatmul.bf16.gmra.mxu0 %v484
        %v689 = vpop.f32.mrf.mxu0
        %v690 = vadd.f32 %v405, %v689
        %v691 = vpop.f32.mrf.mxu0
        %v692 = vadd.f32 %v405, %v691
        %693 = vmatmul.bf16.gmra.mxu0 %v485
        %v694 = vpop.f32.mrf.mxu0
        %v695 = vadd.f32 %v405, %v694
        %v696 = vpop.f32.mrf.mxu0
        %v697 = vadd.f32 %v405, %v696
        %698 = vmatmul.bf16.gmra.mxu0 %v486
        %v699 = vpop.f32.mrf.mxu0
        %v700 = vadd.f32 %v405, %v699
        %v701 = vpop.f32.mrf.mxu0
        %v702 = vadd.f32 %v405, %v701
        %703 = vmatmul.bf16.gmra.mxu0 %v487
        %v704 = vpop.f32.mrf.mxu0
        %v705 = vadd.f32 %v405, %v704
        %v706 = vpop.f32.mrf.mxu0
        %v707 = vadd.f32 %v405, %v706
        %708 = vmatmul.bf16.gmra.mxu0 %v488
        %v709 = vpop.f32.mrf.mxu0
        %v710 = vadd.f32 %v405, %v709
        %v711 = vpop.f32.mrf.mxu0
        %v712 = vadd.f32 %v405, %v711
        %713 = vmatmul.bf16.gmra.mxu0 %v489
        %v714 = vpop.f32.mrf.mxu0
        %v715 = vadd.f32 %v405, %v714
        %v716 = vpop.f32.mrf.mxu0
        %v717 = vadd.f32 %v405, %v716
        %718 = vmatmul.bf16.gmra.mxu0 %v490
        %v719 = vpop.f32.mrf.mxu0
        %v720 = vadd.f32 %v405, %v719
        %v721 = vpop.f32.mrf.mxu0
        %v722 = vadd.f32 %v405, %v721
        %723 = vdwg.mxu0
        %724 = vmatpush.bf16.msra.mxu0 %v609
        %725 = vmatpush.bf16.msra.mxu0 %v606
        %726 = vmatpush.bf16.msra.mxu0 %v603
        %727 = vmatpush.bf16.msra.mxu0 %v600
        %728 = vmatpush.bf16.msra.mxu0 %v597
        %729 = vmatpush.bf16.msra.mxu0 %v594
        %730 = vmatpush.bf16.msra.mxu0 %v591
        %731 = vmatpush.bf16.msra.mxu0 %v588
        %732 = vmatmul.bf16.gmra.mxu0 %v475
        %v733 = vpop.f32.mrf.mxu0
        %v734 = vadd.f32 %v406, %v733
        %v735 = vpop.f32.mrf.mxu0
        %v736 = vadd.f32 %v406, %v735
        %737 = vmatmul.bf16.gmra.mxu0 %v476
        %v738 = vpop.f32.mrf.mxu0
        %v739 = vadd.f32 %v406, %v738
        %v740 = vpop.f32.mrf.mxu0
        %v741 = vadd.f32 %v406, %v740
        %742 = vmatmul.bf16.gmra.mxu0 %v477
        %v743 = vpop.f32.mrf.mxu0
        %v744 = vadd.f32 %v406, %v743
        %v745 = vpop.f32.mrf.mxu0
        %v746 = vadd.f32 %v406, %v745
        %747 = vmatmul.bf16.gmra.mxu0 %v478
        %v748 = vpop.f32.mrf.mxu0
        %v749 = vadd.f32 %v406, %v748
        %v750 = vpop.f32.mrf.mxu0
        %v751 = vadd.f32 %v406, %v750
        %752 = vmatmul.bf16.gmra.mxu0 %v479
        %v753 = vpop.f32.mrf.mxu0
        %v754 = vadd.f32 %v406, %v753
        %v755 = vpop.f32.mrf.mxu0
        %v756 = vadd.f32 %v406, %v755
        %757 = vmatmul.bf16.gmra.mxu0 %v480
        %v758 = vpop.f32.mrf.mxu0
        %v759 = vadd.f32 %v406, %v758
        %v760 = vpop.f32.mrf.mxu0
        %v761 = vadd.f32 %v406, %v760
        %762 = vmatmul.bf16.gmra.mxu0 %v481
        %v763 = vpop.f32.mrf.mxu0
        %v764 = vadd.f32 %v406, %v763
        %v765 = vpop.f32.mrf.mxu0
        %v766 = vadd.f32 %v406, %v765
        %767 = vmatmul.bf16.gmra.mxu0 %v482
        %v768 = vpop.f32.mrf.mxu0
        %v769 = vadd.f32 %v406, %v768
        %v770 = vpop.f32.mrf.mxu0
        %v771 = vadd.f32 %v406, %v770
        %772 = vmatmul.bf16.gmra.mxu0 %v483
        %v773 = vpop.f32.mrf.mxu0
        %v774 = vadd.f32 %v406, %v773
        %v775 = vpop.f32.mrf.mxu0
        %v776 = vadd.f32 %v406, %v775
        %777 = vmatmul.bf16.gmra.mxu0 %v484
        %v778 = vpop.f32.mrf.mxu0
        %v779 = vadd.f32 %v406, %v778
        %v780 = vpop.f32.mrf.mxu0
        %v781 = vadd.f32 %v406, %v780
        %782 = vmatmul.bf16.gmra.mxu0 %v485
        %v783 = vpop.f32.mrf.mxu0
        %v784 = vadd.f32 %v406, %v783
        %v785 = vpop.f32.mrf.mxu0
        %v786 = vadd.f32 %v406, %v785
        %787 = vmatmul.bf16.gmra.mxu0 %v486
        %v788 = vpop.f32.mrf.mxu0
        %v789 = vadd.f32 %v406, %v788
        %v790 = vpop.f32.mrf.mxu0
        %v791 = vadd.f32 %v406, %v790
        %792 = vmatmul.bf16.gmra.mxu0 %v487
        %v793 = vpop.f32.mrf.mxu0
        %v794 = vadd.f32 %v406, %v793
        %v795 = vpop.f32.mrf.mxu0
        %v796 = vadd.f32 %v406, %v795
        %797 = vmatmul.bf16.gmra.mxu0 %v488
        %v798 = vpop.f32.mrf.mxu0
        %v799 = vadd.f32 %v406, %v798
        %v800 = vpop.f32.mrf.mxu0
        %v801 = vadd.f32 %v406, %v800
        %802 = vmatmul.bf16.gmra.mxu0 %v489
        %v803 = vpop.f32.mrf.mxu0
        %v804 = vadd.f32 %v406, %v803
        %v805 = vpop.f32.mrf.mxu0
        %v806 = vadd.f32 %v406, %v805
        %807 = vmatmul.bf16.gmra.mxu0 %v490
        %v808 = vpop.f32.mrf.mxu0
        %v809 = vadd.f32 %v406, %v808
        %v810 = vpop.f32.mrf.mxu0
        %v811 = vadd.f32 %v406, %v810
        %812 = vdwg.mxu0
        %813 = vmatpush.bf16.msra.mxu0 %v610
        %814 = vmatpush.bf16.msra.mxu0 %v607
        %815 = vmatpush.bf16.msra.mxu0 %v604
        %816 = vmatpush.bf16.msra.mxu0 %v601
        %817 = vmatpush.bf16.msra.mxu0 %v598
        %818 = vmatpush.bf16.msra.mxu0 %v595
        %819 = vmatpush.bf16.msra.mxu0 %v592
        %820 = vmatpush.bf16.msra.mxu0 %v589
        %821 = vmatmul.bf16.gmra.mxu0 %v475
        %v822 = vpop.f32.mrf.mxu0
        %v823 = vadd.f32 %v407, %v822
        %v824 = vpop.f32.mrf.mxu0
        %v825 = vadd.f32 %v407, %v824
        %826 = vmatmul.bf16.gmra.mxu0 %v476
        %v827 = vpop.f32.mrf.mxu0
        %v828 = vadd.f32 %v407, %v827
        %v829 = vpop.f32.mrf.mxu0
        %v830 = vadd.f32 %v407, %v829
        %831 = vmatmul.bf16.gmra.mxu0 %v477
        %v832 = vpop.f32.mrf.mxu0
        %v833 = vadd.f32 %v407, %v832
        %v834 = vpop.f32.mrf.mxu0
        %v835 = vadd.f32 %v407, %v834
        %836 = vmatmul.bf16.gmra.mxu0 %v478
        %v837 = vpop.f32.mrf.mxu0
        %v838 = vadd.f32 %v407, %v837
        %v839 = vpop.f32.mrf.mxu0
        %v840 = vadd.f32 %v407, %v839
        %841 = vmatmul.bf16.gmra.mxu0 %v479
        %v842 = vpop.f32.mrf.mxu0
        %v843 = vadd.f32 %v407, %v842
        %v844 = vpop.f32.mrf.mxu0
        %v845 = vadd.f32 %v407, %v844
        %846 = vmatmul.bf16.gmra.mxu0 %v480
        %v847 = vpop.f32.mrf.mxu0
        %v848 = vadd.f32 %v407, %v847
        %v849 = vpop.f32.mrf.mxu0
        %v850 = vadd.f32 %v407, %v849
        %851 = vmatmul.bf16.gmra.mxu0 %v481
        %v852 = vpop.f32.mrf.mxu0
        %v853 = vadd.f32 %v407, %v852
        %v854 = vpop.f32.mrf.mxu0
        %v855 = vadd.f32 %v407, %v854
        %856 = vmatmul.bf16.gmra.mxu0 %v482
        %v857 = vpop.f32.mrf.mxu0
        %v858 = vadd.f32 %v407, %v857
        %v859 = vpop.f32.mrf.mxu0
        %v860 = vadd.f32 %v407, %v859
        %861 = vmatmul.bf16.gmra.mxu0 %v483
        %v862 = vpop.f32.mrf.mxu0
        %v863 = vadd.f32 %v407, %v862
        %v864 = vpop.f32.mrf.mxu0
        %v865 = vadd.f32 %v407, %v864
        %866 = vmatmul.bf16.gmra.mxu0 %v484
        %v867 = vpop.f32.mrf.mxu0
        %v868 = vadd.f32 %v407, %v867
        %v869 = vpop.f32.mrf.mxu0
        %v870 = vadd.f32 %v407, %v869
        %871 = vmatmul.bf16.gmra.mxu0 %v485
        %v872 = vpop.f32.mrf.mxu0
        %v873 = vadd.f32 %v407, %v872
        %v874 = vpop.f32.mrf.mxu0
        %v875 = vadd.f32 %v407, %v874
        %876 = vmatmul.bf16.gmra.mxu0 %v486
        %v877 = vpop.f32.mrf.mxu0
        %v878 = vadd.f32 %v407, %v877
        %v879 = vpop.f32.mrf.mxu0
        %v880 = vadd.f32 %v407, %v879
        %881 = vmatmul.bf16.gmra.mxu0 %v487
        %v882 = vpop.f32.mrf.mxu0
        %v883 = vadd.f32 %v407, %v882
        %v884 = vpop.f32.mrf.mxu0
        %v885 = vadd.f32 %v407, %v884
        %886 = vmatmul.bf16.gmra.mxu0 %v488
        %v887 = vpop.f32.mrf.mxu0
        %v888 = vadd.f32 %v407, %v887
        %v889 = vpop.f32.mrf.mxu0
        %v890 = vadd.f32 %v407, %v889
        %891 = vmatmul.bf16.gmra.mxu0 %v489
        %v892 = vpop.f32.mrf.mxu0
        %v893 = vadd.f32 %v407, %v892
        %v894 = vpop.f32.mrf.mxu0
        %v895 = vadd.f32 %v407, %v894
        %896 = vmatmul.bf16.gmra.mxu0 %v490
        %v897 = vpop.f32.mrf.mxu0
        %v898 = vadd.f32 %v407, %v897
        %v899 = vpop.f32.mrf.mxu0
        %v900 = vadd.f32 %v407, %v899
        %901 = vdwg.mxu0
        %v902 = vpack.c.bf16 %v734, %v645
        %v903 = vpack.c.bf16 %v823, %v823
        %v904 = vpack.c.bf16 %v736, %v647
        %v905 = vpack.c.bf16 %v825, %v825
        %v906 = vpack.c.bf16 %v739, %v650
        %v907 = vpack.c.bf16 %v828, %v828
        %v908 = vpack.c.bf16 %v741, %v652
        %v909 = vpack.c.bf16 %v830, %v830
        %v910 = vpack.c.bf16 %v744, %v655
        %v911 = vpack.c.bf16 %v833, %v833
        %v912 = vpack.c.bf16 %v746, %v657
        %v913 = vpack.c.bf16 %v835, %v835
        %v914 = vpack.c.bf16 %v749, %v660
        %v915 = vpack.c.bf16 %v838, %v838
        %v916 = vpack.c.bf16 %v751, %v662
        %v917 = vpack.c.bf16 %v840, %v840
        %v918 = vpack.c.bf16 %v754, %v665
        %v919 = vpack.c.bf16 %v843, %v843
        %v920 = vpack.c.bf16 %v756, %v667
        %v921 = vpack.c.bf16 %v845, %v845
        %v922 = vpack.c.bf16 %v759, %v670
        %v923 = vpack.c.bf16 %v848, %v848
        %v924 = vpack.c.bf16 %v761, %v672
        %v925 = vpack.c.bf16 %v850, %v850
        %v926 = vpack.c.bf16 %v764, %v675
        %v927 = vpack.c.bf16 %v853, %v853
        %v928 = vpack.c.bf16 %v766, %v677
        %v929 = vpack.c.bf16 %v855, %v855
        %v930 = vpack.c.bf16 %v769, %v680
        %v931 = vpack.c.bf16 %v858, %v858
        %v932 = vpack.c.bf16 %v771, %v682
        %v933 = vpack.c.bf16 %v860, %v860
        %v934 = vpack.c.bf16 %v774, %v685
        %v935 = vpack.c.bf16 %v863, %v863
        %v936 = vpack.c.bf16 %v776, %v687
        %v937 = vpack.c.bf16 %v865, %v865
        %v938 = vpack.c.bf16 %v779, %v690
        %v939 = vpack.c.bf16 %v868, %v868
        %v940 = vpack.c.bf16 %v781, %v692
        %v941 = vpack.c.bf16 %v870, %v870
        %v942 = vpack.c.bf16 %v784, %v695
        %v943 = vpack.c.bf16 %v873, %v873
        %v944 = vpack.c.bf16 %v786, %v697
        %v945 = vpack.c.bf16 %v875, %v875
        %v946 = vpack.c.bf16 %v789, %v700
        %v947 = vpack.c.bf16 %v878, %v878
        %v948 = vpack.c.bf16 %v791, %v702
        %v949 = vpack.c.bf16 %v880, %v880
        %v950 = vpack.c.bf16 %v794, %v705
        %v951 = vpack.c.bf16 %v883, %v883
        %v952 = vpack.c.bf16 %v796, %v707
        %v953 = vpack.c.bf16 %v885, %v885
        %v954 = vpack.c.bf16 %v799, %v710
        %v955 = vpack.c.bf16 %v888, %v888
        %v956 = vpack.c.bf16 %v801, %v712
        %v957 = vpack.c.bf16 %v890, %v890
        %v958 = vpack.c.bf16 %v804, %v715
        %v959 = vpack.c.bf16 %v893, %v893
        %v960 = vpack.c.bf16 %v806, %v717
        %v961 = vpack.c.bf16 %v895, %v895
        %v962 = vpack.c.bf16 %v809, %v720
        %v963 = vpack.c.bf16 %v898, %v898
        %v964 = vpack.c.bf16 %v811, %v722
        %v965 = vpack.c.bf16 %v900, %v900
        %966 = vst [vmem:[#allocation2] sm:$0xff] %v902
        %967 = vst [vmem:[#allocation2 + $0x8] sm:$0xf] %v903
        %968 = vst [vmem:[#allocation2 + $0xc] sm:$0xff] %v904
        %969 = vst [vmem:[#allocation2 + $0x14] sm:$0xf] %v905
        %970 = vst [vmem:[#allocation2 + $0x18] sm:$0xff] %v906
        %971 = vst [vmem:[#allocation2 + $0x20] sm:$0xf] %v907
        %972 = vst [vmem:[#allocation2 + $0x24] sm:$0xff] %v908
        %973 = vst [vmem:[#allocation2 + $0x2c] sm:$0xf] %v909
        %974 = vst [vmem:[#allocation2 + $0x30] sm:$0xff] %v910
        %975 = vst [vmem:[#allocation2 + $0x38] sm:$0xf] %v911
        %976 = vst [vmem:[#allocation2 + $0x3c] sm:$0xff] %v912
        %977 = vst [vmem:[#allocation2 + $0x44] sm:$0xf] %v913
        %978 = vst [vmem:[#allocation2 + $0x48] sm:$0xff] %v914
        %979 = vst [vmem:[#allocation2 + $0x50] sm:$0xf] %v915
        %980 = vst [vmem:[#allocation2 + $0x54] sm:$0xff] %v916
        %981 = vst [vmem:[#allocation2 + $0x5c] sm:$0xf] %v917
        %982 = vst [vmem:[#allocation2 + $0x60] sm:$0xff] %v918
        %983 = vst [vmem:[#allocation2 + $0x68] sm:$0xf] %v919
        %984 = vst [vmem:[#allocation2 + $0x6c] sm:$0xff] %v920
        %985 = vst [vmem:[#allocation2 + $0x74] sm:$0xf] %v921
        %986 = vst [vmem:[#allocation2 + $0x78] sm:$0xff] %v922
        %987 = vst [vmem:[#allocation2 + $0x80] sm:$0xf] %v923
        %988 = vst [vmem:[#allocation2 + $0x84] sm:$0xff] %v924
        %989 = vst [vmem:[#allocation2 + $0x8c] sm:$0xf] %v925
        %990 = vst [vmem:[#allocation2 + $0x90] sm:$0xff] %v926
        %991 = vst [vmem:[#allocation2 + $0x98] sm:$0xf] %v927
        %992 = vst [vmem:[#allocation2 + $0x9c] sm:$0xff] %v928
        %993 = vst [vmem:[#allocation2 + $0xa4] sm:$0xf] %v929
        %994 = vst [vmem:[#allocation2 + $0xa8] sm:$0xff] %v930
        %995 = vst [vmem:[#allocation2 + $0xb0] sm:$0xf] %v931
        %996 = vst [vmem:[#allocation2 + $0xb4] sm:$0xff] %v932
        %997 = vst [vmem:[#allocation2 + $0xbc] sm:$0xf] %v933
        %998 = vst [vmem:[#allocation2 + $0xc0] sm:$0xff] %v934
        %999 = vst [vmem:[#allocation2 + $0xc8] sm:$0xf] %v935
        %1000 = vst [vmem:[#allocation2 + $0xcc] sm:$0xff] %v936
        %1001 = vst [vmem:[#allocation2 + $0xd4] sm:$0xf] %v937
        %1002 = vst [vmem:[#allocation2 + $0xd8] sm:$0xff] %v938
        %1003 = vst [vmem:[#allocation2 + $0xe0] sm:$0xf] %v939
        %1004 = vst [vmem:[#allocation2 + $0xe4] sm:$0xff] %v940
        %1005 = vst [vmem:[#allocation2 + $0xec] sm:$0xf] %v941
        %1006 = vst [vmem:[#allocation2 + $0xf0] sm:$0xff] %v942
        %1007 = vst [vmem:[#allocation2 + $0xf8] sm:$0xf] %v943
        %1008 = vst [vmem:[#allocation2 + $0xfc] sm:$0xff] %v944
        %1009 = vst [vmem:[#allocation2 + $0x104] sm:$0xf] %v945
        %1010 = vst [vmem:[#allocation2 + $0x108] sm:$0xff] %v946
        %1011 = vst [vmem:[#allocation2 + $0x110] sm:$0xf] %v947
        %1012 = vst [vmem:[#allocation2 + $0x114] sm:$0xff] %v948
        %1013 = vst [vmem:[#allocation2 + $0x11c] sm:$0xf] %v949
        %1014 = vst [vmem:[#allocation2 + $0x120] sm:$0xff] %v950
        %1015 = vst [vmem:[#allocation2 + $0x128] sm:$0xf] %v951
        %1016 = vst [vmem:[#allocation2 + $0x12c] sm:$0xff] %v952
        %1017 = vst [vmem:[#allocation2 + $0x134] sm:$0xf] %v953
        %1018 = vst [vmem:[#allocation2 + $0x138] sm:$0xff] %v954
        %1019 = vst [vmem:[#allocation2 + $0x140] sm:$0xf] %v955
        %1020 = vst [vmem:[#allocation2 + $0x144] sm:$0xff] %v956
        %1021 = vst [vmem:[#allocation2 + $0x14c] sm:$0xf] %v957
        %1022 = vst [vmem:[#allocation2 + $0x150] sm:$0xff] %v958
        %1023 = vst [vmem:[#allocation2 + $0x158] sm:$0xf] %v959
        %1024 = vst [vmem:[#allocation2 + $0x15c] sm:$0xff] %v960
        %1025 = vst [vmem:[#allocation2 + $0x164] sm:$0xf] %v961
        %1026 = vst [vmem:[#allocation2 + $0x168] sm:$0xff] %v962
        %1027 = vst [vmem:[#allocation2 + $0x170] sm:$0xf] %v963
        %1028 = vst [vmem:[#allocation2 + $0x174] sm:$0xff] %v964
        %1029 = vst [vmem:[#allocation2 + $0x17c] sm:$0xf] %v965
        %v1030 = vld [vmem:[#allocation2] sm:$0xf]
        %v1031 = vld [vmem:[#allocation2 + $0xc] sm:$0xf]
        %v1032 = vld [vmem:[#allocation2 + $0x18] sm:$0xf]
        %v1033 = vld [vmem:[#allocation2 + $0x24] sm:$0xf]
        %v1034 = vld [vmem:[#allocation2 + $0x30] sm:$0xf]
        %v1035 = vld [vmem:[#allocation2 + $0x3c] sm:$0xf]
        %v1036 = vld [vmem:[#allocation2 + $0x48] sm:$0xf]
        %v1037 = vld [vmem:[#allocation2 + $0x54] sm:$0xf]
        %v1038 = vld [vmem:[#allocation2 + $0x60] sm:$0xf]
        %v1039 = vld [vmem:[#allocation2 + $0x6c] sm:$0xf]
        %v1040 = vld [vmem:[#allocation2 + $0x78] sm:$0xf]
        %v1041 = vld [vmem:[#allocation2 + $0x84] sm:$0xf]
        %v1042 = vld [vmem:[#allocation2 + $0x90] sm:$0xf]
        %v1043 = vld [vmem:[#allocation2 + $0x9c] sm:$0xf]
        %v1044 = vld [vmem:[#allocation2 + $0xa8] sm:$0xf]
        %v1045 = vld [vmem:[#allocation2 + $0xb4] sm:$0xf]
        %v1046 = vld [vmem:[#allocation2 + $0xc0] sm:$0xf]
        %v1047 = vld [vmem:[#allocation2 + $0xcc] sm:$0xf]
        %v1048 = vld [vmem:[#allocation2 + $0xd8] sm:$0xf]
        %v1049 = vld [vmem:[#allocation2 + $0xe4] sm:$0xf]
        %v1050 = vld [vmem:[#allocation2 + $0xf0] sm:$0xf]
        %v1051 = vld [vmem:[#allocation2 + $0xfc] sm:$0xf]
        %v1052 = vld [vmem:[#allocation2 + $0x108] sm:$0xf]
        %v1053 = vld [vmem:[#allocation2 + $0x114] sm:$0xf]
        %v1054 = vld [vmem:[#allocation2 + $0x120] sm:$0xf]
        %v1055 = vld [vmem:[#allocation2 + $0x12c] sm:$0xf]
        %v1056 = vld [vmem:[#allocation2 + $0x138] sm:$0xf]
        %v1057 = vld [vmem:[#allocation2 + $0x144] sm:$0xf]
        %v1058 = vld [vmem:[#allocation2 + $0x150] sm:$0xf]
        %v1059 = vld [vmem:[#allocation2 + $0x15c] sm:$0xf]
        %v1060 = vld [vmem:[#allocation2 + $0x168] sm:$0xf]
        %v1061 = vld [vmem:[#allocation2 + $0x174] sm:$0xf]
        %v1062 = vld [vmem:[#allocation2 + $0x4] sm:$0xf]
        %v1063 = vld [vmem:[#allocation2 + $0x10] sm:$0xf]
        %v1064 = vld [vmem:[#allocation2 + $0x1c] sm:$0xf]
        %v1065 = vld [vmem:[#allocation2 + $0x28] sm:$0xf]
        %v1066 = vld [vmem:[#allocation2 + $0x34] sm:$0xf]
        %v1067 = vld [vmem:[#allocation2 + $0x40] sm:$0xf]
        %v1068 = vld [vmem:[#allocation2 + $0x4c] sm:$0xf]
        %v1069 = vld [vmem:[#allocation2 + $0x58] sm:$0xf]
        %v1070 = vld [vmem:[#allocation2 + $0x64] sm:$0xf]
        %v1071 = vld [vmem:[#allocation2 + $0x70] sm:$0xf]
        %v1072 = vld [vmem:[#allocation2 + $0x7c] sm:$0xf]
        %v1073 = vld [vmem:[#allocation2 + $0x88] sm:$0xf]
        %v1074 = vld [vmem:[#allocation2 + $0x94] sm:$0xf]
        %v1075 = vld [vmem:[#allocation2 + $0xa0] sm:$0xf]
        %v1076 = vld [vmem:[#allocation2 + $0xac] sm:$0xf]
        %v1077 = vld [vmem:[#allocation2 + $0xb8] sm:$0xf]
        %v1078 = vld [vmem:[#allocation2 + $0xc4] sm:$0xf]
        %v1079 = vld [vmem:[#allocation2 + $0xd0] sm:$0xf]
        %v1080 = vld [vmem:[#allocation2 + $0xdc] sm:$0xf]
        %v1081 = vld [vmem:[#allocation2 + $0xe8] sm:$0xf]
        %v1082 = vld [vmem:[#allocation2 + $0xf4] sm:$0xf]
        %v1083 = vld [vmem:[#allocation2 + $0x100] sm:$0xf]
        %v1084 = vld [vmem:[#allocation2 + $0x10c] sm:$0xf]
        %v1085 = vld [vmem:[#allocation2 + $0x118] sm:$0xf]
        %v1086 = vld [vmem:[#allocation2 + $0x124] sm:$0xf]
        %v1087 = vld [vmem:[#allocation2 + $0x130] sm:$0xf]
        %v1088 = vld [vmem:[#allocation2 + $0x13c] sm:$0xf]
        %v1089 = vld [vmem:[#allocation2 + $0x148] sm:$0xf]
        %v1090 = vld [vmem:[#allocation2 + $0x154] sm:$0xf]
        %v1091 = vld [vmem:[#allocation2 + $0x160] sm:$0xf]
        %v1092 = vld [vmem:[#allocation2 + $0x16c] sm:$0xf]
        %v1093 = vld [vmem:[#allocation2 + $0x178] sm:$0xf]
        %v1094 = vld [vmem:[#allocation2 + $0x8] sm:$0xf]
        %v1095 = vld [vmem:[#allocation2 + $0x14] sm:$0xf]
        %v1096 = vld [vmem:[#allocation2 + $0x20] sm:$0xf]
        %v1097 = vld [vmem:[#allocation2 + $0x2c] sm:$0xf]
        %v1098 = vld [vmem:[#allocation2 + $0x38] sm:$0xf]
        %v1099 = vld [vmem:[#allocation2 + $0x44] sm:$0xf]
        %v1100 = vld [vmem:[#allocation2 + $0x50] sm:$0xf]
        %v1101 = vld [vmem:[#allocation2 + $0x5c] sm:$0xf]
        %v1102 = vld [vmem:[#allocation2 + $0x68] sm:$0xf]
        %v1103 = vld [vmem:[#allocation2 + $0x74] sm:$0xf]
        %v1104 = vld [vmem:[#allocation2 + $0x80] sm:$0xf]
        %v1105 = vld [vmem:[#allocation2 + $0x8c] sm:$0xf]
        %v1106 = vld [vmem:[#allocation2 + $0x98] sm:$0xf]
        %v1107 = vld [vmem:[#allocation2 + $0xa4] sm:$0xf]
        %v1108 = vld [vmem:[#allocation2 + $0xb0] sm:$0xf]
        %v1109 = vld [vmem:[#allocation2 + $0xbc] sm:$0xf]
        %v1110 = vld [vmem:[#allocation2 + $0xc8] sm:$0xf]
        %v1111 = vld [vmem:[#allocation2 + $0xd4] sm:$0xf]
        %v1112 = vld [vmem:[#allocation2 + $0xe0] sm:$0xf]
        %v1113 = vld [vmem:[#allocation2 + $0xec] sm:$0xf]
        %v1114 = vld [vmem:[#allocation2 + $0xf8] sm:$0xf]
        %v1115 = vld [vmem:[#allocation2 + $0x104] sm:$0xf]
        %v1116 = vld [vmem:[#allocation2 + $0x110] sm:$0xf]
        %v1117 = vld [vmem:[#allocation2 + $0x11c] sm:$0xf]
        %v1118 = vld [vmem:[#allocation2 + $0x128] sm:$0xf]
        %v1119 = vld [vmem:[#allocation2 + $0x134] sm:$0xf]
        %v1120 = vld [vmem:[#allocation2 + $0x140] sm:$0xf]
        %v1121 = vld [vmem:[#allocation2 + $0x14c] sm:$0xf]
        %v1122 = vld [vmem:[#allocation2 + $0x158] sm:$0xf]
        %v1123 = vld [vmem:[#allocation2 + $0x164] sm:$0xf]
        %v1124 = vld [vmem:[#allocation2 + $0x170] sm:$0xf]
        %v1125 = vld [vmem:[#allocation2 + $0x17c] sm:$0xf]
        %v1126 = vld [vmem:[#allocation11] sm:$0xff]
        %v1127 = vld [vmem:[#allocation11 + $0x8] sm:$0xff]
        %v1128 = vld [vmem:[#allocation11 + $0x10] sm:$0xff]
        %v1129 = vld [vmem:[#allocation11 + $0x18] sm:$0xff]
        %v1130 = vld [vmem:[#allocation11 + $0x20] sm:$0xff]
        %v1131 = vld [vmem:[#allocation11 + $0x28] sm:$0xff]
        %v1132 = vld [vmem:[#allocation11 + $0x30] sm:$0xff]
        %v1133 = vld [vmem:[#allocation11 + $0x38] sm:$0xff]
        %v1134 = vld [vmem:[#allocation11 + $0x40] sm:$0xff]
        %v1135 = vld [vmem:[#allocation11 + $0x48] sm:$0xff]
        %v1136 = vld [vmem:[#allocation11 + $0x50] sm:$0xff]
        %v1137 = vld [vmem:[#allocation11 + $0x58] sm:$0xff]
        %v1138 = vld [vmem:[#allocation11 + $0x60] sm:$0xff]
        %v1139 = vld [vmem:[#allocation11 + $0x68] sm:$0xff]
        %v1140 = vld [vmem:[#allocation11 + $0x70] sm:$0xff]
        %v1141 = vld [vmem:[#allocation11 + $0x78] sm:$0xff]
        %v1142 = vld [vmem:[#allocation11 + $0x80] sm:$0xff]
        %v1143 = vld [vmem:[#allocation11 + $0x88] sm:$0xff]
        %v1144 = vld [vmem:[#allocation11 + $0x90] sm:$0xff]
        %v1145 = vld [vmem:[#allocation11 + $0x98] sm:$0xff]
        %v1146 = vld [vmem:[#allocation11 + $0xa0] sm:$0xff]
        %v1147 = vld [vmem:[#allocation11 + $0xa8] sm:$0xff]
        %v1148 = vld [vmem:[#allocation11 + $0xb0] sm:$0xff]
        %v1149 = vld [vmem:[#allocation11 + $0xb8] sm:$0xff]
        %v1150 = vld [vmem:[#allocation11 + $0xc0] sm:$0xff]
        %v1151 = vld [vmem:[#allocation11 + $0xc8] sm:$0xff]
        %v1152 = vld [vmem:[#allocation11 + $0xd0] sm:$0xff]
        %v1153 = vld [vmem:[#allocation11 + $0xd8] sm:$0xff]
        %v1154 = vld [vmem:[#allocation11 + $0xe0] sm:$0xff]
        %v1155 = vld [vmem:[#allocation11 + $0xe8] sm:$0xff]
        %v1156 = vld [vmem:[#allocation11 + $0xf0] sm:$0xff]
        %v1157 = vld [vmem:[#allocation11 + $0xf8] sm:$0xff]
        %v1158 = vld [vmem:[#allocation11 + $0x100] sm:$0xff]
        %v1159 = vld [vmem:[#allocation11 + $0x108] sm:$0xff]
        %v1160 = vld [vmem:[#allocation11 + $0x110] sm:$0xff]
        %v1161 = vld [vmem:[#allocation11 + $0x118] sm:$0xff]
        %v1162 = vld [vmem:[#allocation11 + $0x120] sm:$0xff]
        %v1163 = vld [vmem:[#allocation11 + $0x128] sm:$0xff]
        %v1164 = vld [vmem:[#allocation11 + $0x130] sm:$0xff]
        %v1165 = vld [vmem:[#allocation11 + $0x138] sm:$0xff]
        %v1166 = vld [vmem:[#allocation11 + $0x140] sm:$0xff]
        %v1167 = vld [vmem:[#allocation11 + $0x148] sm:$0xff]
        %v1168 = vld [vmem:[#allocation11 + $0x150] sm:$0xff]
        %v1169 = vld [vmem:[#allocation11 + $0x158] sm:$0xff]
        %v1170 = vld [vmem:[#allocation11 + $0x160] sm:$0xff]
        %v1171 = vld [vmem:[#allocation11 + $0x168] sm:$0xff]
        %v1172 = vld [vmem:[#allocation11 + $0x170] sm:$0xff]
        %v1173 = vld [vmem:[#allocation11 + $0x178] sm:$0xff]
        %v1174 = vld [vmem:[#allocation11 + $0x180] sm:$0xff]
        %v1175 = vld [vmem:[#allocation11 + $0x188] sm:$0xff]
        %v1176 = vld [vmem:[#allocation11 + $0x190] sm:$0xff]
        %v1177 = vld [vmem:[#allocation11 + $0x198] sm:$0xff]
        %v1178 = vld [vmem:[#allocation11 + $0x1a0] sm:$0xff]
        %v1179 = vld [vmem:[#allocation11 + $0x1a8] sm:$0xff]
        %v1180 = vld [vmem:[#allocation11 + $0x1b0] sm:$0xff]
        %v1181 = vld [vmem:[#allocation11 + $0x1b8] sm:$0xff]
        %v1182 = vld [vmem:[#allocation11 + $0x1c0] sm:$0xff]
        %v1183 = vld [vmem:[#allocation11 + $0x1c8] sm:$0xff]
        %v1184 = vld [vmem:[#allocation11 + $0x1d0] sm:$0xff]
        %v1185 = vld [vmem:[#allocation11 + $0x1d8] sm:$0xff]
        %v1186 = vld [vmem:[#allocation11 + $0x1e0] sm:$0xff]
        %v1187 = vld [vmem:[#allocation11 + $0x1e8] sm:$0xff]
        %v1188 = vld [vmem:[#allocation11 + $0x1f0] sm:$0xff]
        %v1189 = vld [vmem:[#allocation11 + $0x1f8] sm:$0xff]
        %v1222 = vunpack.c.l.b16 %v1030
        %v1223 = vunpack.c.l.b16 %v1031
        %v1224 = vunpack.c.l.b16 %v1032
        %v1225 = vunpack.c.l.b16 %v1033
        %v1226 = vunpack.c.l.b16 %v1034
        %v1227 = vunpack.c.l.b16 %v1035
        %v1228 = vunpack.c.l.b16 %v1036
        %v1229 = vunpack.c.l.b16 %v1037
        %v1230 = vunpack.c.l.b16 %v1038
        %v1231 = vunpack.c.l.b16 %v1039
        %v1232 = vunpack.c.l.b16 %v1040
        %v1233 = vunpack.c.l.b16 %v1041
        %v1234 = vunpack.c.l.b16 %v1042
        %v1235 = vunpack.c.l.b16 %v1043
        %v1236 = vunpack.c.l.b16 %v1044
        %v1237 = vunpack.c.l.b16 %v1045
        %v1238 = vunpack.c.l.b16 %v1046
        %v1239 = vunpack.c.l.b16 %v1047
        %v1240 = vunpack.c.l.b16 %v1048
        %v1241 = vunpack.c.l.b16 %v1049
        %v1242 = vunpack.c.l.b16 %v1050
        %v1243 = vunpack.c.l.b16 %v1051
        %v1244 = vunpack.c.l.b16 %v1052
        %v1245 = vunpack.c.l.b16 %v1053
        %v1246 = vunpack.c.l.b16 %v1054
        %v1247 = vunpack.c.l.b16 %v1055
        %v1248 = vunpack.c.l.b16 %v1056
        %v1249 = vunpack.c.l.b16 %v1057
        %v1250 = vunpack.c.l.b16 %v1058
        %v1251 = vunpack.c.l.b16 %v1059
        %v1252 = vunpack.c.l.b16 %v1060
        %v1253 = vunpack.c.l.b16 %v1061
        %v1254 = vpack.c.b16 %v1223, %v1222
        %v1255 = vpack.c.b16 %v1225, %v1224
        %v1256 = vpack.c.b16 %v1227, %v1226
        %v1257 = vpack.c.b16 %v1229, %v1228
        %v1258 = vpack.c.b16 %v1231, %v1230
        %v1259 = vpack.c.b16 %v1233, %v1232
        %v1260 = vpack.c.b16 %v1235, %v1234
        %v1261 = vpack.c.b16 %v1237, %v1236
        %v1262 = vpack.c.b16 %v1239, %v1238
        %v1263 = vpack.c.b16 %v1241, %v1240
        %v1264 = vpack.c.b16 %v1243, %v1242
        %v1265 = vpack.c.b16 %v1245, %v1244
        %v1266 = vpack.c.b16 %v1247, %v1246
        %v1267 = vpack.c.b16 %v1249, %v1248
        %v1268 = vpack.c.b16 %v1251, %v1250
        %v1269 = vpack.c.b16 %v1253, %v1252
        %v1302 = vunpack.c.l.b16 %v1062
        %v1303 = vunpack.c.l.b16 %v1063
        %v1304 = vunpack.c.l.b16 %v1064
        %v1305 = vunpack.c.l.b16 %v1065
        %v1306 = vunpack.c.l.b16 %v1066
        %v1307 = vunpack.c.l.b16 %v1067
        %v1308 = vunpack.c.l.b16 %v1068
        %v1309 = vunpack.c.l.b16 %v1069
        %v1310 = vunpack.c.l.b16 %v1070
        %v1311 = vunpack.c.l.b16 %v1071
        %v1312 = vunpack.c.l.b16 %v1072
        %v1313 = vunpack.c.l.b16 %v1073
        %v1314 = vunpack.c.l.b16 %v1074
        %v1315 = vunpack.c.l.b16 %v1075
        %v1316 = vunpack.c.l.b16 %v1076
        %v1317 = vunpack.c.l.b16 %v1077
        %v1318 = vunpack.c.l.b16 %v1078
        %v1319 = vunpack.c.l.b16 %v1079
        %v1320 = vunpack.c.l.b16 %v1080
        %v1321 = vunpack.c.l.b16 %v1081
        %v1322 = vunpack.c.l.b16 %v1082
        %v1323 = vunpack.c.l.b16 %v1083
        %v1324 = vunpack.c.l.b16 %v1084
        %v1325 = vunpack.c.l.b16 %v1085
        %v1326 = vunpack.c.l.b16 %v1086
        %v1327 = vunpack.c.l.b16 %v1087
        %v1328 = vunpack.c.l.b16 %v1088
        %v1329 = vunpack.c.l.b16 %v1089
        %v1330 = vunpack.c.l.b16 %v1090
        %v1331 = vunpack.c.l.b16 %v1091
        %v1332 = vunpack.c.l.b16 %v1092
        %v1333 = vunpack.c.l.b16 %v1093
        %v1334 = vpack.c.b16 %v1303, %v1302
        %v1335 = vpack.c.b16 %v1305, %v1304
        %v1336 = vpack.c.b16 %v1307, %v1306
        %v1337 = vpack.c.b16 %v1309, %v1308
        %v1338 = vpack.c.b16 %v1311, %v1310
        %v1339 = vpack.c.b16 %v1313, %v1312
        %v1340 = vpack.c.b16 %v1315, %v1314
        %v1341 = vpack.c.b16 %v1317, %v1316
        %v1342 = vpack.c.b16 %v1319, %v1318
        %v1343 = vpack.c.b16 %v1321, %v1320
        %v1344 = vpack.c.b16 %v1323, %v1322
        %v1345 = vpack.c.b16 %v1325, %v1324
        %v1346 = vpack.c.b16 %v1327, %v1326
        %v1347 = vpack.c.b16 %v1329, %v1328
        %v1348 = vpack.c.b16 %v1331, %v1330
        %v1349 = vpack.c.b16 %v1333, %v1332
        %vm1350 = vcmask 261120
        %v1352 = vsel %vm1350, %v1254, 0
        %v1355 = vsel %vm1350, %v1255, 0
        %v1358 = vsel %vm1350, %v1256, 0
        %v1361 = vsel %vm1350, %v1257, 0
        %v1364 = vsel %vm1350, %v1258, 0
        %v1367 = vsel %vm1350, %v1259, 0
        %v1370 = vsel %vm1350, %v1260, 0
        %v1373 = vsel %vm1350, %v1261, 0
        %v1376 = vsel %vm1350, %v1262, 0
        %v1379 = vsel %vm1350, %v1263, 0
        %v1382 = vsel %vm1350, %v1264, 0
        %v1385 = vsel %vm1350, %v1265, 0
        %v1388 = vsel %vm1350, %v1266, 0
        %v1391 = vsel %vm1350, %v1267, 0
        %v1394 = vsel %vm1350, %v1268, 0
        %v1397 = vsel %vm1350, %v1269, 0
        %v1400 = vsel %vm1350, %v1334, 0
        %v1403 = vsel %vm1350, %v1335, 0
        %v1406 = vsel %vm1350, %v1336, 0
        %v1409 = vsel %vm1350, %v1337, 0
        %v1412 = vsel %vm1350, %v1338, 0
        %v1415 = vsel %vm1350, %v1339, 0
        %v1418 = vsel %vm1350, %v1340, 0
        %v1421 = vsel %vm1350, %v1341, 0
        %v1424 = vsel %vm1350, %v1342, 0
        %v1427 = vsel %vm1350, %v1343, 0
        %v1430 = vsel %vm1350, %v1344, 0
        %v1433 = vsel %vm1350, %v1345, 0
        %v1436 = vsel %vm1350, %v1346, 0
        %v1439 = vsel %vm1350, %v1347, 0
        %v1442 = vsel %vm1350, %v1348, 0
        %v1445 = vsel %vm1350, %v1349, 0
        %1447 = vmatpush.bf16.xpose.msra.mxu0 %v1421
        %1448 = vmatpush.bf16.xpose.msra.mxu0 %v1418
        %1449 = vmatpush.bf16.xpose.msra.mxu0 %v1415
        %1450 = vmatpush.bf16.xpose.msra.mxu0 %v1412
        %1451 = vmatpush.bf16.xpose.msra.mxu0 %v1409
        %1452 = vmatpush.bf16.xpose.msra.mxu0 %v1406
        %1453 = vmatpush.bf16.xpose.msra.mxu0 %v1403
        %1454 = vmatpush.bf16.xpose.msra.mxu0 %v1400
        %1455 = vmatmul.bf16.gmra.mxu0 %v1352
        %v1456 = vpop.f32.mrf.mxu0
        %v1457 = vadd.f32 %v1126, %v1456
        %v1458 = vpop.f32.mrf.mxu0
        %v1459 = vadd.f32 %v1128, %v1458
        %1460 = vmatmul.bf16.gmra.mxu0 %v1355
        %v1461 = vpop.f32.mrf.mxu0
        %v1462 = vadd.f32 %v1130, %v1461
        %v1463 = vpop.f32.mrf.mxu0
        %v1464 = vadd.f32 %v1132, %v1463
        %1465 = vmatmul.bf16.gmra.mxu0 %v1358
        %v1466 = vpop.f32.mrf.mxu0
        %v1467 = vadd.f32 %v1134, %v1466
        %v1468 = vpop.f32.mrf.mxu0
        %v1469 = vadd.f32 %v1136, %v1468
        %1470 = vmatmul.bf16.gmra.mxu0 %v1361
        %v1471 = vpop.f32.mrf.mxu0
        %v1472 = vadd.f32 %v1138, %v1471
        %v1473 = vpop.f32.mrf.mxu0
        %v1474 = vadd.f32 %v1140, %v1473
        %1475 = vmatmul.bf16.gmra.mxu0 %v1364
        %v1476 = vpop.f32.mrf.mxu0
        %v1477 = vadd.f32 %v1142, %v1476
        %v1478 = vpop.f32.mrf.mxu0
        %v1479 = vadd.f32 %v1144, %v1478
        %1480 = vmatmul.bf16.gmra.mxu0 %v1367
        %v1481 = vpop.f32.mrf.mxu0
        %v1482 = vadd.f32 %v1146, %v1481
        %v1483 = vpop.f32.mrf.mxu0
        %v1484 = vadd.f32 %v1148, %v1483
        %1485 = vmatmul.bf16.gmra.mxu0 %v1370
        %v1486 = vpop.f32.mrf.mxu0
        %v1487 = vadd.f32 %v1150, %v1486
        %v1488 = vpop.f32.mrf.mxu0
        %v1489 = vadd.f32 %v1152, %v1488
        %1490 = vmatmul.bf16.gmra.mxu0 %v1373
        %v1491 = vpop.f32.mrf.mxu0
        %v1492 = vadd.f32 %v1154, %v1491
        %v1493 = vpop.f32.mrf.mxu0
        %v1494 = vadd.f32 %v1156, %v1493
        %1495 = vmatmul.bf16.gmra.mxu0 %v1376
        %v1496 = vpop.f32.mrf.mxu0
        %v1497 = vadd.f32 %v1158, %v1496
        %v1498 = vpop.f32.mrf.mxu0
        %v1499 = vadd.f32 %v1160, %v1498
        %1500 = vmatmul.bf16.gmra.mxu0 %v1379
        %v1501 = vpop.f32.mrf.mxu0
        %v1502 = vadd.f32 %v1162, %v1501
        %v1503 = vpop.f32.mrf.mxu0
        %v1504 = vadd.f32 %v1164, %v1503
        %1505 = vmatmul.bf16.gmra.mxu0 %v1382
        %v1506 = vpop.f32.mrf.mxu0
        %v1507 = vadd.f32 %v1166, %v1506
        %v1508 = vpop.f32.mrf.mxu0
        %v1509 = vadd.f32 %v1168, %v1508
        %1510 = vmatmul.bf16.gmra.mxu0 %v1385
        %v1511 = vpop.f32.mrf.mxu0
        %v1512 = vadd.f32 %v1170, %v1511
        %v1513 = vpop.f32.mrf.mxu0
        %v1514 = vadd.f32 %v1172, %v1513
        %1515 = vmatmul.bf16.gmra.mxu0 %v1388
        %v1516 = vpop.f32.mrf.mxu0
        %v1517 = vadd.f32 %v1174, %v1516
        %v1518 = vpop.f32.mrf.mxu0
        %v1519 = vadd.f32 %v1176, %v1518
        %1520 = vmatmul.bf16.gmra.mxu0 %v1391
        %v1521 = vpop.f32.mrf.mxu0
        %v1522 = vadd.f32 %v1178, %v1521
        %v1523 = vpop.f32.mrf.mxu0
        %v1524 = vadd.f32 %v1180, %v1523
        %1525 = vmatmul.bf16.gmra.mxu0 %v1394
        %v1526 = vpop.f32.mrf.mxu0
        %v1527 = vadd.f32 %v1182, %v1526
        %v1528 = vpop.f32.mrf.mxu0
        %v1529 = vadd.f32 %v1184, %v1528
        %1530 = vmatmul.bf16.gmra.mxu0 %v1397
        %v1531 = vpop.f32.mrf.mxu0
        %v1532 = vadd.f32 %v1186, %v1531
        %v1533 = vpop.f32.mrf.mxu0
        %v1534 = vadd.f32 %v1188, %v1533
        %1535 = vdwg.mxu0
        %1536 = vmatpush.bf16.xpose.msra.mxu0 %v1445
        %1537 = vmatpush.bf16.xpose.msra.mxu0 %v1442
        %1538 = vmatpush.bf16.xpose.msra.mxu0 %v1439
        %1539 = vmatpush.bf16.xpose.msra.mxu0 %v1436
        %1540 = vmatpush.bf16.xpose.msra.mxu0 %v1433
        %1541 = vmatpush.bf16.xpose.msra.mxu0 %v1430
        %1542 = vmatpush.bf16.xpose.msra.mxu0 %v1427
        %1543 = vmatpush.bf16.xpose.msra.mxu0 %v1424
        %1544 = vmatmul.bf16.gmra.mxu0 %v1352
        %v1545 = vpop.f32.mrf.mxu0
        %v1546 = vadd.f32 %v1127, %v1545
        %v1547 = vpop.f32.mrf.mxu0
        %v1548 = vadd.f32 %v1129, %v1547
        %1549 = vmatmul.bf16.gmra.mxu0 %v1355
        %v1550 = vpop.f32.mrf.mxu0
        %v1551 = vadd.f32 %v1131, %v1550
        %v1552 = vpop.f32.mrf.mxu0
        %v1553 = vadd.f32 %v1133, %v1552
        %1554 = vmatmul.bf16.gmra.mxu0 %v1358
        %v1555 = vpop.f32.mrf.mxu0
        %v1556 = vadd.f32 %v1135, %v1555
        %v1557 = vpop.f32.mrf.mxu0
        %v1558 = vadd.f32 %v1137, %v1557
        %1559 = vmatmul.bf16.gmra.mxu0 %v1361
        %v1560 = vpop.f32.mrf.mxu0
        %v1561 = vadd.f32 %v1139, %v1560
        %v1562 = vpop.f32.mrf.mxu0
        %v1563 = vadd.f32 %v1141, %v1562
        %1564 = vmatmul.bf16.gmra.mxu0 %v1364
        %v1565 = vpop.f32.mrf.mxu0
        %v1566 = vadd.f32 %v1143, %v1565
        %v1567 = vpop.f32.mrf.mxu0
        %v1568 = vadd.f32 %v1145, %v1567
        %1569 = vmatmul.bf16.gmra.mxu0 %v1367
        %v1570 = vpop.f32.mrf.mxu0
        %v1571 = vadd.f32 %v1147, %v1570
        %v1572 = vpop.f32.mrf.mxu0
        %v1573 = vadd.f32 %v1149, %v1572
        %1574 = vmatmul.bf16.gmra.mxu0 %v1370
        %v1575 = vpop.f32.mrf.mxu0
        %v1576 = vadd.f32 %v1151, %v1575
        %v1577 = vpop.f32.mrf.mxu0
        %v1578 = vadd.f32 %v1153, %v1577
        %1579 = vmatmul.bf16.gmra.mxu0 %v1373
        %v1580 = vpop.f32.mrf.mxu0
        %v1581 = vadd.f32 %v1155, %v1580
        %v1582 = vpop.f32.mrf.mxu0
        %v1583 = vadd.f32 %v1157, %v1582
        %1584 = vmatmul.bf16.gmra.mxu0 %v1376
        %v1585 = vpop.f32.mrf.mxu0
        %v1586 = vadd.f32 %v1159, %v1585
        %v1587 = vpop.f32.mrf.mxu0
        %v1588 = vadd.f32 %v1161, %v1587
        %1589 = vmatmul.bf16.gmra.mxu0 %v1379
        %v1590 = vpop.f32.mrf.mxu0
        %v1591 = vadd.f32 %v1163, %v1590
        %v1592 = vpop.f32.mrf.mxu0
        %v1593 = vadd.f32 %v1165, %v1592
        %1594 = vmatmul.bf16.gmra.mxu0 %v1382
        %v1595 = vpop.f32.mrf.mxu0
        %v1596 = vadd.f32 %v1167, %v1595
        %v1597 = vpop.f32.mrf.mxu0
        %v1598 = vadd.f32 %v1169, %v1597
        %1599 = vmatmul.bf16.gmra.mxu0 %v1385
        %v1600 = vpop.f32.mrf.mxu0
        %v1601 = vadd.f32 %v1171, %v1600
        %v1602 = vpop.f32.mrf.mxu0
        %v1603 = vadd.f32 %v1173, %v1602
        %1604 = vmatmul.bf16.gmra.mxu0 %v1388
        %v1605 = vpop.f32.mrf.mxu0
        %v1606 = vadd.f32 %v1175, %v1605
        %v1607 = vpop.f32.mrf.mxu0
        %v1608 = vadd.f32 %v1177, %v1607
        %1609 = vmatmul.bf16.gmra.mxu0 %v1391
        %v1610 = vpop.f32.mrf.mxu0
        %v1611 = vadd.f32 %v1179, %v1610
        %v1612 = vpop.f32.mrf.mxu0
        %v1613 = vadd.f32 %v1181, %v1612
        %1614 = vmatmul.bf16.gmra.mxu0 %v1394
        %v1615 = vpop.f32.mrf.mxu0
        %v1616 = vadd.f32 %v1183, %v1615
        %v1617 = vpop.f32.mrf.mxu0
        %v1618 = vadd.f32 %v1185, %v1617
        %1619 = vmatmul.bf16.gmra.mxu0 %v1397
        %v1620 = vpop.f32.mrf.mxu0
        %v1621 = vadd.f32 %v1187, %v1620
        %v1622 = vpop.f32.mrf.mxu0
        %v1623 = vadd.f32 %v1189, %v1622
        %1624 = vdwg.mxu0
        %v1625 = vmax.f32 %v1457, %v1546
        %1626 = vmax.xlane.f32.xlu0 %v1625
        %v1627 = vpop.xlane.xlu0 %1626
        %v1628 = vmax.f32 %v1459, %v1548
        %1629 = vmax.xlane.f32.xlu0 %v1628
        %v1630 = vpop.xlane.xlu0 %1629
        %v1631 = vmax.f32 %v1462, %v1551
        %1632 = vmax.xlane.f32.xlu0 %v1631
        %v1633 = vpop.xlane.xlu0 %1632
        %v1634 = vmax.f32 %v1464, %v1553
        %1635 = vmax.xlane.f32.xlu0 %v1634
        %v1636 = vpop.xlane.xlu0 %1635
        %v1637 = vmax.f32 %v1467, %v1556
        %1638 = vmax.xlane.f32.xlu0 %v1637
        %v1639 = vpop.xlane.xlu0 %1638
        %v1640 = vmax.f32 %v1469, %v1558
        %1641 = vmax.xlane.f32.xlu0 %v1640
        %v1642 = vpop.xlane.xlu0 %1641
        %v1643 = vmax.f32 %v1472, %v1561
        %1644 = vmax.xlane.f32.xlu0 %v1643
        %v1645 = vpop.xlane.xlu0 %1644
        %v1646 = vmax.f32 %v1474, %v1563
        %1647 = vmax.xlane.f32.xlu0 %v1646
        %v1648 = vpop.xlane.xlu0 %1647
        %v1649 = vmax.f32 %v1477, %v1566
        %1650 = vmax.xlane.f32.xlu0 %v1649
        %v1651 = vpop.xlane.xlu0 %1650
        %v1652 = vmax.f32 %v1479, %v1568
        %1653 = vmax.xlane.f32.xlu0 %v1652
        %v1654 = vpop.xlane.xlu0 %1653
        %v1655 = vmax.f32 %v1482, %v1571
        %1656 = vmax.xlane.f32.xlu0 %v1655
        %v1657 = vpop.xlane.xlu0 %1656
        %v1658 = vmax.f32 %v1484, %v1573
        %1659 = vmax.xlane.f32.xlu0 %v1658
        %v1660 = vpop.xlane.xlu0 %1659
        %v1661 = vmax.f32 %v1487, %v1576
        %1662 = vmax.xlane.f32.xlu0 %v1661
        %v1663 = vpop.xlane.xlu0 %1662
        %v1664 = vmax.f32 %v1489, %v1578
        %1665 = vmax.xlane.f32.xlu0 %v1664
        %v1666 = vpop.xlane.xlu0 %1665
        %v1667 = vmax.f32 %v1492, %v1581
        %1668 = vmax.xlane.f32.xlu0 %v1667
        %v1669 = vpop.xlane.xlu0 %1668
        %v1670 = vmax.f32 %v1494, %v1583
        %1671 = vmax.xlane.f32.xlu0 %v1670
        %v1672 = vpop.xlane.xlu0 %1671
        %v1673 = vmax.f32 %v1497, %v1586
        %1674 = vmax.xlane.f32.xlu0 %v1673
        %v1675 = vpop.xlane.xlu0 %1674
        %v1676 = vmax.f32 %v1499, %v1588
        %1677 = vmax.xlane.f32.xlu0 %v1676
        %v1678 = vpop.xlane.xlu0 %1677
        %v1679 = vmax.f32 %v1502, %v1591
        %1680 = vmax.xlane.f32.xlu0 %v1679
        %v1681 = vpop.xlane.xlu0 %1680
        %v1682 = vmax.f32 %v1504, %v1593
        %1683 = vmax.xlane.f32.xlu0 %v1682
        %v1684 = vpop.xlane.xlu0 %1683
        %v1685 = vmax.f32 %v1507, %v1596
        %1686 = vmax.xlane.f32.xlu0 %v1685
        %v1687 = vpop.xlane.xlu0 %1686
        %v1688 = vmax.f32 %v1509, %v1598
        %1689 = vmax.xlane.f32.xlu0 %v1688
        %v1690 = vpop.xlane.xlu0 %1689
        %v1691 = vmax.f32 %v1512, %v1601
        %1692 = vmax.xlane.f32.xlu0 %v1691
        %v1693 = vpop.xlane.xlu0 %1692
        %v1694 = vmax.f32 %v1514, %v1603
        %1695 = vmax.xlane.f32.xlu0 %v1694
        %v1696 = vpop.xlane.xlu0 %1695
        %v1697 = vmax.f32 %v1517, %v1606
        %1698 = vmax.xlane.f32.xlu0 %v1697
        %v1699 = vpop.xlane.xlu0 %1698
        %v1700 = vmax.f32 %v1519, %v1608
        %1701 = vmax.xlane.f32.xlu0 %v1700
        %v1702 = vpop.xlane.xlu0 %1701
        %v1703 = vmax.f32 %v1522, %v1611
        %1704 = vmax.xlane.f32.xlu0 %v1703
        %v1705 = vpop.xlane.xlu0 %1704
        %v1706 = vmax.f32 %v1524, %v1613
        %1707 = vmax.xlane.f32.xlu0 %v1706
        %v1708 = vpop.xlane.xlu0 %1707
        %v1709 = vmax.f32 %v1527, %v1616
        %1710 = vmax.xlane.f32.xlu0 %v1709
        %v1711 = vpop.xlane.xlu0 %1710
        %v1712 = vmax.f32 %v1529, %v1618
        %1713 = vmax.xlane.f32.xlu0 %v1712
        %v1714 = vpop.xlane.xlu0 %1713
        %v1715 = vmax.f32 %v1532, %v1621
        %1716 = vmax.xlane.f32.xlu0 %v1715
        %v1717 = vpop.xlane.xlu0 %1716
        %v1718 = vmax.f32 %v1534, %v1623
        %1719 = vmax.xlane.f32.xlu0 %v1718
        %v1720 = vpop.xlane.xlu0 %1719
        %v1721 = vsub.f32 %v1457, %v1627
        %v1722 = vsub.f32 %v1546, %v1627
        %v1723 = vsub.f32 %v1459, %v1630
        %v1724 = vsub.f32 %v1548, %v1630
        %v1725 = vsub.f32 %v1462, %v1633
        %v1726 = vsub.f32 %v1551, %v1633
        %v1727 = vsub.f32 %v1464, %v1636
        %v1728 = vsub.f32 %v1553, %v1636
        %v1729 = vsub.f32 %v1467, %v1639
        %v1730 = vsub.f32 %v1556, %v1639
        %v1731 = vsub.f32 %v1469, %v1642
        %v1732 = vsub.f32 %v1558, %v1642
        %v1733 = vsub.f32 %v1472, %v1645
        %v1734 = vsub.f32 %v1561, %v1645
        %v1735 = vsub.f32 %v1474, %v1648
        %v1736 = vsub.f32 %v1563, %v1648
        %v1737 = vsub.f32 %v1477, %v1651
        %v1738 = vsub.f32 %v1566, %v1651
        %v1739 = vsub.f32 %v1479, %v1654
        %v1740 = vsub.f32 %v1568, %v1654
        %v1741 = vsub.f32 %v1482, %v1657
        %v1742 = vsub.f32 %v1571, %v1657
        %v1743 = vsub.f32 %v1484, %v1660
        %v1744 = vsub.f32 %v1573, %v1660
        %v1745 = vsub.f32 %v1487, %v1663
        %v1746 = vsub.f32 %v1576, %v1663
        %v1747 = vsub.f32 %v1489, %v1666
        %v1748 = vsub.f32 %v1578, %v1666
        %v1749 = vsub.f32 %v1492, %v1669
        %v1750 = vsub.f32 %v1581, %v1669
        %v1751 = vsub.f32 %v1494, %v1672
        %v1752 = vsub.f32 %v1583, %v1672
        %v1753 = vsub.f32 %v1497, %v1675
        %v1754 = vsub.f32 %v1586, %v1675
        %v1755 = vsub.f32 %v1499, %v1678
        %v1756 = vsub.f32 %v1588, %v1678
        %v1757 = vsub.f32 %v1502, %v1681
        %v1758 = vsub.f32 %v1591, %v1681
        %v1759 = vsub.f32 %v1504, %v1684
        %v1760 = vsub.f32 %v1593, %v1684
        %v1761 = vsub.f32 %v1507, %v1687
        %v1762 = vsub.f32 %v1596, %v1687
        %v1763 = vsub.f32 %v1509, %v1690
        %v1764 = vsub.f32 %v1598, %v1690
        %v1765 = vsub.f32 %v1512, %v1693
        %v1766 = vsub.f32 %v1601, %v1693
        %v1767 = vsub.f32 %v1514, %v1696
        %v1768 = vsub.f32 %v1603, %v1696
        %v1769 = vsub.f32 %v1517, %v1699
        %v1770 = vsub.f32 %v1606, %v1699
        %v1771 = vsub.f32 %v1519, %v1702
        %v1772 = vsub.f32 %v1608, %v1702
        %v1773 = vsub.f32 %v1522, %v1705
        %v1774 = vsub.f32 %v1611, %v1705
        %v1775 = vsub.f32 %v1524, %v1708
        %v1776 = vsub.f32 %v1613, %v1708
        %v1777 = vsub.f32 %v1527, %v1711
        %v1778 = vsub.f32 %v1616, %v1711
        %v1779 = vsub.f32 %v1529, %v1714
        %v1780 = vsub.f32 %v1618, %v1714
        %v1781 = vsub.f32 %v1532, %v1717
        %v1782 = vsub.f32 %v1621, %v1717
        %v1783 = vsub.f32 %v1534, %v1720
        %v1784 = vsub.f32 %v1623, %v1720
        %v1785 = vmul.f32 %v1721, 1.442695
        %v1786 = vpow.pop %v1785
        %v1787 = vmul.f32 %v1722, 1.442695
        %v1788 = vpow.pop %v1787
        %v1789 = vmul.f32 %v1723, 1.442695
        %v1790 = vpow.pop %v1789
        %v1791 = vmul.f32 %v1724, 1.442695
        %v1792 = vpow.pop %v1791
        %v1793 = vmul.f32 %v1725, 1.442695
        %v1794 = vpow.pop %v1793
        %v1795 = vmul.f32 %v1726, 1.442695
        %v1796 = vpow.pop %v1795
        %v1797 = vmul.f32 %v1727, 1.442695
        %v1798 = vpow.pop %v1797
        %v1799 = vmul.f32 %v1728, 1.442695
        %v1800 = vpow.pop %v1799
        %v1801 = vmul.f32 %v1729, 1.442695
        %v1802 = vpow.pop %v1801
        %v1803 = vmul.f32 %v1730, 1.442695
        %v1804 = vpow.pop %v1803
        %v1805 = vmul.f32 %v1731, 1.442695
        %v1806 = vpow.pop %v1805
        %v1807 = vmul.f32 %v1732, 1.442695
        %v1808 = vpow.pop %v1807
        %v1809 = vmul.f32 %v1733, 1.442695
        %v1810 = vpow.pop %v1809
        %v1811 = vmul.f32 %v1734, 1.442695
        %v1812 = vpow.pop %v1811
        %v1813 = vmul.f32 %v1735, 1.442695
        %v1814 = vpow.pop %v1813
        %v1815 = vmul.f32 %v1736, 1.442695
        %v1816 = vpow.pop %v1815
        %v1817 = vmul.f32 %v1737, 1.442695
        %v1818 = vpow.pop %v1817
        %v1819 = vmul.f32 %v1738, 1.442695
        %v1820 = vpow.pop %v1819
        %v1821 = vmul.f32 %v1739, 1.442695
        %v1822 = vpow.pop %v1821
        %v1823 = vmul.f32 %v1740, 1.442695
        %v1824 = vpow.pop %v1823
        %v1825 = vmul.f32 %v1741, 1.442695
        %v1826 = vpow.pop %v1825
        %v1827 = vmul.f32 %v1742, 1.442695
        %v1828 = vpow.pop %v1827
        %v1829 = vmul.f32 %v1743, 1.442695
        %v1830 = vpow.pop %v1829
        %v1831 = vmul.f32 %v1744, 1.442695
        %v1832 = vpow.pop %v1831
        %v1833 = vmul.f32 %v1745, 1.442695
        %v1834 = vpow.pop %v1833
        %v1835 = vmul.f32 %v1746, 1.442695
        %v1836 = vpow.pop %v1835
        %v1837 = vmul.f32 %v1747, 1.442695
        %v1838 = vpow.pop %v1837
        %v1839 = vmul.f32 %v1748, 1.442695
        %v1840 = vpow.pop %v1839
        %v1841 = vmul.f32 %v1749, 1.442695
        %v1842 = vpow.pop %v1841
        %v1843 = vmul.f32 %v1750, 1.442695
        %v1844 = vpow.pop %v1843
        %v1845 = vmul.f32 %v1751, 1.442695
        %v1846 = vpow.pop %v1845
        %v1847 = vmul.f32 %v1752, 1.442695
        %v1848 = vpow.pop %v1847
        %v1849 = vmul.f32 %v1753, 1.442695
        %v1850 = vpow.pop %v1849
        %v1851 = vmul.f32 %v1754, 1.442695
        %v1852 = vpow.pop %v1851
        %v1853 = vmul.f32 %v1755, 1.442695
        %v1854 = vpow.pop %v1853
        %v1855 = vmul.f32 %v1756, 1.442695
        %v1856 = vpow.pop %v1855
        %v1857 = vmul.f32 %v1757, 1.442695
        %v1858 = vpow.pop %v1857
        %v1859 = vmul.f32 %v1758, 1.442695
        %v1860 = vpow.pop %v1859
        %v1861 = vmul.f32 %v1759, 1.442695
        %v1862 = vpow.pop %v1861
        %v1863 = vmul.f32 %v1760, 1.442695
        %v1864 = vpow.pop %v1863
        %v1865 = vmul.f32 %v1761, 1.442695
        %v1866 = vpow.pop %v1865
        %v1867 = vmul.f32 %v1762, 1.442695
        %v1868 = vpow.pop %v1867
        %v1869 = vmul.f32 %v1763, 1.442695
        %v1870 = vpow.pop %v1869
        %v1871 = vmul.f32 %v1764, 1.442695
        %v1872 = vpow.pop %v1871
        %v1873 = vmul.f32 %v1765, 1.442695
        %v1874 = vpow.pop %v1873
        %v1875 = vmul.f32 %v1766, 1.442695
        %v1876 = vpow.pop %v1875
        %v1877 = vmul.f32 %v1767, 1.442695
        %v1878 = vpow.pop %v1877
        %v1879 = vmul.f32 %v1768, 1.442695
        %v1880 = vpow.pop %v1879
        %v1881 = vmul.f32 %v1769, 1.442695
        %v1882 = vpow.pop %v1881
        %v1883 = vmul.f32 %v1770, 1.442695
        %v1884 = vpow.pop %v1883
        %v1885 = vmul.f32 %v1771, 1.442695
        %v1886 = vpow.pop %v1885
        %v1887 = vmul.f32 %v1772, 1.442695
        %v1888 = vpow.pop %v1887
        %v1889 = vmul.f32 %v1773, 1.442695
        %v1890 = vpow.pop %v1889
        %v1891 = vmul.f32 %v1774, 1.442695
        %v1892 = vpow.pop %v1891
        %v1893 = vmul.f32 %v1775, 1.442695
        %v1894 = vpow.pop %v1893
        %v1895 = vmul.f32 %v1776, 1.442695
        %v1896 = vpow.pop %v1895
        %v1897 = vmul.f32 %v1777, 1.442695
        %v1898 = vpow.pop %v1897
        %v1899 = vmul.f32 %v1778, 1.442695
        %v1900 = vpow.pop %v1899
        %v1901 = vmul.f32 %v1779, 1.442695
        %v1902 = vpow.pop %v1901
        %v1903 = vmul.f32 %v1780, 1.442695
        %v1904 = vpow.pop %v1903
        %v1905 = vmul.f32 %v1781, 1.442695
        %v1906 = vpow.pop %v1905
        %v1907 = vmul.f32 %v1782, 1.442695
        %v1908 = vpow.pop %v1907
        %v1909 = vmul.f32 %v1783, 1.442695
        %v1910 = vpow.pop %v1909
        %v1911 = vmul.f32 %v1784, 1.442695
        %v1912 = vpow.pop %v1911
        %v1913 = vadd.f32 %v1786, %v1788
        %1914 = vadd.xlane.f32.xlu0 %v1913
        %v1915 = vpop.xlane.xlu0 %1914
        %v1916 = vadd.f32 %v1790, %v1792
        %1917 = vadd.xlane.f32.xlu0 %v1916
        %v1918 = vpop.xlane.xlu0 %1917
        %v1919 = vadd.f32 %v1794, %v1796
        %1920 = vadd.xlane.f32.xlu0 %v1919
        %v1921 = vpop.xlane.xlu0 %1920
        %v1922 = vadd.f32 %v1798, %v1800
        %1923 = vadd.xlane.f32.xlu0 %v1922
        %v1924 = vpop.xlane.xlu0 %1923
        %v1925 = vadd.f32 %v1802, %v1804
        %1926 = vadd.xlane.f32.xlu0 %v1925
        %v1927 = vpop.xlane.xlu0 %1926
        %v1928 = vadd.f32 %v1806, %v1808
        %1929 = vadd.xlane.f32.xlu0 %v1928
        %v1930 = vpop.xlane.xlu0 %1929
        %v1931 = vadd.f32 %v1810, %v1812
        %1932 = vadd.xlane.f32.xlu0 %v1931
        %v1933 = vpop.xlane.xlu0 %1932
        %v1934 = vadd.f32 %v1814, %v1816
        %1935 = vadd.xlane.f32.xlu0 %v1934
        %v1936 = vpop.xlane.xlu0 %1935
        %v1937 = vadd.f32 %v1818, %v1820
        %1938 = vadd.xlane.f32.xlu0 %v1937
        %v1939 = vpop.xlane.xlu0 %1938
        %v1940 = vadd.f32 %v1822, %v1824
        %1941 = vadd.xlane.f32.xlu0 %v1940
        %v1942 = vpop.xlane.xlu0 %1941
        %v1943 = vadd.f32 %v1826, %v1828
        %1944 = vadd.xlane.f32.xlu0 %v1943
        %v1945 = vpop.xlane.xlu0 %1944
        %v1946 = vadd.f32 %v1830, %v1832
        %1947 = vadd.xlane.f32.xlu0 %v1946
        %v1948 = vpop.xlane.xlu0 %1947
        %v1949 = vadd.f32 %v1834, %v1836
        %1950 = vadd.xlane.f32.xlu0 %v1949
        %v1951 = vpop.xlane.xlu0 %1950
        %v1952 = vadd.f32 %v1838, %v1840
        %1953 = vadd.xlane.f32.xlu0 %v1952
        %v1954 = vpop.xlane.xlu0 %1953
        %v1955 = vadd.f32 %v1842, %v1844
        %1956 = vadd.xlane.f32.xlu0 %v1955
        %v1957 = vpop.xlane.xlu0 %1956
        %v1958 = vadd.f32 %v1846, %v1848
        %1959 = vadd.xlane.f32.xlu0 %v1958
        %v1960 = vpop.xlane.xlu0 %1959
        %v1961 = vadd.f32 %v1850, %v1852
        %1962 = vadd.xlane.f32.xlu0 %v1961
        %v1963 = vpop.xlane.xlu0 %1962
        %v1964 = vadd.f32 %v1854, %v1856
        %1965 = vadd.xlane.f32.xlu0 %v1964
        %v1966 = vpop.xlane.xlu0 %1965
        %v1967 = vadd.f32 %v1858, %v1860
        %1968 = vadd.xlane.f32.xlu0 %v1967
        %v1969 = vpop.xlane.xlu0 %1968
        %v1970 = vadd.f32 %v1862, %v1864
        %1971 = vadd.xlane.f32.xlu0 %v1970
        %v1972 = vpop.xlane.xlu0 %1971
        %v1973 = vadd.f32 %v1866, %v1868
        %1974 = vadd.xlane.f32.xlu0 %v1973
        %v1975 = vpop.xlane.xlu0 %1974
        %v1976 = vadd.f32 %v1870, %v1872
        %1977 = vadd.xlane.f32.xlu0 %v1976
        %v1978 = vpop.xlane.xlu0 %1977
        %v1979 = vadd.f32 %v1874, %v1876
        %1980 = vadd.xlane.f32.xlu0 %v1979
        %v1981 = vpop.xlane.xlu0 %1980
        %v1982 = vadd.f32 %v1878, %v1880
        %1983 = vadd.xlane.f32.xlu0 %v1982
        %v1984 = vpop.xlane.xlu0 %1983
        %v1985 = vadd.f32 %v1882, %v1884
        %1986 = vadd.xlane.f32.xlu0 %v1985
        %v1987 = vpop.xlane.xlu0 %1986
        %v1988 = vadd.f32 %v1886, %v1888
        %1989 = vadd.xlane.f32.xlu0 %v1988
        %v1990 = vpop.xlane.xlu0 %1989
        %v1991 = vadd.f32 %v1890, %v1892
        %1992 = vadd.xlane.f32.xlu0 %v1991
        %v1993 = vpop.xlane.xlu0 %1992
        %v1994 = vadd.f32 %v1894, %v1896
        %1995 = vadd.xlane.f32.xlu0 %v1994
        %v1996 = vpop.xlane.xlu0 %1995
        %v1997 = vadd.f32 %v1898, %v1900
        %1998 = vadd.xlane.f32.xlu0 %v1997
        %v1999 = vpop.xlane.xlu0 %1998
        %v2000 = vadd.f32 %v1902, %v1904
        %2001 = vadd.xlane.f32.xlu0 %v2000
        %v2002 = vpop.xlane.xlu0 %2001
        %v2003 = vadd.f32 %v1906, %v1908
        %2004 = vadd.xlane.f32.xlu0 %v2003
        %v2005 = vpop.xlane.xlu0 %2004
        %v2006 = vadd.f32 %v1910, %v1912
        %2007 = vadd.xlane.f32.xlu0 %v2006
        %v2008 = vpop.xlane.xlu0 %2007
        %v2009 = vrcp.pop %v1915
        %v2010 = vrcp.pop %v1918
        %v2011 = vrcp.pop %v1921
        %v2012 = vrcp.pop %v1924
        %v2013 = vrcp.pop %v1927
        %v2014 = vrcp.pop %v1930
        %v2015 = vrcp.pop %v1933
        %v2016 = vrcp.pop %v1936
        %v2017 = vrcp.pop %v1939
        %v2018 = vrcp.pop %v1942
        %v2019 = vrcp.pop %v1945
        %v2020 = vrcp.pop %v1948
        %v2021 = vrcp.pop %v1951
        %v2022 = vrcp.pop %v1954
        %v2023 = vrcp.pop %v1957
        %v2024 = vrcp.pop %v1960
        %v2025 = vrcp.pop %v1963
        %v2026 = vrcp.pop %v1966
        %v2027 = vrcp.pop %v1969
        %v2028 = vrcp.pop %v1972
        %v2029 = vrcp.pop %v1975
        %v2030 = vrcp.pop %v1978
        %v2031 = vrcp.pop %v1981
        %v2032 = vrcp.pop %v1984
        %v2033 = vrcp.pop %v1987
        %v2034 = vrcp.pop %v1990
        %v2035 = vrcp.pop %v1993
        %v2036 = vrcp.pop %v1996
        %v2037 = vrcp.pop %v1999
        %v2038 = vrcp.pop %v2002
        %v2039 = vrcp.pop %v2005
        %v2040 = vrcp.pop %v2008
        %v2041 = vmul.f32 %v1786, %v2009
        %v2042 = vmul.f32 %v1788, %v2009
        %v2043 = vmul.f32 %v1790, %v2010
        %v2044 = vmul.f32 %v1792, %v2010
        %v2045 = vmul.f32 %v1794, %v2011
        %v2046 = vmul.f32 %v1796, %v2011
        %v2047 = vmul.f32 %v1798, %v2012
        %v2048 = vmul.f32 %v1800, %v2012
        %v2049 = vmul.f32 %v1802, %v2013
        %v2050 = vmul.f32 %v1804, %v2013
        %v2051 = vmul.f32 %v1806, %v2014
        %v2052 = vmul.f32 %v1808, %v2014
        %v2053 = vmul.f32 %v1810, %v2015
        %v2054 = vmul.f32 %v1812, %v2015
        %v2055 = vmul.f32 %v1814, %v2016
        %v2056 = vmul.f32 %v1816, %v2016
        %v2057 = vmul.f32 %v1818, %v2017
        %v2058 = vmul.f32 %v1820, %v2017
        %v2059 = vmul.f32 %v1822, %v2018
        %v2060 = vmul.f32 %v1824, %v2018
        %v2061 = vmul.f32 %v1826, %v2019
        %v2062 = vmul.f32 %v1828, %v2019
        %v2063 = vmul.f32 %v1830, %v2020
        %v2064 = vmul.f32 %v1832, %v2020
        %v2065 = vmul.f32 %v1834, %v2021
        %v2066 = vmul.f32 %v1836, %v2021
        %v2067 = vmul.f32 %v1838, %v2022
        %v2068 = vmul.f32 %v1840, %v2022
        %v2069 = vmul.f32 %v1842, %v2023
        %v2070 = vmul.f32 %v1844, %v2023
        %v2071 = vmul.f32 %v1846, %v2024
        %v2072 = vmul.f32 %v1848, %v2024
        %v2073 = vmul.f32 %v1850, %v2025
        %v2074 = vmul.f32 %v1852, %v2025
        %v2075 = vmul.f32 %v1854, %v2026
        %v2076 = vmul.f32 %v1856, %v2026
        %v2077 = vmul.f32 %v1858, %v2027
        %v2078 = vmul.f32 %v1860, %v2027
        %v2079 = vmul.f32 %v1862, %v2028
        %v2080 = vmul.f32 %v1864, %v2028
        %v2081 = vmul.f32 %v1866, %v2029
        %v2082 = vmul.f32 %v1868, %v2029
        %v2083 = vmul.f32 %v1870, %v2030
        %v2084 = vmul.f32 %v1872, %v2030
        %v2085 = vmul.f32 %v1874, %v2031
        %v2086 = vmul.f32 %v1876, %v2031
        %v2087 = vmul.f32 %v1878, %v2032
        %v2088 = vmul.f32 %v1880, %v2032
        %v2089 = vmul.f32 %v1882, %v2033
        %v2090 = vmul.f32 %v1884, %v2033
        %v2091 = vmul.f32 %v1886, %v2034
        %v2092 = vmul.f32 %v1888, %v2034
        %v2093 = vmul.f32 %v1890, %v2035
        %v2094 = vmul.f32 %v1892, %v2035
        %v2095 = vmul.f32 %v1894, %v2036
        %v2096 = vmul.f32 %v1896, %v2036
        %v2097 = vmul.f32 %v1898, %v2037
        %v2098 = vmul.f32 %v1900, %v2037
        %v2099 = vmul.f32 %v1902, %v2038
        %v2100 = vmul.f32 %v1904, %v2038
        %v2101 = vmul.f32 %v1906, %v2039
        %v2102 = vmul.f32 %v1908, %v2039
        %v2103 = vmul.f32 %v1910, %v2040
        %v2104 = vmul.f32 %v1912, %v2040
        %v2105 = vpack.c.bf16 %v2043, %v2041
        %v2106 = vpack.c.bf16 %v2044, %v2042
        %v2107 = vpack.c.bf16 %v2047, %v2045
        %v2108 = vpack.c.bf16 %v2048, %v2046
        %v2109 = vpack.c.bf16 %v2051, %v2049
        %v2110 = vpack.c.bf16 %v2052, %v2050
        %v2111 = vpack.c.bf16 %v2055, %v2053
        %v2112 = vpack.c.bf16 %v2056, %v2054
        %v2113 = vpack.c.bf16 %v2059, %v2057
        %v2114 = vpack.c.bf16 %v2060, %v2058
        %v2115 = vpack.c.bf16 %v2063, %v2061
        %v2116 = vpack.c.bf16 %v2064, %v2062
        %v2117 = vpack.c.bf16 %v2067, %v2065
        %v2118 = vpack.c.bf16 %v2068, %v2066
        %v2119 = vpack.c.bf16 %v2071, %v2069
        %v2120 = vpack.c.bf16 %v2072, %v2070
        %v2121 = vpack.c.bf16 %v2075, %v2073
        %v2122 = vpack.c.bf16 %v2076, %v2074
        %v2123 = vpack.c.bf16 %v2079, %v2077
        %v2124 = vpack.c.bf16 %v2080, %v2078
        %v2125 = vpack.c.bf16 %v2083, %v2081
        %v2126 = vpack.c.bf16 %v2084, %v2082
        %v2127 = vpack.c.bf16 %v2087, %v2085
        %v2128 = vpack.c.bf16 %v2088, %v2086
        %v2129 = vpack.c.bf16 %v2091, %v2089
        %v2130 = vpack.c.bf16 %v2092, %v2090
        %v2131 = vpack.c.bf16 %v2095, %v2093
        %v2132 = vpack.c.bf16 %v2096, %v2094
        %v2133 = vpack.c.bf16 %v2099, %v2097
        %v2134 = vpack.c.bf16 %v2100, %v2098
        %v2135 = vpack.c.bf16 %v2103, %v2101
        %v2136 = vpack.c.bf16 %v2104, %v2102
        %v2169 = vunpack.c.l.b16 %v1094
        %v2170 = vunpack.c.l.b16 %v1095
        %v2171 = vunpack.c.l.b16 %v1096
        %v2172 = vunpack.c.l.b16 %v1097
        %v2173 = vunpack.c.l.b16 %v1098
        %v2174 = vunpack.c.l.b16 %v1099
        %v2175 = vunpack.c.l.b16 %v1100
        %v2176 = vunpack.c.l.b16 %v1101
        %v2177 = vunpack.c.l.b16 %v1102
        %v2178 = vunpack.c.l.b16 %v1103
        %v2179 = vunpack.c.l.b16 %v1104
        %v2180 = vunpack.c.l.b16 %v1105
        %v2181 = vunpack.c.l.b16 %v1106
        %v2182 = vunpack.c.l.b16 %v1107
        %v2183 = vunpack.c.l.b16 %v1108
        %v2184 = vunpack.c.l.b16 %v1109
        %v2185 = vunpack.c.l.b16 %v1110
        %v2186 = vunpack.c.l.b16 %v1111
        %v2187 = vunpack.c.l.b16 %v1112
        %v2188 = vunpack.c.l.b16 %v1113
        %v2189 = vunpack.c.l.b16 %v1114
        %v2190 = vunpack.c.l.b16 %v1115
        %v2191 = vunpack.c.l.b16 %v1116
        %v2192 = vunpack.c.l.b16 %v1117
        %v2193 = vunpack.c.l.b16 %v1118
        %v2194 = vunpack.c.l.b16 %v1119
        %v2195 = vunpack.c.l.b16 %v1120
        %v2196 = vunpack.c.l.b16 %v1121
        %v2197 = vunpack.c.l.b16 %v1122
        %v2198 = vunpack.c.l.b16 %v1123
        %v2199 = vunpack.c.l.b16 %v1124
        %v2200 = vunpack.c.l.b16 %v1125
        %v2201 = vpack.c.b16 %v2170, %v2169
        %v2202 = vpack.c.b16 %v2172, %v2171
        %v2203 = vpack.c.b16 %v2174, %v2173
        %v2204 = vpack.c.b16 %v2176, %v2175
        %v2205 = vpack.c.b16 %v2178, %v2177
        %v2206 = vpack.c.b16 %v2180, %v2179
        %v2207 = vpack.c.b16 %v2182, %v2181
        %v2208 = vpack.c.b16 %v2184, %v2183
        %v2209 = vpack.c.b16 %v2186, %v2185
        %v2210 = vpack.c.b16 %v2188, %v2187
        %v2211 = vpack.c.b16 %v2190, %v2189
        %v2212 = vpack.c.b16 %v2192, %v2191
        %v2213 = vpack.c.b16 %v2194, %v2193
        %v2214 = vpack.c.b16 %v2196, %v2195
        %v2215 = vpack.c.b16 %v2198, %v2197
        %v2216 = vpack.c.b16 %v2200, %v2199
        %2233 = vmatpush.bf16.msra.mxu0 %v2208
        %2234 = vmatpush.bf16.msra.mxu0 %v2207
        %2235 = vmatpush.bf16.msra.mxu0 %v2206
        %2236 = vmatpush.bf16.msra.mxu0 %v2205
        %2237 = vmatpush.bf16.msra.mxu0 %v2204
        %2238 = vmatpush.bf16.msra.mxu0 %v2203
        %2239 = vmatpush.bf16.msra.mxu0 %v2202
        %2240 = vmatpush.bf16.msra.mxu0 %v2201
        %2241 = vmatmul.bf16.gmra.mxu0 %v2105
        %v2242 = vpop.f32.mrf.mxu0
        %v2243 = vadd.f32 0.0, %v2242
        %v2244 = vpop.f32.mrf.mxu0
        %v2245 = vadd.f32 0.0, %v2244
        %2246 = vmatmul.bf16.gmra.mxu0 %v2107
        %v2247 = vpop.f32.mrf.mxu0
        %v2248 = vadd.f32 0.0, %v2247
        %v2249 = vpop.f32.mrf.mxu0
        %v2250 = vadd.f32 0.0, %v2249
        %2251 = vmatmul.bf16.gmra.mxu0 %v2109
        %v2252 = vpop.f32.mrf.mxu0
        %v2253 = vadd.f32 0.0, %v2252
        %v2254 = vpop.f32.mrf.mxu0
        %v2255 = vadd.f32 0.0, %v2254
        %2256 = vmatmul.bf16.gmra.mxu0 %v2111
        %v2257 = vpop.f32.mrf.mxu0
        %v2258 = vadd.f32 0.0, %v2257
        %v2259 = vpop.f32.mrf.mxu0
        %v2260 = vadd.f32 0.0, %v2259
        %2261 = vmatmul.bf16.gmra.mxu0 %v2113
        %v2262 = vpop.f32.mrf.mxu0
        %v2263 = vadd.f32 0.0, %v2262
        %v2264 = vpop.f32.mrf.mxu0
        %v2265 = vadd.f32 0.0, %v2264
        %2266 = vmatmul.bf16.gmra.mxu0 %v2115
        %v2267 = vpop.f32.mrf.mxu0
        %v2268 = vadd.f32 0.0, %v2267
        %v2269 = vpop.f32.mrf.mxu0
        %v2270 = vadd.f32 0.0, %v2269
        %2271 = vmatmul.bf16.gmra.mxu0 %v2117
        %v2272 = vpop.f32.mrf.mxu0
        %v2273 = vadd.f32 0.0, %v2272
        %v2274 = vpop.f32.mrf.mxu0
        %v2275 = vadd.f32 0.0, %v2274
        %2276 = vmatmul.bf16.gmra.mxu0 %v2119
        %v2277 = vpop.f32.mrf.mxu0
        %v2278 = vadd.f32 0.0, %v2277
        %v2279 = vpop.f32.mrf.mxu0
        %v2280 = vadd.f32 0.0, %v2279
        %2281 = vmatmul.bf16.gmra.mxu0 %v2121
        %v2282 = vpop.f32.mrf.mxu0
        %v2283 = vadd.f32 0.0, %v2282
        %v2284 = vpop.f32.mrf.mxu0
        %v2285 = vadd.f32 0.0, %v2284
        %2286 = vmatmul.bf16.gmra.mxu0 %v2123
        %v2287 = vpop.f32.mrf.mxu0
        %v2288 = vadd.f32 0.0, %v2287
        %v2289 = vpop.f32.mrf.mxu0
        %v2290 = vadd.f32 0.0, %v2289
        %2291 = vmatmul.bf16.gmra.mxu0 %v2125
        %v2292 = vpop.f32.mrf.mxu0
        %v2293 = vadd.f32 0.0, %v2292
        %v2294 = vpop.f32.mrf.mxu0
        %v2295 = vadd.f32 0.0, %v2294
        %2296 = vmatmul.bf16.gmra.mxu0 %v2127
        %v2297 = vpop.f32.mrf.mxu0
        %v2298 = vadd.f32 0.0, %v2297
        %v2299 = vpop.f32.mrf.mxu0
        %v2300 = vadd.f32 0.0, %v2299
        %2301 = vmatmul.bf16.gmra.mxu0 %v2129
        %v2302 = vpop.f32.mrf.mxu0
        %v2303 = vadd.f32 0.0, %v2302
        %v2304 = vpop.f32.mrf.mxu0
        %v2305 = vadd.f32 0.0, %v2304
        %2306 = vmatmul.bf16.gmra.mxu0 %v2131
        %v2307 = vpop.f32.mrf.mxu0
        %v2308 = vadd.f32 0.0, %v2307
        %v2309 = vpop.f32.mrf.mxu0
        %v2310 = vadd.f32 0.0, %v2309
        %2311 = vmatmul.bf16.gmra.mxu0 %v2133
        %v2312 = vpop.f32.mrf.mxu0
        %v2313 = vadd.f32 0.0, %v2312
        %v2314 = vpop.f32.mrf.mxu0
        %v2315 = vadd.f32 0.0, %v2314
        %2316 = vmatmul.bf16.gmra.mxu0 %v2135
        %v2317 = vpop.f32.mrf.mxu0
        %v2318 = vadd.f32 0.0, %v2317
        %v2319 = vpop.f32.mrf.mxu0
        %v2320 = vadd.f32 0.0, %v2319
        %2321 = vdwg.mxu0
        %2322 = vmatpush.bf16.msra.mxu0 %v2216
        %2323 = vmatpush.bf16.msra.mxu0 %v2215
        %2324 = vmatpush.bf16.msra.mxu0 %v2214
        %2325 = vmatpush.bf16.msra.mxu0 %v2213
        %2326 = vmatpush.bf16.msra.mxu0 %v2212
        %2327 = vmatpush.bf16.msra.mxu0 %v2211
        %2328 = vmatpush.bf16.msra.mxu0 %v2210
        %2329 = vmatpush.bf16.msra.mxu0 %v2209
        %2330 = vmatmul.bf16.gmra.mxu0 %v2106
        %v2331 = vpop.f32.mrf.mxu0
        %v2332 = vadd.f32 %v2243, %v2331
        %v2333 = vpop.f32.mrf.mxu0
        %v2334 = vadd.f32 %v2245, %v2333
        %2335 = vmatmul.bf16.gmra.mxu0 %v2108
        %v2336 = vpop.f32.mrf.mxu0
        %v2337 = vadd.f32 %v2248, %v2336
        %v2338 = vpop.f32.mrf.mxu0
        %v2339 = vadd.f32 %v2250, %v2338
        %2340 = vmatmul.bf16.gmra.mxu0 %v2110
        %v2341 = vpop.f32.mrf.mxu0
        %v2342 = vadd.f32 %v2253, %v2341
        %v2343 = vpop.f32.mrf.mxu0
        %v2344 = vadd.f32 %v2255, %v2343
        %2345 = vmatmul.bf16.gmra.mxu0 %v2112
        %v2346 = vpop.f32.mrf.mxu0
        %v2347 = vadd.f32 %v2258, %v2346
        %v2348 = vpop.f32.mrf.mxu0
        %v2349 = vadd.f32 %v2260, %v2348
        %2350 = vmatmul.bf16.gmra.mxu0 %v2114
        %v2351 = vpop.f32.mrf.mxu0
        %v2352 = vadd.f32 %v2263, %v2351
        %v2353 = vpop.f32.mrf.mxu0
        %v2354 = vadd.f32 %v2265, %v2353
        %2355 = vmatmul.bf16.gmra.mxu0 %v2116
        %v2356 = vpop.f32.mrf.mxu0
        %v2357 = vadd.f32 %v2268, %v2356
        %v2358 = vpop.f32.mrf.mxu0
        %v2359 = vadd.f32 %v2270, %v2358
        %2360 = vmatmul.bf16.gmra.mxu0 %v2118
        %v2361 = vpop.f32.mrf.mxu0
        %v2362 = vadd.f32 %v2273, %v2361
        %v2363 = vpop.f32.mrf.mxu0
        %v2364 = vadd.f32 %v2275, %v2363
        %2365 = vmatmul.bf16.gmra.mxu0 %v2120
        %v2366 = vpop.f32.mrf.mxu0
        %v2367 = vadd.f32 %v2278, %v2366
        %v2368 = vpop.f32.mrf.mxu0
        %v2369 = vadd.f32 %v2280, %v2368
        %2370 = vmatmul.bf16.gmra.mxu0 %v2122
        %v2371 = vpop.f32.mrf.mxu0
        %v2372 = vadd.f32 %v2283, %v2371
        %v2373 = vpop.f32.mrf.mxu0
        %v2374 = vadd.f32 %v2285, %v2373
        %2375 = vmatmul.bf16.gmra.mxu0 %v2124
        %v2376 = vpop.f32.mrf.mxu0
        %v2377 = vadd.f32 %v2288, %v2376
        %v2378 = vpop.f32.mrf.mxu0
        %v2379 = vadd.f32 %v2290, %v2378
        %2380 = vmatmul.bf16.gmra.mxu0 %v2126
        %v2381 = vpop.f32.mrf.mxu0
        %v2382 = vadd.f32 %v2293, %v2381
        %v2383 = vpop.f32.mrf.mxu0
        %v2384 = vadd.f32 %v2295, %v2383
        %2385 = vmatmul.bf16.gmra.mxu0 %v2128
        %v2386 = vpop.f32.mrf.mxu0
        %v2387 = vadd.f32 %v2298, %v2386
        %v2388 = vpop.f32.mrf.mxu0
        %v2389 = vadd.f32 %v2300, %v2388
        %2390 = vmatmul.bf16.gmra.mxu0 %v2130
        %v2391 = vpop.f32.mrf.mxu0
        %v2392 = vadd.f32 %v2303, %v2391
        %v2393 = vpop.f32.mrf.mxu0
        %v2394 = vadd.f32 %v2305, %v2393
        %2395 = vmatmul.bf16.gmra.mxu0 %v2132
        %v2396 = vpop.f32.mrf.mxu0
        %v2397 = vadd.f32 %v2308, %v2396
        %v2398 = vpop.f32.mrf.mxu0
        %v2399 = vadd.f32 %v2310, %v2398
        %2400 = vmatmul.bf16.gmra.mxu0 %v2134
        %v2401 = vpop.f32.mrf.mxu0
        %v2402 = vadd.f32 %v2313, %v2401
        %v2403 = vpop.f32.mrf.mxu0
        %v2404 = vadd.f32 %v2315, %v2403
        %2405 = vmatmul.bf16.gmra.mxu0 %v2136
        %v2406 = vpop.f32.mrf.mxu0
        %v2407 = vadd.f32 %v2318, %v2406
        %v2408 = vpop.f32.mrf.mxu0
        %v2409 = vadd.f32 %v2320, %v2408
        %2410 = vdwg.mxu0
        %v2411 = vpack.c.bf16 %v2334, %v2332
        %v2412 = vpack.c.bf16 %v2339, %v2337
        %v2413 = vpack.c.bf16 %v2344, %v2342
        %v2414 = vpack.c.bf16 %v2349, %v2347
        %v2415 = vpack.c.bf16 %v2354, %v2352
        %v2416 = vpack.c.bf16 %v2359, %v2357
        %v2417 = vpack.c.bf16 %v2364, %v2362
        %v2418 = vpack.c.bf16 %v2369, %v2367
        %v2419 = vpack.c.bf16 %v2374, %v2372
        %v2420 = vpack.c.bf16 %v2379, %v2377
        %v2421 = vpack.c.bf16 %v2384, %v2382
        %v2422 = vpack.c.bf16 %v2389, %v2387
        %v2423 = vpack.c.bf16 %v2394, %v2392
        %v2424 = vpack.c.bf16 %v2399, %v2397
        %v2425 = vpack.c.bf16 %v2404, %v2402
        %v2426 = vpack.c.bf16 %v2409, %v2407
        %v2427 = vld [vmem:[#allocation9] sm:$0xf]
        %v2428 = vld [vmem:[#allocation9 + $0x4] sm:$0xf]
        %v2429 = vld [vmem:[#allocation9 + $0x8] sm:$0xf]
        %v2430 = vld [vmem:[#allocation9 + $0xc] sm:$0xf]
        %s2431 = scalar_lea.vmem [#allocation11], 512
        %v2432 = vld [vmem:[%s2431] sm:$0xff]
        %v2433 = vld [vmem:[%s2431 + $0x8] sm:$0xff]
        %v2434 = vld [vmem:[%s2431 + $0x10] sm:$0xff]
        %v2435 = vld [vmem:[%s2431 + $0x18] sm:$0xff]
        %v2436 = vld [vmem:[%s2431 + $0x20] sm:$0xff]
        %v2437 = vld [vmem:[%s2431 + $0x28] sm:$0xff]
        %v2438 = vld [vmem:[%s2431 + $0x30] sm:$0xff]
        %v2439 = vld [vmem:[%s2431 + $0x38] sm:$0xff]
        %v2440 = vld [vmem:[%s2431 + $0x40] sm:$0xff]
        %v2441 = vld [vmem:[%s2431 + $0x48] sm:$0xff]
        %v2442 = vld [vmem:[%s2431 + $0x50] sm:$0xff]
        %v2443 = vld [vmem:[%s2431 + $0x58] sm:$0xff]
        %v2444 = vld [vmem:[%s2431 + $0x60] sm:$0xff]
        %v2445 = vld [vmem:[%s2431 + $0x68] sm:$0xff]
        %v2446 = vld [vmem:[%s2431 + $0x70] sm:$0xff]
        %v2447 = vld [vmem:[%s2431 + $0x78] sm:$0xff]
        %v2448 = vld [vmem:[%s2431 + $0x80] sm:$0xff]
        %v2449 = vld [vmem:[%s2431 + $0x88] sm:$0xff]
        %v2450 = vld [vmem:[%s2431 + $0x90] sm:$0xff]
        %v2451 = vld [vmem:[%s2431 + $0x98] sm:$0xff]
        %v2452 = vld [vmem:[%s2431 + $0xa0] sm:$0xff]
        %v2453 = vld [vmem:[%s2431 + $0xa8] sm:$0xff]
        %v2454 = vld [vmem:[%s2431 + $0xb0] sm:$0xff]
        %v2455 = vld [vmem:[%s2431 + $0xb8] sm:$0xff]
        %v2456 = vld [vmem:[%s2431 + $0xc0] sm:$0xff]
        %v2457 = vld [vmem:[%s2431 + $0xc8] sm:$0xff]
        %v2458 = vld [vmem:[%s2431 + $0xd0] sm:$0xff]
        %v2459 = vld [vmem:[%s2431 + $0xd8] sm:$0xff]
        %v2460 = vld [vmem:[%s2431 + $0xe0] sm:$0xff]
        %v2461 = vld [vmem:[%s2431 + $0xe8] sm:$0xff]
        %v2462 = vld [vmem:[%s2431 + $0xf0] sm:$0xff]
        %v2463 = vld [vmem:[%s2431 + $0xf8] sm:$0xff]
        %v2464 = vld [vmem:[%s2431 + $0x100] sm:$0xff]
        %v2465 = vld [vmem:[%s2431 + $0x108] sm:$0xff]
        %v2466 = vld [vmem:[%s2431 + $0x110] sm:$0xff]
        %v2467 = vld [vmem:[%s2431 + $0x118] sm:$0xff]
        %v2468 = vld [vmem:[%s2431 + $0x120] sm:$0xff]
        %v2469 = vld [vmem:[%s2431 + $0x128] sm:$0xff]
        %v2470 = vld [vmem:[%s2431 + $0x130] sm:$0xff]
        %v2471 = vld [vmem:[%s2431 + $0x138] sm:$0xff]
        %v2472 = vld [vmem:[%s2431 + $0x140] sm:$0xff]
        %v2473 = vld [vmem:[%s2431 + $0x148] sm:$0xff]
        %v2474 = vld [vmem:[%s2431 + $0x150] sm:$0xff]
        %v2475 = vld [vmem:[%s2431 + $0x158] sm:$0xff]
        %v2476 = vld [vmem:[%s2431 + $0x160] sm:$0xff]
        %v2477 = vld [vmem:[%s2431 + $0x168] sm:$0xff]
        %v2478 = vld [vmem:[%s2431 + $0x170] sm:$0xff]
        %v2479 = vld [vmem:[%s2431 + $0x178] sm:$0xff]
        %v2480 = vld [vmem:[%s2431 + $0x180] sm:$0xff]
        %v2481 = vld [vmem:[%s2431 + $0x188] sm:$0xff]
        %v2482 = vld [vmem:[%s2431 + $0x190] sm:$0xff]
        %v2483 = vld [vmem:[%s2431 + $0x198] sm:$0xff]
        %v2484 = vld [vmem:[%s2431 + $0x1a0] sm:$0xff]
        %v2485 = vld [vmem:[%s2431 + $0x1a8] sm:$0xff]
        %v2486 = vld [vmem:[%s2431 + $0x1b0] sm:$0xff]
        %v2487 = vld [vmem:[%s2431 + $0x1b8] sm:$0xff]
        %v2488 = vld [vmem:[%s2431 + $0x1c0] sm:$0xff]
        %v2489 = vld [vmem:[%s2431 + $0x1c8] sm:$0xff]
        %v2490 = vld [vmem:[%s2431 + $0x1d0] sm:$0xff]
        %v2491 = vld [vmem:[%s2431 + $0x1d8] sm:$0xff]
        %v2492 = vld [vmem:[%s2431 + $0x1e0] sm:$0xff]
        %v2493 = vld [vmem:[%s2431 + $0x1e8] sm:$0xff]
        %v2494 = vld [vmem:[%s2431 + $0x1f0] sm:$0xff]
        %v2495 = vld [vmem:[%s2431 + $0x1f8] sm:$0xff]
        %2496 = vrot.lane.b32.xlu0 %v1254, 96
        %v2497 = vpop.permute.xlu0 %2496
        %2498 = vrot.lane.b32.xlu0 %v1255, 96
        %v2499 = vpop.permute.xlu0 %2498
        %2500 = vrot.lane.b32.xlu0 %v1256, 96
        %v2501 = vpop.permute.xlu0 %2500
        %2502 = vrot.lane.b32.xlu0 %v1257, 96
        %v2503 = vpop.permute.xlu0 %2502
        %2504 = vrot.lane.b32.xlu0 %v1258, 96
        %v2505 = vpop.permute.xlu0 %2504
        %2506 = vrot.lane.b32.xlu0 %v1259, 96
        %v2507 = vpop.permute.xlu0 %2506
        %2508 = vrot.lane.b32.xlu0 %v1260, 96
        %v2509 = vpop.permute.xlu0 %2508
        %2510 = vrot.lane.b32.xlu0 %v1261, 96
        %v2511 = vpop.permute.xlu0 %2510
        %2512 = vrot.lane.b32.xlu0 %v1262, 96
        %v2513 = vpop.permute.xlu0 %2512
        %2514 = vrot.lane.b32.xlu0 %v1263, 96
        %v2515 = vpop.permute.xlu0 %2514
        %2516 = vrot.lane.b32.xlu0 %v1264, 96
        %v2517 = vpop.permute.xlu0 %2516
        %2518 = vrot.lane.b32.xlu0 %v1265, 96
        %v2519 = vpop.permute.xlu0 %2518
        %2520 = vrot.lane.b32.xlu0 %v1266, 96
        %v2521 = vpop.permute.xlu0 %2520
        %2522 = vrot.lane.b32.xlu0 %v1267, 96
        %v2523 = vpop.permute.xlu0 %2522
        %2524 = vrot.lane.b32.xlu0 %v1268, 96
        %v2525 = vpop.permute.xlu0 %2524
        %2526 = vrot.lane.b32.xlu0 %v1269, 96
        %v2527 = vpop.permute.xlu0 %2526
        %2528 = vrot.lane.b32.xlu0 %v1334, 96
        %v2529 = vpop.permute.xlu0 %2528
        %2530 = vrot.lane.b32.xlu0 %v1335, 96
        %v2531 = vpop.permute.xlu0 %2530
        %2532 = vrot.lane.b32.xlu0 %v1336, 96
        %v2533 = vpop.permute.xlu0 %2532
        %2534 = vrot.lane.b32.xlu0 %v1337, 96
        %v2535 = vpop.permute.xlu0 %2534
        %2536 = vrot.lane.b32.xlu0 %v1338, 96
        %v2537 = vpop.permute.xlu0 %2536
        %2538 = vrot.lane.b32.xlu0 %v1339, 96
        %v2539 = vpop.permute.xlu0 %2538
        %2540 = vrot.lane.b32.xlu0 %v1340, 96
        %v2541 = vpop.permute.xlu0 %2540
        %2542 = vrot.lane.b32.xlu0 %v1341, 96
        %v2543 = vpop.permute.xlu0 %2542
        %2544 = vrot.lane.b32.xlu0 %v1342, 96
        %v2545 = vpop.permute.xlu0 %2544
        %2546 = vrot.lane.b32.xlu0 %v1343, 96
        %v2547 = vpop.permute.xlu0 %2546
        %2548 = vrot.lane.b32.xlu0 %v1344, 96
        %v2549 = vpop.permute.xlu0 %2548
        %2550 = vrot.lane.b32.xlu0 %v1345, 96
        %v2551 = vpop.permute.xlu0 %2550
        %2552 = vrot.lane.b32.xlu0 %v1346, 96
        %v2553 = vpop.permute.xlu0 %2552
        %2554 = vrot.lane.b32.xlu0 %v1347, 96
        %v2555 = vpop.permute.xlu0 %2554
        %2556 = vrot.lane.b32.xlu0 %v1348, 96
        %v2557 = vpop.permute.xlu0 %2556
        %2558 = vrot.lane.b32.xlu0 %v1349, 96
        %v2559 = vpop.permute.xlu0 %2558
        %v2561 = vsel %vm1350, %v2497, 0
        %v2564 = vsel %vm1350, %v2499, 0
        %v2567 = vsel %vm1350, %v2501, 0
        %v2570 = vsel %vm1350, %v2503, 0
        %v2573 = vsel %vm1350, %v2505, 0
        %v2576 = vsel %vm1350, %v2507, 0
        %v2579 = vsel %vm1350, %v2509, 0
        %v2582 = vsel %vm1350, %v2511, 0
        %v2585 = vsel %vm1350, %v2513, 0
        %v2588 = vsel %vm1350, %v2515, 0
        %v2591 = vsel %vm1350, %v2517, 0
        %v2594 = vsel %vm1350, %v2519, 0
        %v2597 = vsel %vm1350, %v2521, 0
        %v2600 = vsel %vm1350, %v2523, 0
        %v2603 = vsel %vm1350, %v2525, 0
        %v2606 = vsel %vm1350, %v2527, 0
        %v2609 = vsel %vm1350, %v2529, 0
        %v2612 = vsel %vm1350, %v2531, 0
        %v2615 = vsel %vm1350, %v2533, 0
        %v2618 = vsel %vm1350, %v2535, 0
        %v2621 = vsel %vm1350, %v2537, 0
        %v2624 = vsel %vm1350, %v2539, 0
        %v2627 = vsel %vm1350, %v2541, 0
        %v2630 = vsel %vm1350, %v2543, 0
        %v2633 = vsel %vm1350, %v2545, 0
        %v2636 = vsel %vm1350, %v2547, 0
        %v2639 = vsel %vm1350, %v2549, 0
        %v2642 = vsel %vm1350, %v2551, 0
        %v2645 = vsel %vm1350, %v2553, 0
        %v2648 = vsel %vm1350, %v2555, 0
        %v2651 = vsel %vm1350, %v2557, 0
        %v2654 = vsel %vm1350, %v2559, 0
        %2656 = vmatpush.bf16.xpose.msra.mxu0 %v2630
        %2657 = vmatpush.bf16.xpose.msra.mxu0 %v2627
        %2658 = vmatpush.bf16.xpose.msra.mxu0 %v2624
        %2659 = vmatpush.bf16.xpose.msra.mxu0 %v2621
        %2660 = vmatpush.bf16.xpose.msra.mxu0 %v2618
        %2661 = vmatpush.bf16.xpose.msra.mxu0 %v2615
        %2662 = vmatpush.bf16.xpose.msra.mxu0 %v2612
        %2663 = vmatpush.bf16.xpose.msra.mxu0 %v2609
        %2664 = vmatmul.bf16.gmra.mxu0 %v2561
        %v2665 = vpop.f32.mrf.mxu0
        %v2666 = vadd.f32 %v2432, %v2665
        %v2667 = vpop.f32.mrf.mxu0
        %v2668 = vadd.f32 %v2434, %v2667
        %2669 = vmatmul.bf16.gmra.mxu0 %v2564
        %v2670 = vpop.f32.mrf.mxu0
        %v2671 = vadd.f32 %v2436, %v2670
        %v2672 = vpop.f32.mrf.mxu0
        %v2673 = vadd.f32 %v2438, %v2672
        %2674 = vmatmul.bf16.gmra.mxu0 %v2567
        %v2675 = vpop.f32.mrf.mxu0
        %v2676 = vadd.f32 %v2440, %v2675
        %v2677 = vpop.f32.mrf.mxu0
        %v2678 = vadd.f32 %v2442, %v2677
        %2679 = vmatmul.bf16.gmra.mxu0 %v2570
        %v2680 = vpop.f32.mrf.mxu0
        %v2681 = vadd.f32 %v2444, %v2680
        %v2682 = vpop.f32.mrf.mxu0
        %v2683 = vadd.f32 %v2446, %v2682
        %2684 = vmatmul.bf16.gmra.mxu0 %v2573
        %v2685 = vpop.f32.mrf.mxu0
        %v2686 = vadd.f32 %v2448, %v2685
        %v2687 = vpop.f32.mrf.mxu0
        %v2688 = vadd.f32 %v2450, %v2687
        %2689 = vmatmul.bf16.gmra.mxu0 %v2576
        %v2690 = vpop.f32.mrf.mxu0
        %v2691 = vadd.f32 %v2452, %v2690
        %v2692 = vpop.f32.mrf.mxu0
        %v2693 = vadd.f32 %v2454, %v2692
        %2694 = vmatmul.bf16.gmra.mxu0 %v2579
        %v2695 = vpop.f32.mrf.mxu0
        %v2696 = vadd.f32 %v2456, %v2695
        %v2697 = vpop.f32.mrf.mxu0
        %v2698 = vadd.f32 %v2458, %v2697
        %2699 = vmatmul.bf16.gmra.mxu0 %v2582
        %v2700 = vpop.f32.mrf.mxu0
        %v2701 = vadd.f32 %v2460, %v2700
        %v2702 = vpop.f32.mrf.mxu0
        %v2703 = vadd.f32 %v2462, %v2702
        %2704 = vmatmul.bf16.gmra.mxu0 %v2585
        %v2705 = vpop.f32.mrf.mxu0
        %v2706 = vadd.f32 %v2464, %v2705
        %v2707 = vpop.f32.mrf.mxu0
        %v2708 = vadd.f32 %v2466, %v2707
        %2709 = vmatmul.bf16.gmra.mxu0 %v2588
        %v2710 = vpop.f32.mrf.mxu0
        %v2711 = vadd.f32 %v2468, %v2710
        %v2712 = vpop.f32.mrf.mxu0
        %v2713 = vadd.f32 %v2470, %v2712
        %2714 = vmatmul.bf16.gmra.mxu0 %v2591
        %v2715 = vpop.f32.mrf.mxu0
        %v2716 = vadd.f32 %v2472, %v2715
        %v2717 = vpop.f32.mrf.mxu0
        %v2718 = vadd.f32 %v2474, %v2717
        %2719 = vmatmul.bf16.gmra.mxu0 %v2594
        %v2720 = vpop.f32.mrf.mxu0
        %v2721 = vadd.f32 %v2476, %v2720
        %v2722 = vpop.f32.mrf.mxu0
        %v2723 = vadd.f32 %v2478, %v2722
        %2724 = vmatmul.bf16.gmra.mxu0 %v2597
        %v2725 = vpop.f32.mrf.mxu0
        %v2726 = vadd.f32 %v2480, %v2725
        %v2727 = vpop.f32.mrf.mxu0
        %v2728 = vadd.f32 %v2482, %v2727
        %2729 = vmatmul.bf16.gmra.mxu0 %v2600
        %v2730 = vpop.f32.mrf.mxu0
        %v2731 = vadd.f32 %v2484, %v2730
        %v2732 = vpop.f32.mrf.mxu0
        %v2733 = vadd.f32 %v2486, %v2732
        %2734 = vmatmul.bf16.gmra.mxu0 %v2603
        %v2735 = vpop.f32.mrf.mxu0
        %v2736 = vadd.f32 %v2488, %v2735
        %v2737 = vpop.f32.mrf.mxu0
        %v2738 = vadd.f32 %v2490, %v2737
        %2739 = vmatmul.bf16.gmra.mxu0 %v2606
        %v2740 = vpop.f32.mrf.mxu0
        %v2741 = vadd.f32 %v2492, %v2740
        %v2742 = vpop.f32.mrf.mxu0
        %v2743 = vadd.f32 %v2494, %v2742
        %2744 = vdwg.mxu0
        %2745 = vmatpush.bf16.xpose.msra.mxu0 %v2654
        %2746 = vmatpush.bf16.xpose.msra.mxu0 %v2651
        %2747 = vmatpush.bf16.xpose.msra.mxu0 %v2648
        %2748 = vmatpush.bf16.xpose.msra.mxu0 %v2645
        %2749 = vmatpush.bf16.xpose.msra.mxu0 %v2642
        %2750 = vmatpush.bf16.xpose.msra.mxu0 %v2639
        %2751 = vmatpush.bf16.xpose.msra.mxu0 %v2636
        %2752 = vmatpush.bf16.xpose.msra.mxu0 %v2633
        %2753 = vmatmul.bf16.gmra.mxu0 %v2561
        %v2754 = vpop.f32.mrf.mxu0
        %v2755 = vadd.f32 %v2433, %v2754
        %v2756 = vpop.f32.mrf.mxu0
        %v2757 = vadd.f32 %v2435, %v2756
        %2758 = vmatmul.bf16.gmra.mxu0 %v2564
        %v2759 = vpop.f32.mrf.mxu0
        %v2760 = vadd.f32 %v2437, %v2759
        %v2761 = vpop.f32.mrf.mxu0
        %v2762 = vadd.f32 %v2439, %v2761
        %2763 = vmatmul.bf16.gmra.mxu0 %v2567
        %v2764 = vpop.f32.mrf.mxu0
        %v2765 = vadd.f32 %v2441, %v2764
        %v2766 = vpop.f32.mrf.mxu0
        %v2767 = vadd.f32 %v2443, %v2766
        %2768 = vmatmul.bf16.gmra.mxu0 %v2570
        %v2769 = vpop.f32.mrf.mxu0
        %v2770 = vadd.f32 %v2445, %v2769
        %v2771 = vpop.f32.mrf.mxu0
        %v2772 = vadd.f32 %v2447, %v2771
        %2773 = vmatmul.bf16.gmra.mxu0 %v2573
        %v2774 = vpop.f32.mrf.mxu0
        %v2775 = vadd.f32 %v2449, %v2774
        %v2776 = vpop.f32.mrf.mxu0
        %v2777 = vadd.f32 %v2451, %v2776
        %2778 = vmatmul.bf16.gmra.mxu0 %v2576
        %v2779 = vpop.f32.mrf.mxu0
        %v2780 = vadd.f32 %v2453, %v2779
        %v2781 = vpop.f32.mrf.mxu0
        %v2782 = vadd.f32 %v2455, %v2781
        %2783 = vmatmul.bf16.gmra.mxu0 %v2579
        %v2784 = vpop.f32.mrf.mxu0
        %v2785 = vadd.f32 %v2457, %v2784
        %v2786 = vpop.f32.mrf.mxu0
        %v2787 = vadd.f32 %v2459, %v2786
        %2788 = vmatmul.bf16.gmra.mxu0 %v2582
        %v2789 = vpop.f32.mrf.mxu0
        %v2790 = vadd.f32 %v2461, %v2789
        %v2791 = vpop.f32.mrf.mxu0
        %v2792 = vadd.f32 %v2463, %v2791
        %2793 = vmatmul.bf16.gmra.mxu0 %v2585
        %v2794 = vpop.f32.mrf.mxu0
        %v2795 = vadd.f32 %v2465, %v2794
        %v2796 = vpop.f32.mrf.mxu0
        %v2797 = vadd.f32 %v2467, %v2796
        %2798 = vmatmul.bf16.gmra.mxu0 %v2588
        %v2799 = vpop.f32.mrf.mxu0
        %v2800 = vadd.f32 %v2469, %v2799
        %v2801 = vpop.f32.mrf.mxu0
        %v2802 = vadd.f32 %v2471, %v2801
        %2803 = vmatmul.bf16.gmra.mxu0 %v2591
        %v2804 = vpop.f32.mrf.mxu0
        %v2805 = vadd.f32 %v2473, %v2804
        %v2806 = vpop.f32.mrf.mxu0
        %v2807 = vadd.f32 %v2475, %v2806
        %2808 = vmatmul.bf16.gmra.mxu0 %v2594
        %v2809 = vpop.f32.mrf.mxu0
        %v2810 = vadd.f32 %v2477, %v2809
        %v2811 = vpop.f32.mrf.mxu0
        %v2812 = vadd.f32 %v2479, %v2811
        %2813 = vmatmul.bf16.gmra.mxu0 %v2597
        %v2814 = vpop.f32.mrf.mxu0
        %v2815 = vadd.f32 %v2481, %v2814
        %v2816 = vpop.f32.mrf.mxu0
        %v2817 = vadd.f32 %v2483, %v2816
        %2818 = vmatmul.bf16.gmra.mxu0 %v2600
        %v2819 = vpop.f32.mrf.mxu0
        %v2820 = vadd.f32 %v2485, %v2819
        %v2821 = vpop.f32.mrf.mxu0
        %v2822 = vadd.f32 %v2487, %v2821
        %2823 = vmatmul.bf16.gmra.mxu0 %v2603
        %v2824 = vpop.f32.mrf.mxu0
        %v2825 = vadd.f32 %v2489, %v2824
        %v2826 = vpop.f32.mrf.mxu0
        %v2827 = vadd.f32 %v2491, %v2826
        %2828 = vmatmul.bf16.gmra.mxu0 %v2606
        %v2829 = vpop.f32.mrf.mxu0
        %v2830 = vadd.f32 %v2493, %v2829
        %v2831 = vpop.f32.mrf.mxu0
        %v2832 = vadd.f32 %v2495, %v2831
        %2833 = vdwg.mxu0
        %v2834 = vmax.f32 %v2666, %v2755
        %2835 = vmax.xlane.f32.xlu0 %v2834
        %v2836 = vpop.xlane.xlu0 %2835
        %v2837 = vmax.f32 %v2668, %v2757
        %2838 = vmax.xlane.f32.xlu0 %v2837
        %v2839 = vpop.xlane.xlu0 %2838
        %v2840 = vmax.f32 %v2671, %v2760
        %2841 = vmax.xlane.f32.xlu0 %v2840
        %v2842 = vpop.xlane.xlu0 %2841
        %v2843 = vmax.f32 %v2673, %v2762
        %2844 = vmax.xlane.f32.xlu0 %v2843
        %v2845 = vpop.xlane.xlu0 %2844
        %v2846 = vmax.f32 %v2676, %v2765
        %2847 = vmax.xlane.f32.xlu0 %v2846
        %v2848 = vpop.xlane.xlu0 %2847
        %v2849 = vmax.f32 %v2678, %v2767
        %2850 = vmax.xlane.f32.xlu0 %v2849
        %v2851 = vpop.xlane.xlu0 %2850
        %v2852 = vmax.f32 %v2681, %v2770
        %2853 = vmax.xlane.f32.xlu0 %v2852
        %v2854 = vpop.xlane.xlu0 %2853
        %v2855 = vmax.f32 %v2683, %v2772
        %2856 = vmax.xlane.f32.xlu0 %v2855
        %v2857 = vpop.xlane.xlu0 %2856
        %v2858 = vmax.f32 %v2686, %v2775
        %2859 = vmax.xlane.f32.xlu0 %v2858
        %v2860 = vpop.xlane.xlu0 %2859
        %v2861 = vmax.f32 %v2688, %v2777
        %2862 = vmax.xlane.f32.xlu0 %v2861
        %v2863 = vpop.xlane.xlu0 %2862
        %v2864 = vmax.f32 %v2691, %v2780
        %2865 = vmax.xlane.f32.xlu0 %v2864
        %v2866 = vpop.xlane.xlu0 %2865
        %v2867 = vmax.f32 %v2693, %v2782
        %2868 = vmax.xlane.f32.xlu0 %v2867
        %v2869 = vpop.xlane.xlu0 %2868
        %v2870 = vmax.f32 %v2696, %v2785
        %2871 = vmax.xlane.f32.xlu0 %v2870
        %v2872 = vpop.xlane.xlu0 %2871
        %v2873 = vmax.f32 %v2698, %v2787
        %2874 = vmax.xlane.f32.xlu0 %v2873
        %v2875 = vpop.xlane.xlu0 %2874
        %v2876 = vmax.f32 %v2701, %v2790
        %2877 = vmax.xlane.f32.xlu0 %v2876
        %v2878 = vpop.xlane.xlu0 %2877
        %v2879 = vmax.f32 %v2703, %v2792
        %2880 = vmax.xlane.f32.xlu0 %v2879
        %v2881 = vpop.xlane.xlu0 %2880
        %v2882 = vmax.f32 %v2706, %v2795
        %2883 = vmax.xlane.f32.xlu0 %v2882
        %v2884 = vpop.xlane.xlu0 %2883
        %v2885 = vmax.f32 %v2708, %v2797
        %2886 = vmax.xlane.f32.xlu0 %v2885
        %v2887 = vpop.xlane.xlu0 %2886
        %v2888 = vmax.f32 %v2711, %v2800
        %2889 = vmax.xlane.f32.xlu0 %v2888
        %v2890 = vpop.xlane.xlu0 %2889
        %v2891 = vmax.f32 %v2713, %v2802
        %2892 = vmax.xlane.f32.xlu0 %v2891
        %v2893 = vpop.xlane.xlu0 %2892
        %v2894 = vmax.f32 %v2716, %v2805
        %2895 = vmax.xlane.f32.xlu0 %v2894
        %v2896 = vpop.xlane.xlu0 %2895
        %v2897 = vmax.f32 %v2718, %v2807
        %2898 = vmax.xlane.f32.xlu0 %v2897
        %v2899 = vpop.xlane.xlu0 %2898
        %v2900 = vmax.f32 %v2721, %v2810
        %2901 = vmax.xlane.f32.xlu0 %v2900
        %v2902 = vpop.xlane.xlu0 %2901
        %v2903 = vmax.f32 %v2723, %v2812
        %2904 = vmax.xlane.f32.xlu0 %v2903
        %v2905 = vpop.xlane.xlu0 %2904
        %v2906 = vmax.f32 %v2726, %v2815
        %2907 = vmax.xlane.f32.xlu0 %v2906
        %v2908 = vpop.xlane.xlu0 %2907
        %v2909 = vmax.f32 %v2728, %v2817
        %2910 = vmax.xlane.f32.xlu0 %v2909
        %v2911 = vpop.xlane.xlu0 %2910
        %v2912 = vmax.f32 %v2731, %v2820
        %2913 = vmax.xlane.f32.xlu0 %v2912
        %v2914 = vpop.xlane.xlu0 %2913
        %v2915 = vmax.f32 %v2733, %v2822
        %2916 = vmax.xlane.f32.xlu0 %v2915
        %v2917 = vpop.xlane.xlu0 %2916
        %v2918 = vmax.f32 %v2736, %v2825
        %2919 = vmax.xlane.f32.xlu0 %v2918
        %v2920 = vpop.xlane.xlu0 %2919
        %v2921 = vmax.f32 %v2738, %v2827
        %2922 = vmax.xlane.f32.xlu0 %v2921
        %v2923 = vpop.xlane.xlu0 %2922
        %v2924 = vmax.f32 %v2741, %v2830
        %2925 = vmax.xlane.f32.xlu0 %v2924
        %v2926 = vpop.xlane.xlu0 %2925
        %v2927 = vmax.f32 %v2743, %v2832
        %2928 = vmax.xlane.f32.xlu0 %v2927
        %v2929 = vpop.xlane.xlu0 %2928
        %v2930 = vsub.f32 %v2666, %v2836
        %v2931 = vsub.f32 %v2755, %v2836
        %v2932 = vsub.f32 %v2668, %v2839
        %v2933 = vsub.f32 %v2757, %v2839
        %v2934 = vsub.f32 %v2671, %v2842
        %v2935 = vsub.f32 %v2760, %v2842
        %v2936 = vsub.f32 %v2673, %v2845
        %v2937 = vsub.f32 %v2762, %v2845
        %v2938 = vsub.f32 %v2676, %v2848
        %v2939 = vsub.f32 %v2765, %v2848
        %v2940 = vsub.f32 %v2678, %v2851
        %v2941 = vsub.f32 %v2767, %v2851
        %v2942 = vsub.f32 %v2681, %v2854
        %v2943 = vsub.f32 %v2770, %v2854
        %v2944 = vsub.f32 %v2683, %v2857
        %v2945 = vsub.f32 %v2772, %v2857
        %v2946 = vsub.f32 %v2686, %v2860
        %v2947 = vsub.f32 %v2775, %v2860
        %v2948 = vsub.f32 %v2688, %v2863
        %v2949 = vsub.f32 %v2777, %v2863
        %v2950 = vsub.f32 %v2691, %v2866
        %v2951 = vsub.f32 %v2780, %v2866
        %v2952 = vsub.f32 %v2693, %v2869
        %v2953 = vsub.f32 %v2782, %v2869
        %v2954 = vsub.f32 %v2696, %v2872
        %v2955 = vsub.f32 %v2785, %v2872
        %v2956 = vsub.f32 %v2698, %v2875
        %v2957 = vsub.f32 %v2787, %v2875
        %v2958 = vsub.f32 %v2701, %v2878
        %v2959 = vsub.f32 %v2790, %v2878
        %v2960 = vsub.f32 %v2703, %v2881
        %v2961 = vsub.f32 %v2792, %v2881
        %v2962 = vsub.f32 %v2706, %v2884
        %v2963 = vsub.f32 %v2795, %v2884
        %v2964 = vsub.f32 %v2708, %v2887
        %v2965 = vsub.f32 %v2797, %v2887
        %v2966 = vsub.f32 %v2711, %v2890
        %v2967 = vsub.f32 %v2800, %v2890
        %v2968 = vsub.f32 %v2713, %v2893
        %v2969 = vsub.f32 %v2802, %v2893
        %v2970 = vsub.f32 %v2716, %v2896
        %v2971 = vsub.f32 %v2805, %v2896
        %v2972 = vsub.f32 %v2718, %v2899
        %v2973 = vsub.f32 %v2807, %v2899
        %v2974 = vsub.f32 %v2721, %v2902
        %v2975 = vsub.f32 %v2810, %v2902
        %v2976 = vsub.f32 %v2723, %v2905
        %v2977 = vsub.f32 %v2812, %v2905
        %v2978 = vsub.f32 %v2726, %v2908
        %v2979 = vsub.f32 %v2815, %v2908
        %v2980 = vsub.f32 %v2728, %v2911
        %v2981 = vsub.f32 %v2817, %v2911
        %v2982 = vsub.f32 %v2731, %v2914
        %v2983 = vsub.f32 %v2820, %v2914
        %v2984 = vsub.f32 %v2733, %v2917
        %v2985 = vsub.f32 %v2822, %v2917
        %v2986 = vsub.f32 %v2736, %v2920
        %v2987 = vsub.f32 %v2825, %v2920
        %v2988 = vsub.f32 %v2738, %v2923
        %v2989 = vsub.f32 %v2827, %v2923
        %v2990 = vsub.f32 %v2741, %v2926
        %v2991 = vsub.f32 %v2830, %v2926
        %v2992 = vsub.f32 %v2743, %v2929
        %v2993 = vsub.f32 %v2832, %v2929
        %v2994 = vmul.f32 %v2930, 1.442695
        %v2995 = vpow.pop %v2994
        %v2996 = vmul.f32 %v2931, 1.442695
        %v2997 = vpow.pop %v2996
        %v2998 = vmul.f32 %v2932, 1.442695
        %v2999 = vpow.pop %v2998
        %v3000 = vmul.f32 %v2933, 1.442695
        %v3001 = vpow.pop %v3000
        %v3002 = vmul.f32 %v2934, 1.442695
        %v3003 = vpow.pop %v3002
        %v3004 = vmul.f32 %v2935, 1.442695
        %v3005 = vpow.pop %v3004
        %v3006 = vmul.f32 %v2936, 1.442695
        %v3007 = vpow.pop %v3006
        %v3008 = vmul.f32 %v2937, 1.442695
        %v3009 = vpow.pop %v3008
        %v3010 = vmul.f32 %v2938, 1.442695
        %v3011 = vpow.pop %v3010
        %v3012 = vmul.f32 %v2939, 1.442695
        %v3013 = vpow.pop %v3012
        %v3014 = vmul.f32 %v2940, 1.442695
        %v3015 = vpow.pop %v3014
        %v3016 = vmul.f32 %v2941, 1.442695
        %v3017 = vpow.pop %v3016
        %v3018 = vmul.f32 %v2942, 1.442695
        %v3019 = vpow.pop %v3018
        %v3020 = vmul.f32 %v2943, 1.442695
        %v3021 = vpow.pop %v3020
        %v3022 = vmul.f32 %v2944, 1.442695
        %v3023 = vpow.pop %v3022
        %v3024 = vmul.f32 %v2945, 1.442695
        %v3025 = vpow.pop %v3024
        %v3026 = vmul.f32 %v2946, 1.442695
        %v3027 = vpow.pop %v3026
        %v3028 = vmul.f32 %v2947, 1.442695
        %v3029 = vpow.pop %v3028
        %v3030 = vmul.f32 %v2948, 1.442695
        %v3031 = vpow.pop %v3030
        %v3032 = vmul.f32 %v2949, 1.442695
        %v3033 = vpow.pop %v3032
        %v3034 = vmul.f32 %v2950, 1.442695
        %v3035 = vpow.pop %v3034
        %v3036 = vmul.f32 %v2951, 1.442695
        %v3037 = vpow.pop %v3036
        %v3038 = vmul.f32 %v2952, 1.442695
        %v3039 = vpow.pop %v3038
        %v3040 = vmul.f32 %v2953, 1.442695
        %v3041 = vpow.pop %v3040
        %v3042 = vmul.f32 %v2954, 1.442695
        %v3043 = vpow.pop %v3042
        %v3044 = vmul.f32 %v2955, 1.442695
        %v3045 = vpow.pop %v3044
        %v3046 = vmul.f32 %v2956, 1.442695
        %v3047 = vpow.pop %v3046
        %v3048 = vmul.f32 %v2957, 1.442695
        %v3049 = vpow.pop %v3048
        %v3050 = vmul.f32 %v2958, 1.442695
        %v3051 = vpow.pop %v3050
        %v3052 = vmul.f32 %v2959, 1.442695
        %v3053 = vpow.pop %v3052
        %v3054 = vmul.f32 %v2960, 1.442695
        %v3055 = vpow.pop %v3054
        %v3056 = vmul.f32 %v2961, 1.442695
        %v3057 = vpow.pop %v3056
        %v3058 = vmul.f32 %v2962, 1.442695
        %v3059 = vpow.pop %v3058
        %v3060 = vmul.f32 %v2963, 1.442695
        %v3061 = vpow.pop %v3060
        %v3062 = vmul.f32 %v2964, 1.442695
        %v3063 = vpow.pop %v3062
        %v3064 = vmul.f32 %v2965, 1.442695
        %v3065 = vpow.pop %v3064
        %v3066 = vmul.f32 %v2966, 1.442695
        %v3067 = vpow.pop %v3066
        %v3068 = vmul.f32 %v2967, 1.442695
        %v3069 = vpow.pop %v3068
        %v3070 = vmul.f32 %v2968, 1.442695
        %v3071 = vpow.pop %v3070
        %v3072 = vmul.f32 %v2969, 1.442695
        %v3073 = vpow.pop %v3072
        %v3074 = vmul.f32 %v2970, 1.442695
        %v3075 = vpow.pop %v3074
        %v3076 = vmul.f32 %v2971, 1.442695
        %v3077 = vpow.pop %v3076
        %v3078 = vmul.f32 %v2972, 1.442695
        %v3079 = vpow.pop %v3078
        %v3080 = vmul.f32 %v2973, 1.442695
        %v3081 = vpow.pop %v3080
        %v3082 = vmul.f32 %v2974, 1.442695
        %v3083 = vpow.pop %v3082
        %v3084 = vmul.f32 %v2975, 1.442695
        %v3085 = vpow.pop %v3084
        %v3086 = vmul.f32 %v2976, 1.442695
        %v3087 = vpow.pop %v3086
        %v3088 = vmul.f32 %v2977, 1.442695
        %v3089 = vpow.pop %v3088
        %v3090 = vmul.f32 %v2978, 1.442695
        %v3091 = vpow.pop %v3090
        %v3092 = vmul.f32 %v2979, 1.442695
        %v3093 = vpow.pop %v3092
        %v3094 = vmul.f32 %v2980, 1.442695
        %v3095 = vpow.pop %v3094
        %v3096 = vmul.f32 %v2981, 1.442695
        %v3097 = vpow.pop %v3096
        %v3098 = vmul.f32 %v2982, 1.442695
        %v3099 = vpow.pop %v3098
        %v3100 = vmul.f32 %v2983, 1.442695
        %v3101 = vpow.pop %v3100
        %v3102 = vmul.f32 %v2984, 1.442695
        %v3103 = vpow.pop %v3102
        %v3104 = vmul.f32 %v2985, 1.442695
        %v3105 = vpow.pop %v3104
        %v3106 = vmul.f32 %v2986, 1.442695
        %v3107 = vpow.pop %v3106
        %v3108 = vmul.f32 %v2987, 1.442695
        %v3109 = vpow.pop %v3108
        %v3110 = vmul.f32 %v2988, 1.442695
        %v3111 = vpow.pop %v3110
        %v3112 = vmul.f32 %v2989, 1.442695
        %v3113 = vpow.pop %v3112
        %v3114 = vmul.f32 %v2990, 1.442695
        %v3115 = vpow.pop %v3114
        %v3116 = vmul.f32 %v2991, 1.442695
        %v3117 = vpow.pop %v3116
        %v3118 = vmul.f32 %v2992, 1.442695
        %v3119 = vpow.pop %v3118
        %v3120 = vmul.f32 %v2993, 1.442695
        %v3121 = vpow.pop %v3120
        %v3122 = vadd.f32 %v2995, %v2997
        %3123 = vadd.xlane.f32.xlu0 %v3122
        %v3124 = vpop.xlane.xlu0 %3123
        %v3125 = vadd.f32 %v2999, %v3001
        %3126 = vadd.xlane.f32.xlu0 %v3125
        %v3127 = vpop.xlane.xlu0 %3126
        %v3128 = vadd.f32 %v3003, %v3005
        %3129 = vadd.xlane.f32.xlu0 %v3128
        %v3130 = vpop.xlane.xlu0 %3129
        %v3131 = vadd.f32 %v3007, %v3009
        %3132 = vadd.xlane.f32.xlu0 %v3131
        %v3133 = vpop.xlane.xlu0 %3132
        %v3134 = vadd.f32 %v3011, %v3013
        %3135 = vadd.xlane.f32.xlu0 %v3134
        %v3136 = vpop.xlane.xlu0 %3135
        %v3137 = vadd.f32 %v3015, %v3017
        %3138 = vadd.xlane.f32.xlu0 %v3137
        %v3139 = vpop.xlane.xlu0 %3138
        %v3140 = vadd.f32 %v3019, %v3021
        %3141 = vadd.xlane.f32.xlu0 %v3140
        %v3142 = vpop.xlane.xlu0 %3141
        %v3143 = vadd.f32 %v3023, %v3025
        %3144 = vadd.xlane.f32.xlu0 %v3143
        %v3145 = vpop.xlane.xlu0 %3144
        %v3146 = vadd.f32 %v3027, %v3029
        %3147 = vadd.xlane.f32.xlu0 %v3146
        %v3148 = vpop.xlane.xlu0 %3147
        %v3149 = vadd.f32 %v3031, %v3033
        %3150 = vadd.xlane.f32.xlu0 %v3149
        %v3151 = vpop.xlane.xlu0 %3150
        %v3152 = vadd.f32 %v3035, %v3037
        %3153 = vadd.xlane.f32.xlu0 %v3152
        %v3154 = vpop.xlane.xlu0 %3153
        %v3155 = vadd.f32 %v3039, %v3041
        %3156 = vadd.xlane.f32.xlu0 %v3155
        %v3157 = vpop.xlane.xlu0 %3156
        %v3158 = vadd.f32 %v3043, %v3045
        %3159 = vadd.xlane.f32.xlu0 %v3158
        %v3160 = vpop.xlane.xlu0 %3159
        %v3161 = vadd.f32 %v3047, %v3049
        %3162 = vadd.xlane.f32.xlu0 %v3161
        %v3163 = vpop.xlane.xlu0 %3162
        %v3164 = vadd.f32 %v3051, %v3053
        %3165 = vadd.xlane.f32.xlu0 %v3164
        %v3166 = vpop.xlane.xlu0 %3165
        %v3167 = vadd.f32 %v3055, %v3057
        %3168 = vadd.xlane.f32.xlu0 %v3167
        %v3169 = vpop.xlane.xlu0 %3168
        %v3170 = vadd.f32 %v3059, %v3061
        %3171 = vadd.xlane.f32.xlu0 %v3170
        %v3172 = vpop.xlane.xlu0 %3171
        %v3173 = vadd.f32 %v3063, %v3065
        %3174 = vadd.xlane.f32.xlu0 %v3173
        %v3175 = vpop.xlane.xlu0 %3174
        %v3176 = vadd.f32 %v3067, %v3069
        %3177 = vadd.xlane.f32.xlu0 %v3176
        %v3178 = vpop.xlane.xlu0 %3177
        %v3179 = vadd.f32 %v3071, %v3073
        %3180 = vadd.xlane.f32.xlu0 %v3179
        %v3181 = vpop.xlane.xlu0 %3180
        %v3182 = vadd.f32 %v3075, %v3077
        %3183 = vadd.xlane.f32.xlu0 %v3182
        %v3184 = vpop.xlane.xlu0 %3183
        %v3185 = vadd.f32 %v3079, %v3081
        %3186 = vadd.xlane.f32.xlu0 %v3185
        %v3187 = vpop.xlane.xlu0 %3186
        %v3188 = vadd.f32 %v3083, %v3085
        %3189 = vadd.xlane.f32.xlu0 %v3188
        %v3190 = vpop.xlane.xlu0 %3189
        %v3191 = vadd.f32 %v3087, %v3089
        %3192 = vadd.xlane.f32.xlu0 %v3191
        %v3193 = vpop.xlane.xlu0 %3192
        %v3194 = vadd.f32 %v3091, %v3093
        %3195 = vadd.xlane.f32.xlu0 %v3194
        %v3196 = vpop.xlane.xlu0 %3195
        %v3197 = vadd.f32 %v3095, %v3097
        %3198 = vadd.xlane.f32.xlu0 %v3197
        %v3199 = vpop.xlane.xlu0 %3198
        %v3200 = vadd.f32 %v3099, %v3101
        %3201 = vadd.xlane.f32.xlu0 %v3200
        %v3202 = vpop.xlane.xlu0 %3201
        %v3203 = vadd.f32 %v3103, %v3105
        %3204 = vadd.xlane.f32.xlu0 %v3203
        %v3205 = vpop.xlane.xlu0 %3204
        %v3206 = vadd.f32 %v3107, %v3109
        %3207 = vadd.xlane.f32.xlu0 %v3206
        %v3208 = vpop.xlane.xlu0 %3207
        %v3209 = vadd.f32 %v3111, %v3113
        %3210 = vadd.xlane.f32.xlu0 %v3209
        %v3211 = vpop.xlane.xlu0 %3210
        %v3212 = vadd.f32 %v3115, %v3117
        %3213 = vadd.xlane.f32.xlu0 %v3212
        %v3214 = vpop.xlane.xlu0 %3213
        %v3215 = vadd.f32 %v3119, %v3121
        %3216 = vadd.xlane.f32.xlu0 %v3215
        %v3217 = vpop.xlane.xlu0 %3216
        %v3218 = vrcp.pop %v3124
        %v3219 = vrcp.pop %v3127
        %v3220 = vrcp.pop %v3130
        %v3221 = vrcp.pop %v3133
        %v3222 = vrcp.pop %v3136
        %v3223 = vrcp.pop %v3139
        %v3224 = vrcp.pop %v3142
        %v3225 = vrcp.pop %v3145
        %v3226 = vrcp.pop %v3148
        %v3227 = vrcp.pop %v3151
        %v3228 = vrcp.pop %v3154
        %v3229 = vrcp.pop %v3157
        %v3230 = vrcp.pop %v3160
        %v3231 = vrcp.pop %v3163
        %v3232 = vrcp.pop %v3166
        %v3233 = vrcp.pop %v3169
        %v3234 = vrcp.pop %v3172
        %v3235 = vrcp.pop %v3175
        %v3236 = vrcp.pop %v3178
        %v3237 = vrcp.pop %v3181
        %v3238 = vrcp.pop %v3184
        %v3239 = vrcp.pop %v3187
        %v3240 = vrcp.pop %v3190
        %v3241 = vrcp.pop %v3193
        %v3242 = vrcp.pop %v3196
        %v3243 = vrcp.pop %v3199
        %v3244 = vrcp.pop %v3202
        %v3245 = vrcp.pop %v3205
        %v3246 = vrcp.pop %v3208
        %v3247 = vrcp.pop %v3211
        %v3248 = vrcp.pop %v3214
        %v3249 = vrcp.pop %v3217
        %v3250 = vmul.f32 %v2995, %v3218
        %v3251 = vmul.f32 %v2997, %v3218
        %v3252 = vmul.f32 %v2999, %v3219
        %v3253 = vmul.f32 %v3001, %v3219
        %v3254 = vmul.f32 %v3003, %v3220
        %v3255 = vmul.f32 %v3005, %v3220
        %v3256 = vmul.f32 %v3007, %v3221
        %v3257 = vmul.f32 %v3009, %v3221
        %v3258 = vmul.f32 %v3011, %v3222
        %v3259 = vmul.f32 %v3013, %v3222
        %v3260 = vmul.f32 %v3015, %v3223
        %v3261 = vmul.f32 %v3017, %v3223
        %v3262 = vmul.f32 %v3019, %v3224
        %v3263 = vmul.f32 %v3021, %v3224
        %v3264 = vmul.f32 %v3023, %v3225
        %v3265 = vmul.f32 %v3025, %v3225
        %v3266 = vmul.f32 %v3027, %v3226
        %v3267 = vmul.f32 %v3029, %v3226
        %v3268 = vmul.f32 %v3031, %v3227
        %v3269 = vmul.f32 %v3033, %v3227
        %v3270 = vmul.f32 %v3035, %v3228
        %v3271 = vmul.f32 %v3037, %v3228
        %v3272 = vmul.f32 %v3039, %v3229
        %v3273 = vmul.f32 %v3041, %v3229
        %v3274 = vmul.f32 %v3043, %v3230
        %v3275 = vmul.f32 %v3045, %v3230
        %v3276 = vmul.f32 %v3047, %v3231
        %v3277 = vmul.f32 %v3049, %v3231
        %v3278 = vmul.f32 %v3051, %v3232
        %v3279 = vmul.f32 %v3053, %v3232
        %v3280 = vmul.f32 %v3055, %v3233
        %v3281 = vmul.f32 %v3057, %v3233
        %v3282 = vmul.f32 %v3059, %v3234
        %v3283 = vmul.f32 %v3061, %v3234
        %v3284 = vmul.f32 %v3063, %v3235
        %v3285 = vmul.f32 %v3065, %v3235
        %v3286 = vmul.f32 %v3067, %v3236
        %v3287 = vmul.f32 %v3069, %v3236
        %v3288 = vmul.f32 %v3071, %v3237
        %v3289 = vmul.f32 %v3073, %v3237
        %v3290 = vmul.f32 %v3075, %v3238
        %v3291 = vmul.f32 %v3077, %v3238
        %v3292 = vmul.f32 %v3079, %v3239
        %v3293 = vmul.f32 %v3081, %v3239
        %v3294 = vmul.f32 %v3083, %v3240
        %v3295 = vmul.f32 %v3085, %v3240
        %v3296 = vmul.f32 %v3087, %v3241
        %v3297 = vmul.f32 %v3089, %v3241
        %v3298 = vmul.f32 %v3091, %v3242
        %v3299 = vmul.f32 %v3093, %v3242
        %v3300 = vmul.f32 %v3095, %v3243
        %v3301 = vmul.f32 %v3097, %v3243
        %v3302 = vmul.f32 %v3099, %v3244
        %v3303 = vmul.f32 %v3101, %v3244
        %v3304 = vmul.f32 %v3103, %v3245
        %v3305 = vmul.f32 %v3105, %v3245
        %v3306 = vmul.f32 %v3107, %v3246
        %v3307 = vmul.f32 %v3109, %v3246
        %v3308 = vmul.f32 %v3111, %v3247
        %v3309 = vmul.f32 %v3113, %v3247
        %v3310 = vmul.f32 %v3115, %v3248
        %v3311 = vmul.f32 %v3117, %v3248
        %v3312 = vmul.f32 %v3119, %v3249
        %v3313 = vmul.f32 %v3121, %v3249
        %v3314 = vpack.c.bf16 %v3252, %v3250
        %v3315 = vpack.c.bf16 %v3253, %v3251
        %v3316 = vpack.c.bf16 %v3256, %v3254
        %v3317 = vpack.c.bf16 %v3257, %v3255
        %v3318 = vpack.c.bf16 %v3260, %v3258
        %v3319 = vpack.c.bf16 %v3261, %v3259
        %v3320 = vpack.c.bf16 %v3264, %v3262
        %v3321 = vpack.c.bf16 %v3265, %v3263
        %v3322 = vpack.c.bf16 %v3268, %v3266
        %v3323 = vpack.c.bf16 %v3269, %v3267
        %v3324 = vpack.c.bf16 %v3272, %v3270
        %v3325 = vpack.c.bf16 %v3273, %v3271
        %v3326 = vpack.c.bf16 %v3276, %v3274
        %v3327 = vpack.c.bf16 %v3277, %v3275
        %v3328 = vpack.c.bf16 %v3280, %v3278
        %v3329 = vpack.c.bf16 %v3281, %v3279
        %v3330 = vpack.c.bf16 %v3284, %v3282
        %v3331 = vpack.c.bf16 %v3285, %v3283
        %v3332 = vpack.c.bf16 %v3288, %v3286
        %v3333 = vpack.c.bf16 %v3289, %v3287
        %v3334 = vpack.c.bf16 %v3292, %v3290
        %v3335 = vpack.c.bf16 %v3293, %v3291
        %v3336 = vpack.c.bf16 %v3296, %v3294
        %v3337 = vpack.c.bf16 %v3297, %v3295
        %v3338 = vpack.c.bf16 %v3300, %v3298
        %v3339 = vpack.c.bf16 %v3301, %v3299
        %v3340 = vpack.c.bf16 %v3304, %v3302
        %v3341 = vpack.c.bf16 %v3305, %v3303
        %v3342 = vpack.c.bf16 %v3308, %v3306
        %v3343 = vpack.c.bf16 %v3309, %v3307
        %v3344 = vpack.c.bf16 %v3312, %v3310
        %v3345 = vpack.c.bf16 %v3313, %v3311
        %3346 = vrot.lane.b32.xlu0 %v2201, 96
        %v3347 = vpop.permute.xlu0 %3346
        %3348 = vrot.lane.b32.xlu0 %v2202, 96
        %v3349 = vpop.permute.xlu0 %3348
        %3350 = vrot.lane.b32.xlu0 %v2203, 96
        %v3351 = vpop.permute.xlu0 %3350
        %3352 = vrot.lane.b32.xlu0 %v2204, 96
        %v3353 = vpop.permute.xlu0 %3352
        %3354 = vrot.lane.b32.xlu0 %v2205, 96
        %v3355 = vpop.permute.xlu0 %3354
        %3356 = vrot.lane.b32.xlu0 %v2206, 96
        %v3357 = vpop.permute.xlu0 %3356
        %3358 = vrot.lane.b32.xlu0 %v2207, 96
        %v3359 = vpop.permute.xlu0 %3358
        %3360 = vrot.lane.b32.xlu0 %v2208, 96
        %v3361 = vpop.permute.xlu0 %3360
        %3362 = vrot.lane.b32.xlu0 %v2209, 96
        %v3363 = vpop.permute.xlu0 %3362
        %3364 = vrot.lane.b32.xlu0 %v2210, 96
        %v3365 = vpop.permute.xlu0 %3364
        %3366 = vrot.lane.b32.xlu0 %v2211, 96
        %v3367 = vpop.permute.xlu0 %3366
        %3368 = vrot.lane.b32.xlu0 %v2212, 96
        %v3369 = vpop.permute.xlu0 %3368
        %3370 = vrot.lane.b32.xlu0 %v2213, 96
        %v3371 = vpop.permute.xlu0 %3370
        %3372 = vrot.lane.b32.xlu0 %v2214, 96
        %v3373 = vpop.permute.xlu0 %3372
        %3374 = vrot.lane.b32.xlu0 %v2215, 96
        %v3375 = vpop.permute.xlu0 %3374
        %3376 = vrot.lane.b32.xlu0 %v2216, 96
        %v3377 = vpop.permute.xlu0 %3376
        %3394 = vmatpush.bf16.msra.mxu0 %v3361
        %3395 = vmatpush.bf16.msra.mxu0 %v3359
        %3396 = vmatpush.bf16.msra.mxu0 %v3357
        %3397 = vmatpush.bf16.msra.mxu0 %v3355
        %3398 = vmatpush.bf16.msra.mxu0 %v3353
        %3399 = vmatpush.bf16.msra.mxu0 %v3351
        %3400 = vmatpush.bf16.msra.mxu0 %v3349
        %3401 = vmatpush.bf16.msra.mxu0 %v3347
        %3402 = vmatmul.bf16.gmra.mxu0 %v3314
        %v3403 = vpop.f32.mrf.mxu0
        %v3404 = vadd.f32 0.0, %v3403
        %v3405 = vpop.f32.mrf.mxu0
        %v3406 = vadd.f32 0.0, %v3405
        %3407 = vmatmul.bf16.gmra.mxu0 %v3316
        %v3408 = vpop.f32.mrf.mxu0
        %v3409 = vadd.f32 0.0, %v3408
        %v3410 = vpop.f32.mrf.mxu0
        %v3411 = vadd.f32 0.0, %v3410
        %3412 = vmatmul.bf16.gmra.mxu0 %v3318
        %v3413 = vpop.f32.mrf.mxu0
        %v3414 = vadd.f32 0.0, %v3413
        %v3415 = vpop.f32.mrf.mxu0
        %v3416 = vadd.f32 0.0, %v3415
        %3417 = vmatmul.bf16.gmra.mxu0 %v3320
        %v3418 = vpop.f32.mrf.mxu0
        %v3419 = vadd.f32 0.0, %v3418
        %v3420 = vpop.f32.mrf.mxu0
        %v3421 = vadd.f32 0.0, %v3420
        %3422 = vmatmul.bf16.gmra.mxu0 %v3322
        %v3423 = vpop.f32.mrf.mxu0
        %v3424 = vadd.f32 0.0, %v3423
        %v3425 = vpop.f32.mrf.mxu0
        %v3426 = vadd.f32 0.0, %v3425
        %3427 = vmatmul.bf16.gmra.mxu0 %v3324
        %v3428 = vpop.f32.mrf.mxu0
        %v3429 = vadd.f32 0.0, %v3428
        %v3430 = vpop.f32.mrf.mxu0
        %v3431 = vadd.f32 0.0, %v3430
        %3432 = vmatmul.bf16.gmra.mxu0 %v3326
        %v3433 = vpop.f32.mrf.mxu0
        %v3434 = vadd.f32 0.0, %v3433
        %v3435 = vpop.f32.mrf.mxu0
        %v3436 = vadd.f32 0.0, %v3435
        %3437 = vmatmul.bf16.gmra.mxu0 %v3328
        %v3438 = vpop.f32.mrf.mxu0
        %v3439 = vadd.f32 0.0, %v3438
        %v3440 = vpop.f32.mrf.mxu0
        %v3441 = vadd.f32 0.0, %v3440
        %3442 = vmatmul.bf16.gmra.mxu0 %v3330
        %v3443 = vpop.f32.mrf.mxu0
        %v3444 = vadd.f32 0.0, %v3443
        %v3445 = vpop.f32.mrf.mxu0
        %v3446 = vadd.f32 0.0, %v3445
        %3447 = vmatmul.bf16.gmra.mxu0 %v3332
        %v3448 = vpop.f32.mrf.mxu0
        %v3449 = vadd.f32 0.0, %v3448
        %v3450 = vpop.f32.mrf.mxu0
        %v3451 = vadd.f32 0.0, %v3450
        %3452 = vmatmul.bf16.gmra.mxu0 %v3334
        %v3453 = vpop.f32.mrf.mxu0
        %v3454 = vadd.f32 0.0, %v3453
        %v3455 = vpop.f32.mrf.mxu0
        %v3456 = vadd.f32 0.0, %v3455
        %3457 = vmatmul.bf16.gmra.mxu0 %v3336
        %v3458 = vpop.f32.mrf.mxu0
        %v3459 = vadd.f32 0.0, %v3458
        %v3460 = vpop.f32.mrf.mxu0
        %v3461 = vadd.f32 0.0, %v3460
        %3462 = vmatmul.bf16.gmra.mxu0 %v3338
        %v3463 = vpop.f32.mrf.mxu0
        %v3464 = vadd.f32 0.0, %v3463
        %v3465 = vpop.f32.mrf.mxu0
        %v3466 = vadd.f32 0.0, %v3465
        %3467 = vmatmul.bf16.gmra.mxu0 %v3340
        %v3468 = vpop.f32.mrf.mxu0
        %v3469 = vadd.f32 0.0, %v3468
        %v3470 = vpop.f32.mrf.mxu0
        %v3471 = vadd.f32 0.0, %v3470
        %3472 = vmatmul.bf16.gmra.mxu0 %v3342
        %v3473 = vpop.f32.mrf.mxu0
        %v3474 = vadd.f32 0.0, %v3473
        %v3475 = vpop.f32.mrf.mxu0
        %v3476 = vadd.f32 0.0, %v3475
        %3477 = vmatmul.bf16.gmra.mxu0 %v3344
        %v3478 = vpop.f32.mrf.mxu0
        %v3479 = vadd.f32 0.0, %v3478
        %v3480 = vpop.f32.mrf.mxu0
        %v3481 = vadd.f32 0.0, %v3480
        %3482 = vdwg.mxu0
        %3483 = vmatpush.bf16.msra.mxu0 %v3377
        %3484 = vmatpush.bf16.msra.mxu0 %v3375
        %3485 = vmatpush.bf16.msra.mxu0 %v3373
        %3486 = vmatpush.bf16.msra.mxu0 %v3371
        %3487 = vmatpush.bf16.msra.mxu0 %v3369
        %3488 = vmatpush.bf16.msra.mxu0 %v3367
        %3489 = vmatpush.bf16.msra.mxu0 %v3365
        %3490 = vmatpush.bf16.msra.mxu0 %v3363
        %3491 = vmatmul.bf16.gmra.mxu0 %v3315
        %v3492 = vpop.f32.mrf.mxu0
        %v3493 = vadd.f32 %v3404, %v3492
        %v3494 = vpop.f32.mrf.mxu0
        %v3495 = vadd.f32 %v3406, %v3494
        %3496 = vmatmul.bf16.gmra.mxu0 %v3317
        %v3497 = vpop.f32.mrf.mxu0
        %v3498 = vadd.f32 %v3409, %v3497
        %v3499 = vpop.f32.mrf.mxu0
        %v3500 = vadd.f32 %v3411, %v3499
        %3501 = vmatmul.bf16.gmra.mxu0 %v3319
        %v3502 = vpop.f32.mrf.mxu0
        %v3503 = vadd.f32 %v3414, %v3502
        %v3504 = vpop.f32.mrf.mxu0
        %v3505 = vadd.f32 %v3416, %v3504
        %3506 = vmatmul.bf16.gmra.mxu0 %v3321
        %v3507 = vpop.f32.mrf.mxu0
        %v3508 = vadd.f32 %v3419, %v3507
        %v3509 = vpop.f32.mrf.mxu0
        %v3510 = vadd.f32 %v3421, %v3509
        %3511 = vmatmul.bf16.gmra.mxu0 %v3323
        %v3512 = vpop.f32.mrf.mxu0
        %v3513 = vadd.f32 %v3424, %v3512
        %v3514 = vpop.f32.mrf.mxu0
        %v3515 = vadd.f32 %v3426, %v3514
        %3516 = vmatmul.bf16.gmra.mxu0 %v3325
        %v3517 = vpop.f32.mrf.mxu0
        %v3518 = vadd.f32 %v3429, %v3517
        %v3519 = vpop.f32.mrf.mxu0
        %v3520 = vadd.f32 %v3431, %v3519
        %3521 = vmatmul.bf16.gmra.mxu0 %v3327
        %v3522 = vpop.f32.mrf.mxu0
        %v3523 = vadd.f32 %v3434, %v3522
        %v3524 = vpop.f32.mrf.mxu0
        %v3525 = vadd.f32 %v3436, %v3524
        %3526 = vmatmul.bf16.gmra.mxu0 %v3329
        %v3527 = vpop.f32.mrf.mxu0
        %v3528 = vadd.f32 %v3439, %v3527
        %v3529 = vpop.f32.mrf.mxu0
        %v3530 = vadd.f32 %v3441, %v3529
        %3531 = vmatmul.bf16.gmra.mxu0 %v3331
        %v3532 = vpop.f32.mrf.mxu0
        %v3533 = vadd.f32 %v3444, %v3532
        %v3534 = vpop.f32.mrf.mxu0
        %v3535 = vadd.f32 %v3446, %v3534
        %3536 = vmatmul.bf16.gmra.mxu0 %v3333
        %v3537 = vpop.f32.mrf.mxu0
        %v3538 = vadd.f32 %v3449, %v3537
        %v3539 = vpop.f32.mrf.mxu0
        %v3540 = vadd.f32 %v3451, %v3539
        %3541 = vmatmul.bf16.gmra.mxu0 %v3335
        %v3542 = vpop.f32.mrf.mxu0
        %v3543 = vadd.f32 %v3454, %v3542
        %v3544 = vpop.f32.mrf.mxu0
        %v3545 = vadd.f32 %v3456, %v3544
        %3546 = vmatmul.bf16.gmra.mxu0 %v3337
        %v3547 = vpop.f32.mrf.mxu0
        %v3548 = vadd.f32 %v3459, %v3547
        %v3549 = vpop.f32.mrf.mxu0
        %v3550 = vadd.f32 %v3461, %v3549
        %3551 = vmatmul.bf16.gmra.mxu0 %v3339
        %v3552 = vpop.f32.mrf.mxu0
        %v3553 = vadd.f32 %v3464, %v3552
        %v3554 = vpop.f32.mrf.mxu0
        %v3555 = vadd.f32 %v3466, %v3554
        %3556 = vmatmul.bf16.gmra.mxu0 %v3341
        %v3557 = vpop.f32.mrf.mxu0
        %v3558 = vadd.f32 %v3469, %v3557
        %v3559 = vpop.f32.mrf.mxu0
        %v3560 = vadd.f32 %v3471, %v3559
        %3561 = vmatmul.bf16.gmra.mxu0 %v3343
        %v3562 = vpop.f32.mrf.mxu0
        %v3563 = vadd.f32 %v3474, %v3562
        %v3564 = vpop.f32.mrf.mxu0
        %v3565 = vadd.f32 %v3476, %v3564
        %3566 = vmatmul.bf16.gmra.mxu0 %v3345
        %v3567 = vpop.f32.mrf.mxu0
        %v3568 = vadd.f32 %v3479, %v3567
        %v3569 = vpop.f32.mrf.mxu0
        %v3570 = vadd.f32 %v3481, %v3569
        %3571 = vdwg.mxu0
        %v3572 = vpack.c.bf16 %v3495, %v3493
        %v3573 = vpack.c.bf16 %v3500, %v3498
        %v3574 = vpack.c.bf16 %v3505, %v3503
        %v3575 = vpack.c.bf16 %v3510, %v3508
        %v3576 = vpack.c.bf16 %v3515, %v3513
        %v3577 = vpack.c.bf16 %v3520, %v3518
        %v3578 = vpack.c.bf16 %v3525, %v3523
        %v3579 = vpack.c.bf16 %v3530, %v3528
        %v3580 = vpack.c.bf16 %v3535, %v3533
        %v3581 = vpack.c.bf16 %v3540, %v3538
        %v3582 = vpack.c.bf16 %v3545, %v3543
        %v3583 = vpack.c.bf16 %v3550, %v3548
        %v3584 = vpack.c.bf16 %v3555, %v3553
        %v3585 = vpack.c.bf16 %v3560, %v3558
        %v3586 = vpack.c.bf16 %v3565, %v3563
        %v3587 = vpack.c.bf16 %v3570, %v3568
        %v3588 = vld [vmem:[#allocation9 + $0x10] sm:$0xf]
        %v3589 = vld [vmem:[#allocation9 + $0x14] sm:$0xf]
        %v3590 = vld [vmem:[#allocation9 + $0x18] sm:$0xf]
        %v3591 = vld [vmem:[#allocation9 + $0x1c] sm:$0xf]
        %v3596 = vunpack.c.l.b16 %v3588
        %v3597 = vunpack.c.l.b16 %v3589
        %v3598 = vunpack.c.l.b16 %v3590
        %v3599 = vunpack.c.l.b16 %v3591
        %v3600 = vpack.c.b16 %v3597, %v3596
        %v3601 = vpack.c.b16 %v3599, %v3598
        %v3605 = vsel %vm1350, %v3572, 0
        %v3608 = vsel %vm1350, %v3573, 0
        %v3611 = vsel %vm1350, %v3574, 0
        %v3614 = vsel %vm1350, %v3575, 0
        %v3617 = vsel %vm1350, %v3576, 0
        %v3620 = vsel %vm1350, %v3577, 0
        %v3623 = vsel %vm1350, %v3578, 0
        %v3626 = vsel %vm1350, %v3579, 0
        %v3629 = vsel %vm1350, %v3580, 0
        %v3632 = vsel %vm1350, %v3581, 0
        %v3635 = vsel %vm1350, %v3582, 0
        %v3638 = vsel %vm1350, %v3583, 0
        %v3641 = vsel %vm1350, %v3584, 0
        %v3644 = vsel %vm1350, %v3585, 0
        %v3647 = vsel %vm1350, %v3586, 0
        %v3650 = vsel %vm1350, %v3587, 0
        %3652 = vmatpush.bf16.msra.mxu0 0
        %3653 = vmatpush.bf16.msra.mxu0 0
        %3654 = vmatpush.bf16.msra.mxu0 0
        %3655 = vmatpush.bf16.msra.mxu0 0
        %3656 = vmatpush.bf16.msra.mxu0 0
        %3657 = vmatpush.bf16.msra.mxu0 0
        %3658 = vmatpush.bf16.msra.mxu0 %v3601
        %3659 = vmatpush.bf16.msra.mxu0 %v3600
        %3660 = vmatmul.bf16.gmra.mxu0 %v3605
        %v3661 = vpop.f32.mrf.mxu0
        %v3662 = vadd.f32 0.0, %v3661
        %v3663 = vpop.f32.mrf.mxu0
        %v3664 = vadd.f32 0.0, %v3663
        %3665 = vmatmul.bf16.gmra.mxu0 %v3608
        %v3666 = vpop.f32.mrf.mxu0
        %v3667 = vadd.f32 0.0, %v3666
        %v3668 = vpop.f32.mrf.mxu0
        %v3669 = vadd.f32 0.0, %v3668
        %3670 = vmatmul.bf16.gmra.mxu0 %v3611
        %v3671 = vpop.f32.mrf.mxu0
        %v3672 = vadd.f32 0.0, %v3671
        %v3673 = vpop.f32.mrf.mxu0
        %v3674 = vadd.f32 0.0, %v3673
        %3675 = vmatmul.bf16.gmra.mxu0 %v3614
        %v3676 = vpop.f32.mrf.mxu0
        %v3677 = vadd.f32 0.0, %v3676
        %v3678 = vpop.f32.mrf.mxu0
        %v3679 = vadd.f32 0.0, %v3678
        %3680 = vmatmul.bf16.gmra.mxu0 %v3617
        %v3681 = vpop.f32.mrf.mxu0
        %v3682 = vadd.f32 0.0, %v3681
        %v3683 = vpop.f32.mrf.mxu0
        %v3684 = vadd.f32 0.0, %v3683
        %3685 = vmatmul.bf16.gmra.mxu0 %v3620
        %v3686 = vpop.f32.mrf.mxu0
        %v3687 = vadd.f32 0.0, %v3686
        %v3688 = vpop.f32.mrf.mxu0
        %v3689 = vadd.f32 0.0, %v3688
        %3690 = vmatmul.bf16.gmra.mxu0 %v3623
        %v3691 = vpop.f32.mrf.mxu0
        %v3692 = vadd.f32 0.0, %v3691
        %v3693 = vpop.f32.mrf.mxu0
        %v3694 = vadd.f32 0.0, %v3693
        %3695 = vmatmul.bf16.gmra.mxu0 %v3626
        %v3696 = vpop.f32.mrf.mxu0
        %v3697 = vadd.f32 0.0, %v3696
        %v3698 = vpop.f32.mrf.mxu0
        %v3699 = vadd.f32 0.0, %v3698
        %3700 = vmatmul.bf16.gmra.mxu0 %v3629
        %v3701 = vpop.f32.mrf.mxu0
        %v3702 = vadd.f32 0.0, %v3701
        %v3703 = vpop.f32.mrf.mxu0
        %v3704 = vadd.f32 0.0, %v3703
        %3705 = vmatmul.bf16.gmra.mxu0 %v3632
        %v3706 = vpop.f32.mrf.mxu0
        %v3707 = vadd.f32 0.0, %v3706
        %v3708 = vpop.f32.mrf.mxu0
        %v3709 = vadd.f32 0.0, %v3708
        %3710 = vmatmul.bf16.gmra.mxu0 %v3635
        %v3711 = vpop.f32.mrf.mxu0
        %v3712 = vadd.f32 0.0, %v3711
        %v3713 = vpop.f32.mrf.mxu0
        %v3714 = vadd.f32 0.0, %v3713
        %3715 = vmatmul.bf16.gmra.mxu0 %v3638
        %v3716 = vpop.f32.mrf.mxu0
        %v3717 = vadd.f32 0.0, %v3716
        %v3718 = vpop.f32.mrf.mxu0
        %v3719 = vadd.f32 0.0, %v3718
        %3720 = vmatmul.bf16.gmra.mxu0 %v3641
        %v3721 = vpop.f32.mrf.mxu0
        %v3722 = vadd.f32 0.0, %v3721
        %v3723 = vpop.f32.mrf.mxu0
        %v3724 = vadd.f32 0.0, %v3723
        %3725 = vmatmul.bf16.gmra.mxu0 %v3644
        %v3726 = vpop.f32.mrf.mxu0
        %v3727 = vadd.f32 0.0, %v3726
        %v3728 = vpop.f32.mrf.mxu0
        %v3729 = vadd.f32 0.0, %v3728
        %3730 = vmatmul.bf16.gmra.mxu0 %v3647
        %v3731 = vpop.f32.mrf.mxu0
        %v3732 = vadd.f32 0.0, %v3731
        %v3733 = vpop.f32.mrf.mxu0
        %v3734 = vadd.f32 0.0, %v3733
        %3735 = vmatmul.bf16.gmra.mxu0 %v3650
        %v3736 = vpop.f32.mrf.mxu0
        %v3737 = vadd.f32 0.0, %v3736
        %v3738 = vpop.f32.mrf.mxu0
        %v3739 = vadd.f32 0.0, %v3738
        %3740 = vdwg.mxu0
        %v3745 = vunpack.c.l.b16 %v2427
        %v3746 = vunpack.c.l.b16 %v2428
        %v3747 = vunpack.c.l.b16 %v2429
        %v3748 = vunpack.c.l.b16 %v2430
        %v3749 = vpack.c.b16 %v3746, %v3745
        %v3750 = vpack.c.b16 %v3748, %v3747
        %v3754 = vsel %vm1350, %v2411, 0
        %v3757 = vsel %vm1350, %v2412, 0
        %v3760 = vsel %vm1350, %v2413, 0
        %v3763 = vsel %vm1350, %v2414, 0
        %v3766 = vsel %vm1350, %v2415, 0
        %v3769 = vsel %vm1350, %v2416, 0
        %v3772 = vsel %vm1350, %v2417, 0
        %v3775 = vsel %vm1350, %v2418, 0
        %v3778 = vsel %vm1350, %v2419, 0
        %v3781 = vsel %vm1350, %v2420, 0
        %v3784 = vsel %vm1350, %v2421, 0
        %v3787 = vsel %vm1350, %v2422, 0
        %v3790 = vsel %vm1350, %v2423, 0
        %v3793 = vsel %vm1350, %v2424, 0
        %v3796 = vsel %vm1350, %v2425, 0
        %v3799 = vsel %vm1350, %v2426, 0
        %3801 = vmatpush.bf16.msra.mxu0 0
        %3802 = vmatpush.bf16.msra.mxu0 0
        %3803 = vmatpush.bf16.msra.mxu0 0
        %3804 = vmatpush.bf16.msra.mxu0 0
        %3805 = vmatpush.bf16.msra.mxu0 0
        %3806 = vmatpush.bf16.msra.mxu0 0
        %3807 = vmatpush.bf16.msra.mxu0 %v3750
        %3808 = vmatpush.bf16.msra.mxu0 %v3749
        %3809 = vmatmul.bf16.gmra.mxu0 %v3754
        %v3810 = vpop.f32.mrf.mxu0
        %v3811 = vadd.f32 %v3662, %v3810
        %v3812 = vpop.f32.mrf.mxu0
        %v3813 = vadd.f32 %v3664, %v3812
        %3814 = vmatmul.bf16.gmra.mxu0 %v3757
        %v3815 = vpop.f32.mrf.mxu0
        %v3816 = vadd.f32 %v3667, %v3815
        %v3817 = vpop.f32.mrf.mxu0
        %v3818 = vadd.f32 %v3669, %v3817
        %3819 = vmatmul.bf16.gmra.mxu0 %v3760
        %v3820 = vpop.f32.mrf.mxu0
        %v3821 = vadd.f32 %v3672, %v3820
        %v3822 = vpop.f32.mrf.mxu0
        %v3823 = vadd.f32 %v3674, %v3822
        %3824 = vmatmul.bf16.gmra.mxu0 %v3763
        %v3825 = vpop.f32.mrf.mxu0
        %v3826 = vadd.f32 %v3677, %v3825
        %v3827 = vpop.f32.mrf.mxu0
        %v3828 = vadd.f32 %v3679, %v3827
        %3829 = vmatmul.bf16.gmra.mxu0 %v3766
        %v3830 = vpop.f32.mrf.mxu0
        %v3831 = vadd.f32 %v3682, %v3830
        %v3832 = vpop.f32.mrf.mxu0
        %v3833 = vadd.f32 %v3684, %v3832
        %3834 = vmatmul.bf16.gmra.mxu0 %v3769
        %v3835 = vpop.f32.mrf.mxu0
        %v3836 = vadd.f32 %v3687, %v3835
        %v3837 = vpop.f32.mrf.mxu0
        %v3838 = vadd.f32 %v3689, %v3837
        %3839 = vmatmul.bf16.gmra.mxu0 %v3772
        %v3840 = vpop.f32.mrf.mxu0
        %v3841 = vadd.f32 %v3692, %v3840
        %v3842 = vpop.f32.mrf.mxu0
        %v3843 = vadd.f32 %v3694, %v3842
        %3844 = vmatmul.bf16.gmra.mxu0 %v3775
        %v3845 = vpop.f32.mrf.mxu0
        %v3846 = vadd.f32 %v3697, %v3845
        %v3847 = vpop.f32.mrf.mxu0
        %v3848 = vadd.f32 %v3699, %v3847
        %3849 = vmatmul.bf16.gmra.mxu0 %v3778
        %v3850 = vpop.f32.mrf.mxu0
        %v3851 = vadd.f32 %v3702, %v3850
        %v3852 = vpop.f32.mrf.mxu0
        %v3853 = vadd.f32 %v3704, %v3852
        %3854 = vmatmul.bf16.gmra.mxu0 %v3781
        %v3855 = vpop.f32.mrf.mxu0
        %v3856 = vadd.f32 %v3707, %v3855
        %v3857 = vpop.f32.mrf.mxu0
        %v3858 = vadd.f32 %v3709, %v3857
        %3859 = vmatmul.bf16.gmra.mxu0 %v3784
        %v3860 = vpop.f32.mrf.mxu0
        %v3861 = vadd.f32 %v3712, %v3860
        %v3862 = vpop.f32.mrf.mxu0
        %v3863 = vadd.f32 %v3714, %v3862
        %3864 = vmatmul.bf16.gmra.mxu0 %v3787
        %v3865 = vpop.f32.mrf.mxu0
        %v3866 = vadd.f32 %v3717, %v3865
        %v3867 = vpop.f32.mrf.mxu0
        %v3868 = vadd.f32 %v3719, %v3867
        %3869 = vmatmul.bf16.gmra.mxu0 %v3790
        %v3870 = vpop.f32.mrf.mxu0
        %v3871 = vadd.f32 %v3722, %v3870
        %v3872 = vpop.f32.mrf.mxu0
        %v3873 = vadd.f32 %v3724, %v3872
        %3874 = vmatmul.bf16.gmra.mxu0 %v3793
        %v3875 = vpop.f32.mrf.mxu0
        %v3876 = vadd.f32 %v3727, %v3875
        %v3877 = vpop.f32.mrf.mxu0
        %v3878 = vadd.f32 %v3729, %v3877
        %3879 = vmatmul.bf16.gmra.mxu0 %v3796
        %v3880 = vpop.f32.mrf.mxu0
        %v3881 = vadd.f32 %v3732, %v3880
        %v3882 = vpop.f32.mrf.mxu0
        %v3883 = vadd.f32 %v3734, %v3882
        %3884 = vmatmul.bf16.gmra.mxu0 %v3799
        %v3885 = vpop.f32.mrf.mxu0
        %v3886 = vadd.f32 %v3737, %v3885
        %v3887 = vpop.f32.mrf.mxu0
        %v3888 = vadd.f32 %v3739, %v3887
        %3889 = vdwg.mxu0
        %s3890 = scalar_lea.vmem [#allocation11], 1024
        %v3891 = vld [vmem:[%s3890] sm:$0xff]
        %v3892 = vld [vmem:[%s3890 + $0x8] sm:$0xff]
        %v3893 = vld [vmem:[%s3890 + $0x10] sm:$0xff]
        %v3894 = vld [vmem:[%s3890 + $0x18] sm:$0xff]
        %v3895 = vld [vmem:[%s3890 + $0x20] sm:$0xff]
        %v3896 = vld [vmem:[%s3890 + $0x28] sm:$0xff]
        %v3897 = vld [vmem:[%s3890 + $0x30] sm:$0xff]
        %v3898 = vld [vmem:[%s3890 + $0x38] sm:$0xff]
        %v3899 = vld [vmem:[%s3890 + $0x40] sm:$0xff]
        %v3900 = vld [vmem:[%s3890 + $0x48] sm:$0xff]
        %v3901 = vld [vmem:[%s3890 + $0x50] sm:$0xff]
        %v3902 = vld [vmem:[%s3890 + $0x58] sm:$0xff]
        %v3903 = vld [vmem:[%s3890 + $0x60] sm:$0xff]
        %v3904 = vld [vmem:[%s3890 + $0x68] sm:$0xff]
        %v3905 = vld [vmem:[%s3890 + $0x70] sm:$0xff]
        %v3906 = vld [vmem:[%s3890 + $0x78] sm:$0xff]
        %v3907 = vld [vmem:[%s3890 + $0x80] sm:$0xff]
        %v3908 = vld [vmem:[%s3890 + $0x88] sm:$0xff]
        %v3909 = vld [vmem:[%s3890 + $0x90] sm:$0xff]
        %v3910 = vld [vmem:[%s3890 + $0x98] sm:$0xff]
        %v3911 = vld [vmem:[%s3890 + $0xa0] sm:$0xff]
        %v3912 = vld [vmem:[%s3890 + $0xa8] sm:$0xff]
        %v3913 = vld [vmem:[%s3890 + $0xb0] sm:$0xff]
        %v3914 = vld [vmem:[%s3890 + $0xb8] sm:$0xff]
        %v3915 = vld [vmem:[%s3890 + $0xc0] sm:$0xff]
        %v3916 = vld [vmem:[%s3890 + $0xc8] sm:$0xff]
        %v3917 = vld [vmem:[%s3890 + $0xd0] sm:$0xff]
        %v3918 = vld [vmem:[%s3890 + $0xd8] sm:$0xff]
        %v3919 = vld [vmem:[%s3890 + $0xe0] sm:$0xff]
        %v3920 = vld [vmem:[%s3890 + $0xe8] sm:$0xff]
        %v3921 = vld [vmem:[%s3890 + $0xf0] sm:$0xff]
        %v3922 = vld [vmem:[%s3890 + $0xf8] sm:$0xff]
        %v3923 = vld [vmem:[%s3890 + $0x100] sm:$0xff]
        %v3924 = vld [vmem:[%s3890 + $0x108] sm:$0xff]
        %v3925 = vld [vmem:[%s3890 + $0x110] sm:$0xff]
        %v3926 = vld [vmem:[%s3890 + $0x118] sm:$0xff]
        %v3927 = vld [vmem:[%s3890 + $0x120] sm:$0xff]
        %v3928 = vld [vmem:[%s3890 + $0x128] sm:$0xff]
        %v3929 = vld [vmem:[%s3890 + $0x130] sm:$0xff]
        %v3930 = vld [vmem:[%s3890 + $0x138] sm:$0xff]
        %v3931 = vld [vmem:[%s3890 + $0x140] sm:$0xff]
        %v3932 = vld [vmem:[%s3890 + $0x148] sm:$0xff]
        %v3933 = vld [vmem:[%s3890 + $0x150] sm:$0xff]
        %v3934 = vld [vmem:[%s3890 + $0x158] sm:$0xff]
        %v3935 = vld [vmem:[%s3890 + $0x160] sm:$0xff]
        %v3936 = vld [vmem:[%s3890 + $0x168] sm:$0xff]
        %v3937 = vld [vmem:[%s3890 + $0x170] sm:$0xff]
        %v3938 = vld [vmem:[%s3890 + $0x178] sm:$0xff]
        %v3939 = vld [vmem:[%s3890 + $0x180] sm:$0xff]
        %v3940 = vld [vmem:[%s3890 + $0x188] sm:$0xff]
        %v3941 = vld [vmem:[%s3890 + $0x190] sm:$0xff]
        %v3942 = vld [vmem:[%s3890 + $0x198] sm:$0xff]
        %v3943 = vld [vmem:[%s3890 + $0x1a0] sm:$0xff]
        %v3944 = vld [vmem:[%s3890 + $0x1a8] sm:$0xff]
        %v3945 = vld [vmem:[%s3890 + $0x1b0] sm:$0xff]
        %v3946 = vld [vmem:[%s3890 + $0x1b8] sm:$0xff]
        %v3947 = vld [vmem:[%s3890 + $0x1c0] sm:$0xff]
        %v3948 = vld [vmem:[%s3890 + $0x1c8] sm:$0xff]
        %v3949 = vld [vmem:[%s3890 + $0x1d0] sm:$0xff]
        %v3950 = vld [vmem:[%s3890 + $0x1d8] sm:$0xff]
        %v3951 = vld [vmem:[%s3890 + $0x1e0] sm:$0xff]
        %v3952 = vld [vmem:[%s3890 + $0x1e8] sm:$0xff]
        %v3953 = vld [vmem:[%s3890 + $0x1f0] sm:$0xff]
        %v3954 = vld [vmem:[%s3890 + $0x1f8] sm:$0xff]
        %3955 = vrot.lane.b32.xlu0 %v1254, 64
        %v3956 = vpop.permute.xlu0 %3955
        %3957 = vrot.lane.b32.xlu0 %v1255, 64
        %v3958 = vpop.permute.xlu0 %3957
        %3959 = vrot.lane.b32.xlu0 %v1256, 64
        %v3960 = vpop.permute.xlu0 %3959
        %3961 = vrot.lane.b32.xlu0 %v1257, 64
        %v3962 = vpop.permute.xlu0 %3961
        %3963 = vrot.lane.b32.xlu0 %v1258, 64
        %v3964 = vpop.permute.xlu0 %3963
        %3965 = vrot.lane.b32.xlu0 %v1259, 64
        %v3966 = vpop.permute.xlu0 %3965
        %3967 = vrot.lane.b32.xlu0 %v1260, 64
        %v3968 = vpop.permute.xlu0 %3967
        %3969 = vrot.lane.b32.xlu0 %v1261, 64
        %v3970 = vpop.permute.xlu0 %3969
        %3971 = vrot.lane.b32.xlu0 %v1262, 64
        %v3972 = vpop.permute.xlu0 %3971
        %3973 = vrot.lane.b32.xlu0 %v1263, 64
        %v3974 = vpop.permute.xlu0 %3973
        %3975 = vrot.lane.b32.xlu0 %v1264, 64
        %v3976 = vpop.permute.xlu0 %3975
        %3977 = vrot.lane.b32.xlu0 %v1265, 64
        %v3978 = vpop.permute.xlu0 %3977
        %3979 = vrot.lane.b32.xlu0 %v1266, 64
        %v3980 = vpop.permute.xlu0 %3979
        %3981 = vrot.lane.b32.xlu0 %v1267, 64
        %v3982 = vpop.permute.xlu0 %3981
        %3983 = vrot.lane.b32.xlu0 %v1268, 64
        %v3984 = vpop.permute.xlu0 %3983
        %3985 = vrot.lane.b32.xlu0 %v1269, 64
        %v3986 = vpop.permute.xlu0 %3985
        %3987 = vrot.lane.b32.xlu0 %v1334, 64
        %v3988 = vpop.permute.xlu0 %3987
        %3989 = vrot.lane.b32.xlu0 %v1335, 64
        %v3990 = vpop.permute.xlu0 %3989
        %3991 = vrot.lane.b32.xlu0 %v1336, 64
        %v3992 = vpop.permute.xlu0 %3991
        %3993 = vrot.lane.b32.xlu0 %v1337, 64
        %v3994 = vpop.permute.xlu0 %3993
        %3995 = vrot.lane.b32.xlu0 %v1338, 64
        %v3996 = vpop.permute.xlu0 %3995
        %3997 = vrot.lane.b32.xlu0 %v1339, 64
        %v3998 = vpop.permute.xlu0 %3997
        %3999 = vrot.lane.b32.xlu0 %v1340, 64
        %v4000 = vpop.permute.xlu0 %3999
        %4001 = vrot.lane.b32.xlu0 %v1341, 64
        %v4002 = vpop.permute.xlu0 %4001
        %4003 = vrot.lane.b32.xlu0 %v1342, 64
        %v4004 = vpop.permute.xlu0 %4003
        %4005 = vrot.lane.b32.xlu0 %v1343, 64
        %v4006 = vpop.permute.xlu0 %4005
        %4007 = vrot.lane.b32.xlu0 %v1344, 64
        %v4008 = vpop.permute.xlu0 %4007
        %4009 = vrot.lane.b32.xlu0 %v1345, 64
        %v4010 = vpop.permute.xlu0 %4009
        %4011 = vrot.lane.b32.xlu0 %v1346, 64
        %v4012 = vpop.permute.xlu0 %4011
        %4013 = vrot.lane.b32.xlu0 %v1347, 64
        %v4014 = vpop.permute.xlu0 %4013
        %4015 = vrot.lane.b32.xlu0 %v1348, 64
        %v4016 = vpop.permute.xlu0 %4015
        %4017 = vrot.lane.b32.xlu0 %v1349, 64
        %v4018 = vpop.permute.xlu0 %4017
        %v4020 = vsel %vm1350, %v3956, 0
        %v4023 = vsel %vm1350, %v3958, 0
        %v4026 = vsel %vm1350, %v3960, 0
        %v4029 = vsel %vm1350, %v3962, 0
        %v4032 = vsel %vm1350, %v3964, 0
        %v4035 = vsel %vm1350, %v3966, 0
        %v4038 = vsel %vm1350, %v3968, 0
        %v4041 = vsel %vm1350, %v3970, 0
        %v4044 = vsel %vm1350, %v3972, 0
        %v4047 = vsel %vm1350, %v3974, 0
        %v4050 = vsel %vm1350, %v3976, 0
        %v4053 = vsel %vm1350, %v3978, 0
        %v4056 = vsel %vm1350, %v3980, 0
        %v4059 = vsel %vm1350, %v3982, 0
        %v4062 = vsel %vm1350, %v3984, 0
        %v4065 = vsel %vm1350, %v3986, 0
        %v4068 = vsel %vm1350, %v3988, 0
        %v4071 = vsel %vm1350, %v3990, 0
        %v4074 = vsel %vm1350, %v3992, 0
        %v4077 = vsel %vm1350, %v3994, 0
        %v4080 = vsel %vm1350, %v3996, 0
        %v4083 = vsel %vm1350, %v3998, 0
        %v4086 = vsel %vm1350, %v4000, 0
        %v4089 = vsel %vm1350, %v4002, 0
        %v4092 = vsel %vm1350, %v4004, 0
        %v4095 = vsel %vm1350, %v4006, 0
        %v4098 = vsel %vm1350, %v4008, 0
        %v4101 = vsel %vm1350, %v4010, 0
        %v4104 = vsel %vm1350, %v4012, 0
        %v4107 = vsel %vm1350, %v4014, 0
        %v4110 = vsel %vm1350, %v4016, 0
        %v4113 = vsel %vm1350, %v4018, 0
        %4115 = vmatpush.bf16.xpose.msra.mxu0 %v4089
        %4116 = vmatpush.bf16.xpose.msra.mxu0 %v4086
        %4117 = vmatpush.bf16.xpose.msra.mxu0 %v4083
        %4118 = vmatpush.bf16.xpose.msra.mxu0 %v4080
        %4119 = vmatpush.bf16.xpose.msra.mxu0 %v4077
        %4120 = vmatpush.bf16.xpose.msra.mxu0 %v4074
        %4121 = vmatpush.bf16.xpose.msra.mxu0 %v4071
        %4122 = vmatpush.bf16.xpose.msra.mxu0 %v4068
        %4123 = vmatmul.bf16.gmra.mxu0 %v4020
        %v4124 = vpop.f32.mrf.mxu0
        %v4125 = vadd.f32 %v3891, %v4124
        %v4126 = vpop.f32.mrf.mxu0
        %v4127 = vadd.f32 %v3893, %v4126
        %4128 = vmatmul.bf16.gmra.mxu0 %v4023
        %v4129 = vpop.f32.mrf.mxu0
        %v4130 = vadd.f32 %v3895, %v4129
        %v4131 = vpop.f32.mrf.mxu0
        %v4132 = vadd.f32 %v3897, %v4131
        %4133 = vmatmul.bf16.gmra.mxu0 %v4026
        %v4134 = vpop.f32.mrf.mxu0
        %v4135 = vadd.f32 %v3899, %v4134
        %v4136 = vpop.f32.mrf.mxu0
        %v4137 = vadd.f32 %v3901, %v4136
        %4138 = vmatmul.bf16.gmra.mxu0 %v4029
        %v4139 = vpop.f32.mrf.mxu0
        %v4140 = vadd.f32 %v3903, %v4139
        %v4141 = vpop.f32.mrf.mxu0
        %v4142 = vadd.f32 %v3905, %v4141
        %4143 = vmatmul.bf16.gmra.mxu0 %v4032
        %v4144 = vpop.f32.mrf.mxu0
        %v4145 = vadd.f32 %v3907, %v4144
        %v4146 = vpop.f32.mrf.mxu0
        %v4147 = vadd.f32 %v3909, %v4146
        %4148 = vmatmul.bf16.gmra.mxu0 %v4035
        %v4149 = vpop.f32.mrf.mxu0
        %v4150 = vadd.f32 %v3911, %v4149
        %v4151 = vpop.f32.mrf.mxu0
        %v4152 = vadd.f32 %v3913, %v4151
        %4153 = vmatmul.bf16.gmra.mxu0 %v4038
        %v4154 = vpop.f32.mrf.mxu0
        %v4155 = vadd.f32 %v3915, %v4154
        %v4156 = vpop.f32.mrf.mxu0
        %v4157 = vadd.f32 %v3917, %v4156
        %4158 = vmatmul.bf16.gmra.mxu0 %v4041
        %v4159 = vpop.f32.mrf.mxu0
        %v4160 = vadd.f32 %v3919, %v4159
        %v4161 = vpop.f32.mrf.mxu0
        %v4162 = vadd.f32 %v3921, %v4161
        %4163 = vmatmul.bf16.gmra.mxu0 %v4044
        %v4164 = vpop.f32.mrf.mxu0
        %v4165 = vadd.f32 %v3923, %v4164
        %v4166 = vpop.f32.mrf.mxu0
        %v4167 = vadd.f32 %v3925, %v4166
        %4168 = vmatmul.bf16.gmra.mxu0 %v4047
        %v4169 = vpop.f32.mrf.mxu0
        %v4170 = vadd.f32 %v3927, %v4169
        %v4171 = vpop.f32.mrf.mxu0
        %v4172 = vadd.f32 %v3929, %v4171
        %4173 = vmatmul.bf16.gmra.mxu0 %v4050
        %v4174 = vpop.f32.mrf.mxu0
        %v4175 = vadd.f32 %v3931, %v4174
        %v4176 = vpop.f32.mrf.mxu0
        %v4177 = vadd.f32 %v3933, %v4176
        %4178 = vmatmul.bf16.gmra.mxu0 %v4053
        %v4179 = vpop.f32.mrf.mxu0
        %v4180 = vadd.f32 %v3935, %v4179
        %v4181 = vpop.f32.mrf.mxu0
        %v4182 = vadd.f32 %v3937, %v4181
        %4183 = vmatmul.bf16.gmra.mxu0 %v4056
        %v4184 = vpop.f32.mrf.mxu0
        %v4185 = vadd.f32 %v3939, %v4184
        %v4186 = vpop.f32.mrf.mxu0
        %v4187 = vadd.f32 %v3941, %v4186
        %4188 = vmatmul.bf16.gmra.mxu0 %v4059
        %v4189 = vpop.f32.mrf.mxu0
        %v4190 = vadd.f32 %v3943, %v4189
        %v4191 = vpop.f32.mrf.mxu0
        %v4192 = vadd.f32 %v3945, %v4191
        %4193 = vmatmul.bf16.gmra.mxu0 %v4062
        %v4194 = vpop.f32.mrf.mxu0
        %v4195 = vadd.f32 %v3947, %v4194
        %v4196 = vpop.f32.mrf.mxu0
        %v4197 = vadd.f32 %v3949, %v4196
        %4198 = vmatmul.bf16.gmra.mxu0 %v4065
        %v4199 = vpop.f32.mrf.mxu0
        %v4200 = vadd.f32 %v3951, %v4199
        %v4201 = vpop.f32.mrf.mxu0
        %v4202 = vadd.f32 %v3953, %v4201
        %4203 = vdwg.mxu0
        %4204 = vmatpush.bf16.xpose.msra.mxu0 %v4113
        %4205 = vmatpush.bf16.xpose.msra.mxu0 %v4110
        %4206 = vmatpush.bf16.xpose.msra.mxu0 %v4107
        %4207 = vmatpush.bf16.xpose.msra.mxu0 %v4104
        %4208 = vmatpush.bf16.xpose.msra.mxu0 %v4101
        %4209 = vmatpush.bf16.xpose.msra.mxu0 %v4098
        %4210 = vmatpush.bf16.xpose.msra.mxu0 %v4095
        %4211 = vmatpush.bf16.xpose.msra.mxu0 %v4092
        %4212 = vmatmul.bf16.gmra.mxu0 %v4020
        %v4213 = vpop.f32.mrf.mxu0
        %v4214 = vadd.f32 %v3892, %v4213
        %v4215 = vpop.f32.mrf.mxu0
        %v4216 = vadd.f32 %v3894, %v4215
        %4217 = vmatmul.bf16.gmra.mxu0 %v4023
        %v4218 = vpop.f32.mrf.mxu0
        %v4219 = vadd.f32 %v3896, %v4218
        %v4220 = vpop.f32.mrf.mxu0
        %v4221 = vadd.f32 %v3898, %v4220
        %4222 = vmatmul.bf16.gmra.mxu0 %v4026
        %v4223 = vpop.f32.mrf.mxu0
        %v4224 = vadd.f32 %v3900, %v4223
        %v4225 = vpop.f32.mrf.mxu0
        %v4226 = vadd.f32 %v3902, %v4225
        %4227 = vmatmul.bf16.gmra.mxu0 %v4029
        %v4228 = vpop.f32.mrf.mxu0
        %v4229 = vadd.f32 %v3904, %v4228
        %v4230 = vpop.f32.mrf.mxu0
        %v4231 = vadd.f32 %v3906, %v4230
        %4232 = vmatmul.bf16.gmra.mxu0 %v4032
        %v4233 = vpop.f32.mrf.mxu0
        %v4234 = vadd.f32 %v3908, %v4233
        %v4235 = vpop.f32.mrf.mxu0
        %v4236 = vadd.f32 %v3910, %v4235
        %4237 = vmatmul.bf16.gmra.mxu0 %v4035
        %v4238 = vpop.f32.mrf.mxu0
        %v4239 = vadd.f32 %v3912, %v4238
        %v4240 = vpop.f32.mrf.mxu0
        %v4241 = vadd.f32 %v3914, %v4240
        %4242 = vmatmul.bf16.gmra.mxu0 %v4038
        %v4243 = vpop.f32.mrf.mxu0
        %v4244 = vadd.f32 %v3916, %v4243
        %v4245 = vpop.f32.mrf.mxu0
        %v4246 = vadd.f32 %v3918, %v4245
        %4247 = vmatmul.bf16.gmra.mxu0 %v4041
        %v4248 = vpop.f32.mrf.mxu0
        %v4249 = vadd.f32 %v3920, %v4248
        %v4250 = vpop.f32.mrf.mxu0
        %v4251 = vadd.f32 %v3922, %v4250
        %4252 = vmatmul.bf16.gmra.mxu0 %v4044
        %v4253 = vpop.f32.mrf.mxu0
        %v4254 = vadd.f32 %v3924, %v4253
        %v4255 = vpop.f32.mrf.mxu0
        %v4256 = vadd.f32 %v3926, %v4255
        %4257 = vmatmul.bf16.gmra.mxu0 %v4047
        %v4258 = vpop.f32.mrf.mxu0
        %v4259 = vadd.f32 %v3928, %v4258
        %v4260 = vpop.f32.mrf.mxu0
        %v4261 = vadd.f32 %v3930, %v4260
        %4262 = vmatmul.bf16.gmra.mxu0 %v4050
        %v4263 = vpop.f32.mrf.mxu0
        %v4264 = vadd.f32 %v3932, %v4263
        %v4265 = vpop.f32.mrf.mxu0
        %v4266 = vadd.f32 %v3934, %v4265
        %4267 = vmatmul.bf16.gmra.mxu0 %v4053
        %v4268 = vpop.f32.mrf.mxu0
        %v4269 = vadd.f32 %v3936, %v4268
        %v4270 = vpop.f32.mrf.mxu0
        %v4271 = vadd.f32 %v3938, %v4270
        %4272 = vmatmul.bf16.gmra.mxu0 %v4056
        %v4273 = vpop.f32.mrf.mxu0
        %v4274 = vadd.f32 %v3940, %v4273
        %v4275 = vpop.f32.mrf.mxu0
        %v4276 = vadd.f32 %v3942, %v4275
        %4277 = vmatmul.bf16.gmra.mxu0 %v4059
        %v4278 = vpop.f32.mrf.mxu0
        %v4279 = vadd.f32 %v3944, %v4278
        %v4280 = vpop.f32.mrf.mxu0
        %v4281 = vadd.f32 %v3946, %v4280
        %4282 = vmatmul.bf16.gmra.mxu0 %v4062
        %v4283 = vpop.f32.mrf.mxu0
        %v4284 = vadd.f32 %v3948, %v4283
        %v4285 = vpop.f32.mrf.mxu0
        %v4286 = vadd.f32 %v3950, %v4285
        %4287 = vmatmul.bf16.gmra.mxu0 %v4065
        %v4288 = vpop.f32.mrf.mxu0
        %v4289 = vadd.f32 %v3952, %v4288
        %v4290 = vpop.f32.mrf.mxu0
        %v4291 = vadd.f32 %v3954, %v4290
        %4292 = vdwg.mxu0
        %v4293 = vmax.f32 %v4125, %v4214
        %4294 = vmax.xlane.f32.xlu0 %v4293
        %v4295 = vpop.xlane.xlu0 %4294
        %v4296 = vmax.f32 %v4127, %v4216
        %4297 = vmax.xlane.f32.xlu0 %v4296
        %v4298 = vpop.xlane.xlu0 %4297
        %v4299 = vmax.f32 %v4130, %v4219
        %4300 = vmax.xlane.f32.xlu0 %v4299
        %v4301 = vpop.xlane.xlu0 %4300
        %v4302 = vmax.f32 %v4132, %v4221
        %4303 = vmax.xlane.f32.xlu0 %v4302
        %v4304 = vpop.xlane.xlu0 %4303
        %v4305 = vmax.f32 %v4135, %v4224
        %4306 = vmax.xlane.f32.xlu0 %v4305
        %v4307 = vpop.xlane.xlu0 %4306
        %v4308 = vmax.f32 %v4137, %v4226
        %4309 = vmax.xlane.f32.xlu0 %v4308
        %v4310 = vpop.xlane.xlu0 %4309
        %v4311 = vmax.f32 %v4140, %v4229
        %4312 = vmax.xlane.f32.xlu0 %v4311
        %v4313 = vpop.xlane.xlu0 %4312
        %v4314 = vmax.f32 %v4142, %v4231
        %4315 = vmax.xlane.f32.xlu0 %v4314
        %v4316 = vpop.xlane.xlu0 %4315
        %v4317 = vmax.f32 %v4145, %v4234
        %4318 = vmax.xlane.f32.xlu0 %v4317
        %v4319 = vpop.xlane.xlu0 %4318
        %v4320 = vmax.f32 %v4147, %v4236
        %4321 = vmax.xlane.f32.xlu0 %v4320
        %v4322 = vpop.xlane.xlu0 %4321
        %v4323 = vmax.f32 %v4150, %v4239
        %4324 = vmax.xlane.f32.xlu0 %v4323
        %v4325 = vpop.xlane.xlu0 %4324
        %v4326 = vmax.f32 %v4152, %v4241
        %4327 = vmax.xlane.f32.xlu0 %v4326
        %v4328 = vpop.xlane.xlu0 %4327
        %v4329 = vmax.f32 %v4155, %v4244
        %4330 = vmax.xlane.f32.xlu0 %v4329
        %v4331 = vpop.xlane.xlu0 %4330
        %v4332 = vmax.f32 %v4157, %v4246
        %4333 = vmax.xlane.f32.xlu0 %v4332
        %v4334 = vpop.xlane.xlu0 %4333
        %v4335 = vmax.f32 %v4160, %v4249
        %4336 = vmax.xlane.f32.xlu0 %v4335
        %v4337 = vpop.xlane.xlu0 %4336
        %v4338 = vmax.f32 %v4162, %v4251
        %4339 = vmax.xlane.f32.xlu0 %v4338
        %v4340 = vpop.xlane.xlu0 %4339
        %v4341 = vmax.f32 %v4165, %v4254
        %4342 = vmax.xlane.f32.xlu0 %v4341
        %v4343 = vpop.xlane.xlu0 %4342
        %v4344 = vmax.f32 %v4167, %v4256
        %4345 = vmax.xlane.f32.xlu0 %v4344
        %v4346 = vpop.xlane.xlu0 %4345
        %v4347 = vmax.f32 %v4170, %v4259
        %4348 = vmax.xlane.f32.xlu0 %v4347
        %v4349 = vpop.xlane.xlu0 %4348
        %v4350 = vmax.f32 %v4172, %v4261
        %4351 = vmax.xlane.f32.xlu0 %v4350
        %v4352 = vpop.xlane.xlu0 %4351
        %v4353 = vmax.f32 %v4175, %v4264
        %4354 = vmax.xlane.f32.xlu0 %v4353
        %v4355 = vpop.xlane.xlu0 %4354
        %v4356 = vmax.f32 %v4177, %v4266
        %4357 = vmax.xlane.f32.xlu0 %v4356
        %v4358 = vpop.xlane.xlu0 %4357
        %v4359 = vmax.f32 %v4180, %v4269
        %4360 = vmax.xlane.f32.xlu0 %v4359
        %v4361 = vpop.xlane.xlu0 %4360
        %v4362 = vmax.f32 %v4182, %v4271
        %4363 = vmax.xlane.f32.xlu0 %v4362
        %v4364 = vpop.xlane.xlu0 %4363
        %v4365 = vmax.f32 %v4185, %v4274
        %4366 = vmax.xlane.f32.xlu0 %v4365
        %v4367 = vpop.xlane.xlu0 %4366
        %v4368 = vmax.f32 %v4187, %v4276
        %4369 = vmax.xlane.f32.xlu0 %v4368
        %v4370 = vpop.xlane.xlu0 %4369
        %v4371 = vmax.f32 %v4190, %v4279
        %4372 = vmax.xlane.f32.xlu0 %v4371
        %v4373 = vpop.xlane.xlu0 %4372
        %v4374 = vmax.f32 %v4192, %v4281
        %4375 = vmax.xlane.f32.xlu0 %v4374
        %v4376 = vpop.xlane.xlu0 %4375
        %v4377 = vmax.f32 %v4195, %v4284
        %4378 = vmax.xlane.f32.xlu0 %v4377
        %v4379 = vpop.xlane.xlu0 %4378
        %v4380 = vmax.f32 %v4197, %v4286
        %4381 = vmax.xlane.f32.xlu0 %v4380
        %v4382 = vpop.xlane.xlu0 %4381
        %v4383 = vmax.f32 %v4200, %v4289
        %4384 = vmax.xlane.f32.xlu0 %v4383
        %v4385 = vpop.xlane.xlu0 %4384
        %v4386 = vmax.f32 %v4202, %v4291
        %4387 = vmax.xlane.f32.xlu0 %v4386
        %v4388 = vpop.xlane.xlu0 %4387
        %v4389 = vsub.f32 %v4125, %v4295
        %v4390 = vsub.f32 %v4214, %v4295
        %v4391 = vsub.f32 %v4127, %v4298
        %v4392 = vsub.f32 %v4216, %v4298
        %v4393 = vsub.f32 %v4130, %v4301
        %v4394 = vsub.f32 %v4219, %v4301
        %v4395 = vsub.f32 %v4132, %v4304
        %v4396 = vsub.f32 %v4221, %v4304
        %v4397 = vsub.f32 %v4135, %v4307
        %v4398 = vsub.f32 %v4224, %v4307
        %v4399 = vsub.f32 %v4137, %v4310
        %v4400 = vsub.f32 %v4226, %v4310
        %v4401 = vsub.f32 %v4140, %v4313
        %v4402 = vsub.f32 %v4229, %v4313
        %v4403 = vsub.f32 %v4142, %v4316
        %v4404 = vsub.f32 %v4231, %v4316
        %v4405 = vsub.f32 %v4145, %v4319
        %v4406 = vsub.f32 %v4234, %v4319
        %v4407 = vsub.f32 %v4147, %v4322
        %v4408 = vsub.f32 %v4236, %v4322
        %v4409 = vsub.f32 %v4150, %v4325
        %v4410 = vsub.f32 %v4239, %v4325
        %v4411 = vsub.f32 %v4152, %v4328
        %v4412 = vsub.f32 %v4241, %v4328
        %v4413 = vsub.f32 %v4155, %v4331
        %v4414 = vsub.f32 %v4244, %v4331
        %v4415 = vsub.f32 %v4157, %v4334
        %v4416 = vsub.f32 %v4246, %v4334
        %v4417 = vsub.f32 %v4160, %v4337
        %v4418 = vsub.f32 %v4249, %v4337
        %v4419 = vsub.f32 %v4162, %v4340
        %v4420 = vsub.f32 %v4251, %v4340
        %v4421 = vsub.f32 %v4165, %v4343
        %v4422 = vsub.f32 %v4254, %v4343
        %v4423 = vsub.f32 %v4167, %v4346
        %v4424 = vsub.f32 %v4256, %v4346
        %v4425 = vsub.f32 %v4170, %v4349
        %v4426 = vsub.f32 %v4259, %v4349
        %v4427 = vsub.f32 %v4172, %v4352
        %v4428 = vsub.f32 %v4261, %v4352
        %v4429 = vsub.f32 %v4175, %v4355
        %v4430 = vsub.f32 %v4264, %v4355
        %v4431 = vsub.f32 %v4177, %v4358
        %v4432 = vsub.f32 %v4266, %v4358
        %v4433 = vsub.f32 %v4180, %v4361
        %v4434 = vsub.f32 %v4269, %v4361
        %v4435 = vsub.f32 %v4182, %v4364
        %v4436 = vsub.f32 %v4271, %v4364
        %v4437 = vsub.f32 %v4185, %v4367
        %v4438 = vsub.f32 %v4274, %v4367
        %v4439 = vsub.f32 %v4187, %v4370
        %v4440 = vsub.f32 %v4276, %v4370
        %v4441 = vsub.f32 %v4190, %v4373
        %v4442 = vsub.f32 %v4279, %v4373
        %v4443 = vsub.f32 %v4192, %v4376
        %v4444 = vsub.f32 %v4281, %v4376
        %v4445 = vsub.f32 %v4195, %v4379
        %v4446 = vsub.f32 %v4284, %v4379
        %v4447 = vsub.f32 %v4197, %v4382
        %v4448 = vsub.f32 %v4286, %v4382
        %v4449 = vsub.f32 %v4200, %v4385
        %v4450 = vsub.f32 %v4289, %v4385
        %v4451 = vsub.f32 %v4202, %v4388
        %v4452 = vsub.f32 %v4291, %v4388
        %v4453 = vmul.f32 %v4389, 1.442695
        %v4454 = vpow.pop %v4453
        %v4455 = vmul.f32 %v4390, 1.442695
        %v4456 = vpow.pop %v4455
        %v4457 = vmul.f32 %v4391, 1.442695
        %v4458 = vpow.pop %v4457
        %v4459 = vmul.f32 %v4392, 1.442695
        %v4460 = vpow.pop %v4459
        %v4461 = vmul.f32 %v4393, 1.442695
        %v4462 = vpow.pop %v4461
        %v4463 = vmul.f32 %v4394, 1.442695
        %v4464 = vpow.pop %v4463
        %v4465 = vmul.f32 %v4395, 1.442695
        %v4466 = vpow.pop %v4465
        %v4467 = vmul.f32 %v4396, 1.442695
        %v4468 = vpow.pop %v4467
        %v4469 = vmul.f32 %v4397, 1.442695
        %v4470 = vpow.pop %v4469
        %v4471 = vmul.f32 %v4398, 1.442695
        %v4472 = vpow.pop %v4471
        %v4473 = vmul.f32 %v4399, 1.442695
        %v4474 = vpow.pop %v4473
        %v4475 = vmul.f32 %v4400, 1.442695
        %v4476 = vpow.pop %v4475
        %v4477 = vmul.f32 %v4401, 1.442695
        %v4478 = vpow.pop %v4477
        %v4479 = vmul.f32 %v4402, 1.442695
        %v4480 = vpow.pop %v4479
        %v4481 = vmul.f32 %v4403, 1.442695
        %v4482 = vpow.pop %v4481
        %v4483 = vmul.f32 %v4404, 1.442695
        %v4484 = vpow.pop %v4483
        %v4485 = vmul.f32 %v4405, 1.442695
        %v4486 = vpow.pop %v4485
        %v4487 = vmul.f32 %v4406, 1.442695
        %v4488 = vpow.pop %v4487
        %v4489 = vmul.f32 %v4407, 1.442695
        %v4490 = vpow.pop %v4489
        %v4491 = vmul.f32 %v4408, 1.442695
        %v4492 = vpow.pop %v4491
        %v4493 = vmul.f32 %v4409, 1.442695
        %v4494 = vpow.pop %v4493
        %v4495 = vmul.f32 %v4410, 1.442695
        %v4496 = vpow.pop %v4495
        %v4497 = vmul.f32 %v4411, 1.442695
        %v4498 = vpow.pop %v4497
        %v4499 = vmul.f32 %v4412, 1.442695
        %v4500 = vpow.pop %v4499
        %v4501 = vmul.f32 %v4413, 1.442695
        %v4502 = vpow.pop %v4501
        %v4503 = vmul.f32 %v4414, 1.442695
        %v4504 = vpow.pop %v4503
        %v4505 = vmul.f32 %v4415, 1.442695
        %v4506 = vpow.pop %v4505
        %v4507 = vmul.f32 %v4416, 1.442695
        %v4508 = vpow.pop %v4507
        %v4509 = vmul.f32 %v4417, 1.442695
        %v4510 = vpow.pop %v4509
        %v4511 = vmul.f32 %v4418, 1.442695
        %v4512 = vpow.pop %v4511
        %v4513 = vmul.f32 %v4419, 1.442695
        %v4514 = vpow.pop %v4513
        %v4515 = vmul.f32 %v4420, 1.442695
        %v4516 = vpow.pop %v4515
        %v4517 = vmul.f32 %v4421, 1.442695
        %v4518 = vpow.pop %v4517
        %v4519 = vmul.f32 %v4422, 1.442695
        %v4520 = vpow.pop %v4519
        %v4521 = vmul.f32 %v4423, 1.442695
        %v4522 = vpow.pop %v4521
        %v4523 = vmul.f32 %v4424, 1.442695
        %v4524 = vpow.pop %v4523
        %v4525 = vmul.f32 %v4425, 1.442695
        %v4526 = vpow.pop %v4525
        %v4527 = vmul.f32 %v4426, 1.442695
        %v4528 = vpow.pop %v4527
        %v4529 = vmul.f32 %v4427, 1.442695
        %v4530 = vpow.pop %v4529
        %v4531 = vmul.f32 %v4428, 1.442695
        %v4532 = vpow.pop %v4531
        %v4533 = vmul.f32 %v4429, 1.442695
        %v4534 = vpow.pop %v4533
        %v4535 = vmul.f32 %v4430, 1.442695
        %v4536 = vpow.pop %v4535
        %v4537 = vmul.f32 %v4431, 1.442695
        %v4538 = vpow.pop %v4537
        %v4539 = vmul.f32 %v4432, 1.442695
        %v4540 = vpow.pop %v4539
        %v4541 = vmul.f32 %v4433, 1.442695
        %v4542 = vpow.pop %v4541
        %v4543 = vmul.f32 %v4434, 1.442695
        %v4544 = vpow.pop %v4543
        %v4545 = vmul.f32 %v4435, 1.442695
        %v4546 = vpow.pop %v4545
        %v4547 = vmul.f32 %v4436, 1.442695
        %v4548 = vpow.pop %v4547
        %v4549 = vmul.f32 %v4437, 1.442695
        %v4550 = vpow.pop %v4549
        %v4551 = vmul.f32 %v4438, 1.442695
        %v4552 = vpow.pop %v4551
        %v4553 = vmul.f32 %v4439, 1.442695
        %v4554 = vpow.pop %v4553
        %v4555 = vmul.f32 %v4440, 1.442695
        %v4556 = vpow.pop %v4555
        %v4557 = vmul.f32 %v4441, 1.442695
        %v4558 = vpow.pop %v4557
        %v4559 = vmul.f32 %v4442, 1.442695
        %v4560 = vpow.pop %v4559
        %v4561 = vmul.f32 %v4443, 1.442695
        %v4562 = vpow.pop %v4561
        %v4563 = vmul.f32 %v4444, 1.442695
        %v4564 = vpow.pop %v4563
        %v4565 = vmul.f32 %v4445, 1.442695
        %v4566 = vpow.pop %v4565
        %v4567 = vmul.f32 %v4446, 1.442695
        %v4568 = vpow.pop %v4567
        %v4569 = vmul.f32 %v4447, 1.442695
        %v4570 = vpow.pop %v4569
        %v4571 = vmul.f32 %v4448, 1.442695
        %v4572 = vpow.pop %v4571
        %v4573 = vmul.f32 %v4449, 1.442695
        %v4574 = vpow.pop %v4573
        %v4575 = vmul.f32 %v4450, 1.442695
        %v4576 = vpow.pop %v4575
        %v4577 = vmul.f32 %v4451, 1.442695
        %v4578 = vpow.pop %v4577
        %v4579 = vmul.f32 %v4452, 1.442695
        %v4580 = vpow.pop %v4579
        %v4581 = vadd.f32 %v4454, %v4456
        %4582 = vadd.xlane.f32.xlu0 %v4581
        %v4583 = vpop.xlane.xlu0 %4582
        %v4584 = vadd.f32 %v4458, %v4460
        %4585 = vadd.xlane.f32.xlu0 %v4584
        %v4586 = vpop.xlane.xlu0 %4585
        %v4587 = vadd.f32 %v4462, %v4464
        %4588 = vadd.xlane.f32.xlu0 %v4587
        %v4589 = vpop.xlane.xlu0 %4588
        %v4590 = vadd.f32 %v4466, %v4468
        %4591 = vadd.xlane.f32.xlu0 %v4590
        %v4592 = vpop.xlane.xlu0 %4591
        %v4593 = vadd.f32 %v4470, %v4472
        %4594 = vadd.xlane.f32.xlu0 %v4593
        %v4595 = vpop.xlane.xlu0 %4594
        %v4596 = vadd.f32 %v4474, %v4476
        %4597 = vadd.xlane.f32.xlu0 %v4596
        %v4598 = vpop.xlane.xlu0 %4597
        %v4599 = vadd.f32 %v4478, %v4480
        %4600 = vadd.xlane.f32.xlu0 %v4599
        %v4601 = vpop.xlane.xlu0 %4600
        %v4602 = vadd.f32 %v4482, %v4484
        %4603 = vadd.xlane.f32.xlu0 %v4602
        %v4604 = vpop.xlane.xlu0 %4603
        %v4605 = vadd.f32 %v4486, %v4488
        %4606 = vadd.xlane.f32.xlu0 %v4605
        %v4607 = vpop.xlane.xlu0 %4606
        %v4608 = vadd.f32 %v4490, %v4492
        %4609 = vadd.xlane.f32.xlu0 %v4608
        %v4610 = vpop.xlane.xlu0 %4609
        %v4611 = vadd.f32 %v4494, %v4496
        %4612 = vadd.xlane.f32.xlu0 %v4611
        %v4613 = vpop.xlane.xlu0 %4612
        %v4614 = vadd.f32 %v4498, %v4500
        %4615 = vadd.xlane.f32.xlu0 %v4614
        %v4616 = vpop.xlane.xlu0 %4615
        %v4617 = vadd.f32 %v4502, %v4504
        %4618 = vadd.xlane.f32.xlu0 %v4617
        %v4619 = vpop.xlane.xlu0 %4618
        %v4620 = vadd.f32 %v4506, %v4508
        %4621 = vadd.xlane.f32.xlu0 %v4620
        %v4622 = vpop.xlane.xlu0 %4621
        %v4623 = vadd.f32 %v4510, %v4512
        %4624 = vadd.xlane.f32.xlu0 %v4623
        %v4625 = vpop.xlane.xlu0 %4624
        %v4626 = vadd.f32 %v4514, %v4516
        %4627 = vadd.xlane.f32.xlu0 %v4626
        %v4628 = vpop.xlane.xlu0 %4627
        %v4629 = vadd.f32 %v4518, %v4520
        %4630 = vadd.xlane.f32.xlu0 %v4629
        %v4631 = vpop.xlane.xlu0 %4630
        %v4632 = vadd.f32 %v4522, %v4524
        %4633 = vadd.xlane.f32.xlu0 %v4632
        %v4634 = vpop.xlane.xlu0 %4633
        %v4635 = vadd.f32 %v4526, %v4528
        %4636 = vadd.xlane.f32.xlu0 %v4635
        %v4637 = vpop.xlane.xlu0 %4636
        %v4638 = vadd.f32 %v4530, %v4532
        %4639 = vadd.xlane.f32.xlu0 %v4638
        %v4640 = vpop.xlane.xlu0 %4639
        %v4641 = vadd.f32 %v4534, %v4536
        %4642 = vadd.xlane.f32.xlu0 %v4641
        %v4643 = vpop.xlane.xlu0 %4642
        %v4644 = vadd.f32 %v4538, %v4540
        %4645 = vadd.xlane.f32.xlu0 %v4644
        %v4646 = vpop.xlane.xlu0 %4645
        %v4647 = vadd.f32 %v4542, %v4544
        %4648 = vadd.xlane.f32.xlu0 %v4647
        %v4649 = vpop.xlane.xlu0 %4648
        %v4650 = vadd.f32 %v4546, %v4548
        %4651 = vadd.xlane.f32.xlu0 %v4650
        %v4652 = vpop.xlane.xlu0 %4651
        %v4653 = vadd.f32 %v4550, %v4552
        %4654 = vadd.xlane.f32.xlu0 %v4653
        %v4655 = vpop.xlane.xlu0 %4654
        %v4656 = vadd.f32 %v4554, %v4556
        %4657 = vadd.xlane.f32.xlu0 %v4656
        %v4658 = vpop.xlane.xlu0 %4657
        %v4659 = vadd.f32 %v4558, %v4560
        %4660 = vadd.xlane.f32.xlu0 %v4659
        %v4661 = vpop.xlane.xlu0 %4660
        %v4662 = vadd.f32 %v4562, %v4564
        %4663 = vadd.xlane.f32.xlu0 %v4662
        %v4664 = vpop.xlane.xlu0 %4663
        %v4665 = vadd.f32 %v4566, %v4568
        %4666 = vadd.xlane.f32.xlu0 %v4665
        %v4667 = vpop.xlane.xlu0 %4666
        %v4668 = vadd.f32 %v4570, %v4572
        %4669 = vadd.xlane.f32.xlu0 %v4668
        %v4670 = vpop.xlane.xlu0 %4669
        %v4671 = vadd.f32 %v4574, %v4576
        %4672 = vadd.xlane.f32.xlu0 %v4671
        %v4673 = vpop.xlane.xlu0 %4672
        %v4674 = vadd.f32 %v4578, %v4580
        %4675 = vadd.xlane.f32.xlu0 %v4674
        %v4676 = vpop.xlane.xlu0 %4675
        %v4677 = vrcp.pop %v4583
        %v4678 = vrcp.pop %v4586
        %v4679 = vrcp.pop %v4589
        %v4680 = vrcp.pop %v4592
        %v4681 = vrcp.pop %v4595
        %v4682 = vrcp.pop %v4598
        %v4683 = vrcp.pop %v4601
        %v4684 = vrcp.pop %v4604
        %v4685 = vrcp.pop %v4607
        %v4686 = vrcp.pop %v4610
        %v4687 = vrcp.pop %v4613
        %v4688 = vrcp.pop %v4616
        %v4689 = vrcp.pop %v4619
        %v4690 = vrcp.pop %v4622
        %v4691 = vrcp.pop %v4625
        %v4692 = vrcp.pop %v4628
        %v4693 = vrcp.pop %v4631
        %v4694 = vrcp.pop %v4634
        %v4695 = vrcp.pop %v4637
        %v4696 = vrcp.pop %v4640
        %v4697 = vrcp.pop %v4643
        %v4698 = vrcp.pop %v4646
        %v4699 = vrcp.pop %v4649
        %v4700 = vrcp.pop %v4652
        %v4701 = vrcp.pop %v4655
        %v4702 = vrcp.pop %v4658
        %v4703 = vrcp.pop %v4661
        %v4704 = vrcp.pop %v4664
        %v4705 = vrcp.pop %v4667
        %v4706 = vrcp.pop %v4670
        %v4707 = vrcp.pop %v4673
        %v4708 = vrcp.pop %v4676
        %v4709 = vmul.f32 %v4454, %v4677
        %v4710 = vmul.f32 %v4456, %v4677
        %v4711 = vmul.f32 %v4458, %v4678
        %v4712 = vmul.f32 %v4460, %v4678
        %v4713 = vmul.f32 %v4462, %v4679
        %v4714 = vmul.f32 %v4464, %v4679
        %v4715 = vmul.f32 %v4466, %v4680
        %v4716 = vmul.f32 %v4468, %v4680
        %v4717 = vmul.f32 %v4470, %v4681
        %v4718 = vmul.f32 %v4472, %v4681
        %v4719 = vmul.f32 %v4474, %v4682
        %v4720 = vmul.f32 %v4476, %v4682
        %v4721 = vmul.f32 %v4478, %v4683
        %v4722 = vmul.f32 %v4480, %v4683
        %v4723 = vmul.f32 %v4482, %v4684
        %v4724 = vmul.f32 %v4484, %v4684
        %v4725 = vmul.f32 %v4486, %v4685
        %v4726 = vmul.f32 %v4488, %v4685
        %v4727 = vmul.f32 %v4490, %v4686
        %v4728 = vmul.f32 %v4492, %v4686
        %v4729 = vmul.f32 %v4494, %v4687
        %v4730 = vmul.f32 %v4496, %v4687
        %v4731 = vmul.f32 %v4498, %v4688
        %v4732 = vmul.f32 %v4500, %v4688
        %v4733 = vmul.f32 %v4502, %v4689
        %v4734 = vmul.f32 %v4504, %v4689
        %v4735 = vmul.f32 %v4506, %v4690
        %v4736 = vmul.f32 %v4508, %v4690
        %v4737 = vmul.f32 %v4510, %v4691
        %v4738 = vmul.f32 %v4512, %v4691
        %v4739 = vmul.f32 %v4514, %v4692
        %v4740 = vmul.f32 %v4516, %v4692
        %v4741 = vmul.f32 %v4518, %v4693
        %v4742 = vmul.f32 %v4520, %v4693
        %v4743 = vmul.f32 %v4522, %v4694
        %v4744 = vmul.f32 %v4524, %v4694
        %v4745 = vmul.f32 %v4526, %v4695
        %v4746 = vmul.f32 %v4528, %v4695
        %v4747 = vmul.f32 %v4530, %v4696
        %v4748 = vmul.f32 %v4532, %v4696
        %v4749 = vmul.f32 %v4534, %v4697
        %v4750 = vmul.f32 %v4536, %v4697
        %v4751 = vmul.f32 %v4538, %v4698
        %v4752 = vmul.f32 %v4540, %v4698
        %v4753 = vmul.f32 %v4542, %v4699
        %v4754 = vmul.f32 %v4544, %v4699
        %v4755 = vmul.f32 %v4546, %v4700
        %v4756 = vmul.f32 %v4548, %v4700
        %v4757 = vmul.f32 %v4550, %v4701
        %v4758 = vmul.f32 %v4552, %v4701
        %v4759 = vmul.f32 %v4554, %v4702
        %v4760 = vmul.f32 %v4556, %v4702
        %v4761 = vmul.f32 %v4558, %v4703
        %v4762 = vmul.f32 %v4560, %v4703
        %v4763 = vmul.f32 %v4562, %v4704
        %v4764 = vmul.f32 %v4564, %v4704
        %v4765 = vmul.f32 %v4566, %v4705
        %v4766 = vmul.f32 %v4568, %v4705
        %v4767 = vmul.f32 %v4570, %v4706
        %v4768 = vmul.f32 %v4572, %v4706
        %v4769 = vmul.f32 %v4574, %v4707
        %v4770 = vmul.f32 %v4576, %v4707
        %v4771 = vmul.f32 %v4578, %v4708
        %v4772 = vmul.f32 %v4580, %v4708
        %v4773 = vpack.c.bf16 %v4711, %v4709
        %v4774 = vpack.c.bf16 %v4712, %v4710
        %v4775 = vpack.c.bf16 %v4715, %v4713
        %v4776 = vpack.c.bf16 %v4716, %v4714
        %v4777 = vpack.c.bf16 %v4719, %v4717
        %v4778 = vpack.c.bf16 %v4720, %v4718
        %v4779 = vpack.c.bf16 %v4723, %v4721
        %v4780 = vpack.c.bf16 %v4724, %v4722
        %v4781 = vpack.c.bf16 %v4727, %v4725
        %v4782 = vpack.c.bf16 %v4728, %v4726
        %v4783 = vpack.c.bf16 %v4731, %v4729
        %v4784 = vpack.c.bf16 %v4732, %v4730
        %v4785 = vpack.c.bf16 %v4735, %v4733
        %v4786 = vpack.c.bf16 %v4736, %v4734
        %v4787 = vpack.c.bf16 %v4739, %v4737
        %v4788 = vpack.c.bf16 %v4740, %v4738
        %v4789 = vpack.c.bf16 %v4743, %v4741
        %v4790 = vpack.c.bf16 %v4744, %v4742
        %v4791 = vpack.c.bf16 %v4747, %v4745
        %v4792 = vpack.c.bf16 %v4748, %v4746
        %v4793 = vpack.c.bf16 %v4751, %v4749
        %v4794 = vpack.c.bf16 %v4752, %v4750
        %v4795 = vpack.c.bf16 %v4755, %v4753
        %v4796 = vpack.c.bf16 %v4756, %v4754
        %v4797 = vpack.c.bf16 %v4759, %v4757
        %v4798 = vpack.c.bf16 %v4760, %v4758
        %v4799 = vpack.c.bf16 %v4763, %v4761
        %v4800 = vpack.c.bf16 %v4764, %v4762
        %v4801 = vpack.c.bf16 %v4767, %v4765
        %v4802 = vpack.c.bf16 %v4768, %v4766
        %v4803 = vpack.c.bf16 %v4771, %v4769
        %v4804 = vpack.c.bf16 %v4772, %v4770
        %4805 = vrot.lane.b32.xlu0 %v2201, 64
        %v4806 = vpop.permute.xlu0 %4805
        %4807 = vrot.lane.b32.xlu0 %v2202, 64
        %v4808 = vpop.permute.xlu0 %4807
        %4809 = vrot.lane.b32.xlu0 %v2203, 64
        %v4810 = vpop.permute.xlu0 %4809
        %4811 = vrot.lane.b32.xlu0 %v2204, 64
        %v4812 = vpop.permute.xlu0 %4811
        %4813 = vrot.lane.b32.xlu0 %v2205, 64
        %v4814 = vpop.permute.xlu0 %4813
        %4815 = vrot.lane.b32.xlu0 %v2206, 64
        %v4816 = vpop.permute.xlu0 %4815
        %4817 = vrot.lane.b32.xlu0 %v2207, 64
        %v4818 = vpop.permute.xlu0 %4817
        %4819 = vrot.lane.b32.xlu0 %v2208, 64
        %v4820 = vpop.permute.xlu0 %4819
        %4821 = vrot.lane.b32.xlu0 %v2209, 64
        %v4822 = vpop.permute.xlu0 %4821
        %4823 = vrot.lane.b32.xlu0 %v2210, 64
        %v4824 = vpop.permute.xlu0 %4823
        %4825 = vrot.lane.b32.xlu0 %v2211, 64
        %v4826 = vpop.permute.xlu0 %4825
        %4827 = vrot.lane.b32.xlu0 %v2212, 64
        %v4828 = vpop.permute.xlu0 %4827
        %4829 = vrot.lane.b32.xlu0 %v2213, 64
        %v4830 = vpop.permute.xlu0 %4829
        %4831 = vrot.lane.b32.xlu0 %v2214, 64
        %v4832 = vpop.permute.xlu0 %4831
        %4833 = vrot.lane.b32.xlu0 %v2215, 64
        %v4834 = vpop.permute.xlu0 %4833
        %4835 = vrot.lane.b32.xlu0 %v2216, 64
        %v4836 = vpop.permute.xlu0 %4835
        %4853 = vmatpush.bf16.msra.mxu0 %v4820
        %4854 = vmatpush.bf16.msra.mxu0 %v4818
        %4855 = vmatpush.bf16.msra.mxu0 %v4816
        %4856 = vmatpush.bf16.msra.mxu0 %v4814
        %4857 = vmatpush.bf16.msra.mxu0 %v4812
        %4858 = vmatpush.bf16.msra.mxu0 %v4810
        %4859 = vmatpush.bf16.msra.mxu0 %v4808
        %4860 = vmatpush.bf16.msra.mxu0 %v4806
        %4861 = vmatmul.bf16.gmra.mxu0 %v4773
        %v4862 = vpop.f32.mrf.mxu0
        %v4863 = vadd.f32 0.0, %v4862
        %v4864 = vpop.f32.mrf.mxu0
        %v4865 = vadd.f32 0.0, %v4864
        %4866 = vmatmul.bf16.gmra.mxu0 %v4775
        %v4867 = vpop.f32.mrf.mxu0
        %v4868 = vadd.f32 0.0, %v4867
        %v4869 = vpop.f32.mrf.mxu0
        %v4870 = vadd.f32 0.0, %v4869
        %4871 = vmatmul.bf16.gmra.mxu0 %v4777
        %v4872 = vpop.f32.mrf.mxu0
        %v4873 = vadd.f32 0.0, %v4872
        %v4874 = vpop.f32.mrf.mxu0
        %v4875 = vadd.f32 0.0, %v4874
        %4876 = vmatmul.bf16.gmra.mxu0 %v4779
        %v4877 = vpop.f32.mrf.mxu0
        %v4878 = vadd.f32 0.0, %v4877
        %v4879 = vpop.f32.mrf.mxu0
        %v4880 = vadd.f32 0.0, %v4879
        %4881 = vmatmul.bf16.gmra.mxu0 %v4781
        %v4882 = vpop.f32.mrf.mxu0
        %v4883 = vadd.f32 0.0, %v4882
        %v4884 = vpop.f32.mrf.mxu0
        %v4885 = vadd.f32 0.0, %v4884
        %4886 = vmatmul.bf16.gmra.mxu0 %v4783
        %v4887 = vpop.f32.mrf.mxu0
        %v4888 = vadd.f32 0.0, %v4887
        %v4889 = vpop.f32.mrf.mxu0
        %v4890 = vadd.f32 0.0, %v4889
        %4891 = vmatmul.bf16.gmra.mxu0 %v4785
        %v4892 = vpop.f32.mrf.mxu0
        %v4893 = vadd.f32 0.0, %v4892
        %v4894 = vpop.f32.mrf.mxu0
        %v4895 = vadd.f32 0.0, %v4894
        %4896 = vmatmul.bf16.gmra.mxu0 %v4787
        %v4897 = vpop.f32.mrf.mxu0
        %v4898 = vadd.f32 0.0, %v4897
        %v4899 = vpop.f32.mrf.mxu0
        %v4900 = vadd.f32 0.0, %v4899
        %4901 = vmatmul.bf16.gmra.mxu0 %v4789
        %v4902 = vpop.f32.mrf.mxu0
        %v4903 = vadd.f32 0.0, %v4902
        %v4904 = vpop.f32.mrf.mxu0
        %v4905 = vadd.f32 0.0, %v4904
        %4906 = vmatmul.bf16.gmra.mxu0 %v4791
        %v4907 = vpop.f32.mrf.mxu0
        %v4908 = vadd.f32 0.0, %v4907
        %v4909 = vpop.f32.mrf.mxu0
        %v4910 = vadd.f32 0.0, %v4909
        %4911 = vmatmul.bf16.gmra.mxu0 %v4793
        %v4912 = vpop.f32.mrf.mxu0
        %v4913 = vadd.f32 0.0, %v4912
        %v4914 = vpop.f32.mrf.mxu0
        %v4915 = vadd.f32 0.0, %v4914
        %4916 = vmatmul.bf16.gmra.mxu0 %v4795
        %v4917 = vpop.f32.mrf.mxu0
        %v4918 = vadd.f32 0.0, %v4917
        %v4919 = vpop.f32.mrf.mxu0
        %v4920 = vadd.f32 0.0, %v4919
        %4921 = vmatmul.bf16.gmra.mxu0 %v4797
        %v4922 = vpop.f32.mrf.mxu0
        %v4923 = vadd.f32 0.0, %v4922
        %v4924 = vpop.f32.mrf.mxu0
        %v4925 = vadd.f32 0.0, %v4924
        %4926 = vmatmul.bf16.gmra.mxu0 %v4799
        %v4927 = vpop.f32.mrf.mxu0
        %v4928 = vadd.f32 0.0, %v4927
        %v4929 = vpop.f32.mrf.mxu0
        %v4930 = vadd.f32 0.0, %v4929
        %4931 = vmatmul.bf16.gmra.mxu0 %v4801
        %v4932 = vpop.f32.mrf.mxu0
        %v4933 = vadd.f32 0.0, %v4932
        %v4934 = vpop.f32.mrf.mxu0
        %v4935 = vadd.f32 0.0, %v4934
        %4936 = vmatmul.bf16.gmra.mxu0 %v4803
        %v4937 = vpop.f32.mrf.mxu0
        %v4938 = vadd.f32 0.0, %v4937
        %v4939 = vpop.f32.mrf.mxu0
        %v4940 = vadd.f32 0.0, %v4939
        %4941 = vdwg.mxu0
        %4942 = vmatpush.bf16.msra.mxu0 %v4836
        %4943 = vmatpush.bf16.msra.mxu0 %v4834
        %4944 = vmatpush.bf16.msra.mxu0 %v4832
        %4945 = vmatpush.bf16.msra.mxu0 %v4830
        %4946 = vmatpush.bf16.msra.mxu0 %v4828
        %4947 = vmatpush.bf16.msra.mxu0 %v4826
        %4948 = vmatpush.bf16.msra.mxu0 %v4824
        %4949 = vmatpush.bf16.msra.mxu0 %v4822
        %4950 = vmatmul.bf16.gmra.mxu0 %v4774
        %v4951 = vpop.f32.mrf.mxu0
        %v4952 = vadd.f32 %v4863, %v4951
        %v4953 = vpop.f32.mrf.mxu0
        %v4954 = vadd.f32 %v4865, %v4953
        %4955 = vmatmul.bf16.gmra.mxu0 %v4776
        %v4956 = vpop.f32.mrf.mxu0
        %v4957 = vadd.f32 %v4868, %v4956
        %v4958 = vpop.f32.mrf.mxu0
        %v4959 = vadd.f32 %v4870, %v4958
        %4960 = vmatmul.bf16.gmra.mxu0 %v4778
        %v4961 = vpop.f32.mrf.mxu0
        %v4962 = vadd.f32 %v4873, %v4961
        %v4963 = vpop.f32.mrf.mxu0
        %v4964 = vadd.f32 %v4875, %v4963
        %4965 = vmatmul.bf16.gmra.mxu0 %v4780
        %v4966 = vpop.f32.mrf.mxu0
        %v4967 = vadd.f32 %v4878, %v4966
        %v4968 = vpop.f32.mrf.mxu0
        %v4969 = vadd.f32 %v4880, %v4968
        %4970 = vmatmul.bf16.gmra.mxu0 %v4782
        %v4971 = vpop.f32.mrf.mxu0
        %v4972 = vadd.f32 %v4883, %v4971
        %v4973 = vpop.f32.mrf.mxu0
        %v4974 = vadd.f32 %v4885, %v4973
        %4975 = vmatmul.bf16.gmra.mxu0 %v4784
        %v4976 = vpop.f32.mrf.mxu0
        %v4977 = vadd.f32 %v4888, %v4976
        %v4978 = vpop.f32.mrf.mxu0
        %v4979 = vadd.f32 %v4890, %v4978
        %4980 = vmatmul.bf16.gmra.mxu0 %v4786
        %v4981 = vpop.f32.mrf.mxu0
        %v4982 = vadd.f32 %v4893, %v4981
        %v4983 = vpop.f32.mrf.mxu0
        %v4984 = vadd.f32 %v4895, %v4983
        %4985 = vmatmul.bf16.gmra.mxu0 %v4788
        %v4986 = vpop.f32.mrf.mxu0
        %v4987 = vadd.f32 %v4898, %v4986
        %v4988 = vpop.f32.mrf.mxu0
        %v4989 = vadd.f32 %v4900, %v4988
        %4990 = vmatmul.bf16.gmra.mxu0 %v4790
        %v4991 = vpop.f32.mrf.mxu0
        %v4992 = vadd.f32 %v4903, %v4991
        %v4993 = vpop.f32.mrf.mxu0
        %v4994 = vadd.f32 %v4905, %v4993
        %4995 = vmatmul.bf16.gmra.mxu0 %v4792
        %v4996 = vpop.f32.mrf.mxu0
        %v4997 = vadd.f32 %v4908, %v4996
        %v4998 = vpop.f32.mrf.mxu0
        %v4999 = vadd.f32 %v4910, %v4998
        %5000 = vmatmul.bf16.gmra.mxu0 %v4794
        %v5001 = vpop.f32.mrf.mxu0
        %v5002 = vadd.f32 %v4913, %v5001
        %v5003 = vpop.f32.mrf.mxu0
        %v5004 = vadd.f32 %v4915, %v5003
        %5005 = vmatmul.bf16.gmra.mxu0 %v4796
        %v5006 = vpop.f32.mrf.mxu0
        %v5007 = vadd.f32 %v4918, %v5006
        %v5008 = vpop.f32.mrf.mxu0
        %v5009 = vadd.f32 %v4920, %v5008
        %5010 = vmatmul.bf16.gmra.mxu0 %v4798
        %v5011 = vpop.f32.mrf.mxu0
        %v5012 = vadd.f32 %v4923, %v5011
        %v5013 = vpop.f32.mrf.mxu0
        %v5014 = vadd.f32 %v4925, %v5013
        %5015 = vmatmul.bf16.gmra.mxu0 %v4800
        %v5016 = vpop.f32.mrf.mxu0
        %v5017 = vadd.f32 %v4928, %v5016
        %v5018 = vpop.f32.mrf.mxu0
        %v5019 = vadd.f32 %v4930, %v5018
        %5020 = vmatmul.bf16.gmra.mxu0 %v4802
        %v5021 = vpop.f32.mrf.mxu0
        %v5022 = vadd.f32 %v4933, %v5021
        %v5023 = vpop.f32.mrf.mxu0
        %v5024 = vadd.f32 %v4935, %v5023
        %5025 = vmatmul.bf16.gmra.mxu0 %v4804
        %v5026 = vpop.f32.mrf.mxu0
        %v5027 = vadd.f32 %v4938, %v5026
        %v5028 = vpop.f32.mrf.mxu0
        %v5029 = vadd.f32 %v4940, %v5028
        %5030 = vdwg.mxu0
        %v5031 = vpack.c.bf16 %v4954, %v4952
        %v5032 = vpack.c.bf16 %v4959, %v4957
        %v5033 = vpack.c.bf16 %v4964, %v4962
        %v5034 = vpack.c.bf16 %v4969, %v4967
        %v5035 = vpack.c.bf16 %v4974, %v4972
        %v5036 = vpack.c.bf16 %v4979, %v4977
        %v5037 = vpack.c.bf16 %v4984, %v4982
        %v5038 = vpack.c.bf16 %v4989, %v4987
        %v5039 = vpack.c.bf16 %v4994, %v4992
        %v5040 = vpack.c.bf16 %v4999, %v4997
        %v5041 = vpack.c.bf16 %v5004, %v5002
        %v5042 = vpack.c.bf16 %v5009, %v5007
        %v5043 = vpack.c.bf16 %v5014, %v5012
        %v5044 = vpack.c.bf16 %v5019, %v5017
        %v5045 = vpack.c.bf16 %v5024, %v5022
        %v5046 = vpack.c.bf16 %v5029, %v5027
        %v5047 = vld [vmem:[#allocation9 + $0x20] sm:$0xf]
        %v5048 = vld [vmem:[#allocation9 + $0x24] sm:$0xf]
        %v5049 = vld [vmem:[#allocation9 + $0x28] sm:$0xf]
        %v5050 = vld [vmem:[#allocation9 + $0x2c] sm:$0xf]
        %v5055 = vunpack.c.l.b16 %v5047
        %v5056 = vunpack.c.l.b16 %v5048
        %v5057 = vunpack.c.l.b16 %v5049
        %v5058 = vunpack.c.l.b16 %v5050
        %v5059 = vpack.c.b16 %v5056, %v5055
        %v5060 = vpack.c.b16 %v5058, %v5057
        %v5064 = vsel %vm1350, %v5031, 0
        %v5067 = vsel %vm1350, %v5032, 0
        %v5070 = vsel %vm1350, %v5033, 0
        %v5073 = vsel %vm1350, %v5034, 0
        %v5076 = vsel %vm1350, %v5035, 0
        %v5079 = vsel %vm1350, %v5036, 0
        %v5082 = vsel %vm1350, %v5037, 0
        %v5085 = vsel %vm1350, %v5038, 0
        %v5088 = vsel %vm1350, %v5039, 0
        %v5091 = vsel %vm1350, %v5040, 0
        %v5094 = vsel %vm1350, %v5041, 0
        %v5097 = vsel %vm1350, %v5042, 0
        %v5100 = vsel %vm1350, %v5043, 0
        %v5103 = vsel %vm1350, %v5044, 0
        %v5106 = vsel %vm1350, %v5045, 0
        %v5109 = vsel %vm1350, %v5046, 0
        %5111 = vmatpush.bf16.msra.mxu0 0
        %5112 = vmatpush.bf16.msra.mxu0 0
        %5113 = vmatpush.bf16.msra.mxu0 0
        %5114 = vmatpush.bf16.msra.mxu0 0
        %5115 = vmatpush.bf16.msra.mxu0 0
        %5116 = vmatpush.bf16.msra.mxu0 0
        %5117 = vmatpush.bf16.msra.mxu0 %v5060
        %5118 = vmatpush.bf16.msra.mxu0 %v5059
        %5119 = vmatmul.bf16.gmra.mxu0 %v5064
        %v5120 = vpop.f32.mrf.mxu0
        %v5121 = vadd.f32 0.0, %v5120
        %v5122 = vpop.f32.mrf.mxu0
        %v5123 = vadd.f32 0.0, %v5122
        %5124 = vmatmul.bf16.gmra.mxu0 %v5067
        %v5125 = vpop.f32.mrf.mxu0
        %v5126 = vadd.f32 0.0, %v5125
        %v5127 = vpop.f32.mrf.mxu0
        %v5128 = vadd.f32 0.0, %v5127
        %5129 = vmatmul.bf16.gmra.mxu0 %v5070
        %v5130 = vpop.f32.mrf.mxu0
        %v5131 = vadd.f32 0.0, %v5130
        %v5132 = vpop.f32.mrf.mxu0
        %v5133 = vadd.f32 0.0, %v5132
        %5134 = vmatmul.bf16.gmra.mxu0 %v5073
        %v5135 = vpop.f32.mrf.mxu0
        %v5136 = vadd.f32 0.0, %v5135
        %v5137 = vpop.f32.mrf.mxu0
        %v5138 = vadd.f32 0.0, %v5137
        %5139 = vmatmul.bf16.gmra.mxu0 %v5076
        %v5140 = vpop.f32.mrf.mxu0
        %v5141 = vadd.f32 0.0, %v5140
        %v5142 = vpop.f32.mrf.mxu0
        %v5143 = vadd.f32 0.0, %v5142
        %5144 = vmatmul.bf16.gmra.mxu0 %v5079
        %v5145 = vpop.f32.mrf.mxu0
        %v5146 = vadd.f32 0.0, %v5145
        %v5147 = vpop.f32.mrf.mxu0
        %v5148 = vadd.f32 0.0, %v5147
        %5149 = vmatmul.bf16.gmra.mxu0 %v5082
        %v5150 = vpop.f32.mrf.mxu0
        %v5151 = vadd.f32 0.0, %v5150
        %v5152 = vpop.f32.mrf.mxu0
        %v5153 = vadd.f32 0.0, %v5152
        %5154 = vmatmul.bf16.gmra.mxu0 %v5085
        %v5155 = vpop.f32.mrf.mxu0
        %v5156 = vadd.f32 0.0, %v5155
        %v5157 = vpop.f32.mrf.mxu0
        %v5158 = vadd.f32 0.0, %v5157
        %5159 = vmatmul.bf16.gmra.mxu0 %v5088
        %v5160 = vpop.f32.mrf.mxu0
        %v5161 = vadd.f32 0.0, %v5160
        %v5162 = vpop.f32.mrf.mxu0
        %v5163 = vadd.f32 0.0, %v5162
        %5164 = vmatmul.bf16.gmra.mxu0 %v5091
        %v5165 = vpop.f32.mrf.mxu0
        %v5166 = vadd.f32 0.0, %v5165
        %v5167 = vpop.f32.mrf.mxu0
        %v5168 = vadd.f32 0.0, %v5167
        %5169 = vmatmul.bf16.gmra.mxu0 %v5094
        %v5170 = vpop.f32.mrf.mxu0
        %v5171 = vadd.f32 0.0, %v5170
        %v5172 = vpop.f32.mrf.mxu0
        %v5173 = vadd.f32 0.0, %v5172
        %5174 = vmatmul.bf16.gmra.mxu0 %v5097
        %v5175 = vpop.f32.mrf.mxu0
        %v5176 = vadd.f32 0.0, %v5175
        %v5177 = vpop.f32.mrf.mxu0
        %v5178 = vadd.f32 0.0, %v5177
        %5179 = vmatmul.bf16.gmra.mxu0 %v5100
        %v5180 = vpop.f32.mrf.mxu0
        %v5181 = vadd.f32 0.0, %v5180
        %v5182 = vpop.f32.mrf.mxu0
        %v5183 = vadd.f32 0.0, %v5182
        %5184 = vmatmul.bf16.gmra.mxu0 %v5103
        %v5185 = vpop.f32.mrf.mxu0
        %v5186 = vadd.f32 0.0, %v5185
        %v5187 = vpop.f32.mrf.mxu0
        %v5188 = vadd.f32 0.0, %v5187
        %5189 = vmatmul.bf16.gmra.mxu0 %v5106
        %v5190 = vpop.f32.mrf.mxu0
        %v5191 = vadd.f32 0.0, %v5190
        %v5192 = vpop.f32.mrf.mxu0
        %v5193 = vadd.f32 0.0, %v5192
        %5194 = vmatmul.bf16.gmra.mxu0 %v5109
        %v5195 = vpop.f32.mrf.mxu0
        %v5196 = vadd.f32 0.0, %v5195
        %v5197 = vpop.f32.mrf.mxu0
        %v5198 = vadd.f32 0.0, %v5197
        %5199 = vdwg.mxu0
        %v5200 = vadd.f32 %v3811, %v5121
        %v5201 = vadd.f32 %v3813, %v5123
        %v5202 = vadd.f32 %v3816, %v5126
        %v5203 = vadd.f32 %v3818, %v5128
        %v5204 = vadd.f32 %v3821, %v5131
        %v5205 = vadd.f32 %v3823, %v5133
        %v5206 = vadd.f32 %v3826, %v5136
        %v5207 = vadd.f32 %v3828, %v5138
        %v5208 = vadd.f32 %v3831, %v5141
        %v5209 = vadd.f32 %v3833, %v5143
        %v5210 = vadd.f32 %v3836, %v5146
        %v5211 = vadd.f32 %v3838, %v5148
        %v5212 = vadd.f32 %v3841, %v5151
        %v5213 = vadd.f32 %v3843, %v5153
        %v5214 = vadd.f32 %v3846, %v5156
        %v5215 = vadd.f32 %v3848, %v5158
        %v5216 = vadd.f32 %v3851, %v5161
        %v5217 = vadd.f32 %v3853, %v5163
        %v5218 = vadd.f32 %v3856, %v5166
        %v5219 = vadd.f32 %v3858, %v5168
        %v5220 = vadd.f32 %v3861, %v5171
        %v5221 = vadd.f32 %v3863, %v5173
        %v5222 = vadd.f32 %v3866, %v5176
        %v5223 = vadd.f32 %v3868, %v5178
        %v5224 = vadd.f32 %v3871, %v5181
        %v5225 = vadd.f32 %v3873, %v5183
        %v5226 = vadd.f32 %v3876, %v5186
        %v5227 = vadd.f32 %v3878, %v5188
        %v5228 = vadd.f32 %v3881, %v5191
        %v5229 = vadd.f32 %v3883, %v5193
        %v5230 = vadd.f32 %v3886, %v5196
        %v5231 = vadd.f32 %v3888, %v5198
        %s5232 = scalar_lea.vmem [#allocation11], 1536
        %v5233 = vld [vmem:[%s5232] sm:$0xff]
        %v5234 = vld [vmem:[%s5232 + $0x8] sm:$0xff]
        %v5235 = vld [vmem:[%s5232 + $0x10] sm:$0xff]
        %v5236 = vld [vmem:[%s5232 + $0x18] sm:$0xff]
        %v5237 = vld [vmem:[%s5232 + $0x20] sm:$0xff]
        %v5238 = vld [vmem:[%s5232 + $0x28] sm:$0xff]
        %v5239 = vld [vmem:[%s5232 + $0x30] sm:$0xff]
        %v5240 = vld [vmem:[%s5232 + $0x38] sm:$0xff]
        %v5241 = vld [vmem:[%s5232 + $0x40] sm:$0xff]
        %v5242 = vld [vmem:[%s5232 + $0x48] sm:$0xff]
        %v5243 = vld [vmem:[%s5232 + $0x50] sm:$0xff]
        %v5244 = vld [vmem:[%s5232 + $0x58] sm:$0xff]
        %v5245 = vld [vmem:[%s5232 + $0x60] sm:$0xff]
        %v5246 = vld [vmem:[%s5232 + $0x68] sm:$0xff]
        %v5247 = vld [vmem:[%s5232 + $0x70] sm:$0xff]
        %v5248 = vld [vmem:[%s5232 + $0x78] sm:$0xff]
        %v5249 = vld [vmem:[%s5232 + $0x80] sm:$0xff]
        %v5250 = vld [vmem:[%s5232 + $0x88] sm:$0xff]
        %v5251 = vld [vmem:[%s5232 + $0x90] sm:$0xff]
        %v5252 = vld [vmem:[%s5232 + $0x98] sm:$0xff]
        %v5253 = vld [vmem:[%s5232 + $0xa0] sm:$0xff]
        %v5254 = vld [vmem:[%s5232 + $0xa8] sm:$0xff]
        %v5255 = vld [vmem:[%s5232 + $0xb0] sm:$0xff]
        %v5256 = vld [vmem:[%s5232 + $0xb8] sm:$0xff]
        %v5257 = vld [vmem:[%s5232 + $0xc0] sm:$0xff]
        %v5258 = vld [vmem:[%s5232 + $0xc8] sm:$0xff]
        %v5259 = vld [vmem:[%s5232 + $0xd0] sm:$0xff]
        %v5260 = vld [vmem:[%s5232 + $0xd8] sm:$0xff]
        %v5261 = vld [vmem:[%s5232 + $0xe0] sm:$0xff]
        %v5262 = vld [vmem:[%s5232 + $0xe8] sm:$0xff]
        %v5263 = vld [vmem:[%s5232 + $0xf0] sm:$0xff]
        %v5264 = vld [vmem:[%s5232 + $0xf8] sm:$0xff]
        %v5265 = vld [vmem:[%s5232 + $0x100] sm:$0xff]
        %v5266 = vld [vmem:[%s5232 + $0x108] sm:$0xff]
        %v5267 = vld [vmem:[%s5232 + $0x110] sm:$0xff]
        %v5268 = vld [vmem:[%s5232 + $0x118] sm:$0xff]
        %v5269 = vld [vmem:[%s5232 + $0x120] sm:$0xff]
        %v5270 = vld [vmem:[%s5232 + $0x128] sm:$0xff]
        %v5271 = vld [vmem:[%s5232 + $0x130] sm:$0xff]
        %v5272 = vld [vmem:[%s5232 + $0x138] sm:$0xff]
        %v5273 = vld [vmem:[%s5232 + $0x140] sm:$0xff]
        %v5274 = vld [vmem:[%s5232 + $0x148] sm:$0xff]
        %v5275 = vld [vmem:[%s5232 + $0x150] sm:$0xff]
        %v5276 = vld [vmem:[%s5232 + $0x158] sm:$0xff]
        %v5277 = vld [vmem:[%s5232 + $0x160] sm:$0xff]
        %v5278 = vld [vmem:[%s5232 + $0x168] sm:$0xff]
        %v5279 = vld [vmem:[%s5232 + $0x170] sm:$0xff]
        %v5280 = vld [vmem:[%s5232 + $0x178] sm:$0xff]
        %v5281 = vld [vmem:[%s5232 + $0x180] sm:$0xff]
        %v5282 = vld [vmem:[%s5232 + $0x188] sm:$0xff]
        %v5283 = vld [vmem:[%s5232 + $0x190] sm:$0xff]
        %v5284 = vld [vmem:[%s5232 + $0x198] sm:$0xff]
        %v5285 = vld [vmem:[%s5232 + $0x1a0] sm:$0xff]
        %v5286 = vld [vmem:[%s5232 + $0x1a8] sm:$0xff]
        %v5287 = vld [vmem:[%s5232 + $0x1b0] sm:$0xff]
        %v5288 = vld [vmem:[%s5232 + $0x1b8] sm:$0xff]
        %v5289 = vld [vmem:[%s5232 + $0x1c0] sm:$0xff]
        %v5290 = vld [vmem:[%s5232 + $0x1c8] sm:$0xff]
        %v5291 = vld [vmem:[%s5232 + $0x1d0] sm:$0xff]
        %v5292 = vld [vmem:[%s5232 + $0x1d8] sm:$0xff]
        %v5293 = vld [vmem:[%s5232 + $0x1e0] sm:$0xff]
        %v5294 = vld [vmem:[%s5232 + $0x1e8] sm:$0xff]
        %v5295 = vld [vmem:[%s5232 + $0x1f0] sm:$0xff]
        %v5296 = vld [vmem:[%s5232 + $0x1f8] sm:$0xff]
        %5297 = vrot.lane.b32.xlu0 %v1254, 32
        %v5298 = vpop.permute.xlu0 %5297
        %5299 = vrot.lane.b32.xlu0 %v1255, 32
        %v5300 = vpop.permute.xlu0 %5299
        %5301 = vrot.lane.b32.xlu0 %v1256, 32
        %v5302 = vpop.permute.xlu0 %5301
        %5303 = vrot.lane.b32.xlu0 %v1257, 32
        %v5304 = vpop.permute.xlu0 %5303
        %5305 = vrot.lane.b32.xlu0 %v1258, 32
        %v5306 = vpop.permute.xlu0 %5305
        %5307 = vrot.lane.b32.xlu0 %v1259, 32
        %v5308 = vpop.permute.xlu0 %5307
        %5309 = vrot.lane.b32.xlu0 %v1260, 32
        %v5310 = vpop.permute.xlu0 %5309
        %5311 = vrot.lane.b32.xlu0 %v1261, 32
        %v5312 = vpop.permute.xlu0 %5311
        %5313 = vrot.lane.b32.xlu0 %v1262, 32
        %v5314 = vpop.permute.xlu0 %5313
        %5315 = vrot.lane.b32.xlu0 %v1263, 32
        %v5316 = vpop.permute.xlu0 %5315
        %5317 = vrot.lane.b32.xlu0 %v1264, 32
        %v5318 = vpop.permute.xlu0 %5317
        %5319 = vrot.lane.b32.xlu0 %v1265, 32
        %v5320 = vpop.permute.xlu0 %5319
        %5321 = vrot.lane.b32.xlu0 %v1266, 32
        %v5322 = vpop.permute.xlu0 %5321
        %5323 = vrot.lane.b32.xlu0 %v1267, 32
        %v5324 = vpop.permute.xlu0 %5323
        %5325 = vrot.lane.b32.xlu0 %v1268, 32
        %v5326 = vpop.permute.xlu0 %5325
        %5327 = vrot.lane.b32.xlu0 %v1269, 32
        %v5328 = vpop.permute.xlu0 %5327
        %5329 = vrot.lane.b32.xlu0 %v1334, 32
        %v5330 = vpop.permute.xlu0 %5329
        %5331 = vrot.lane.b32.xlu0 %v1335, 32
        %v5332 = vpop.permute.xlu0 %5331
        %5333 = vrot.lane.b32.xlu0 %v1336, 32
        %v5334 = vpop.permute.xlu0 %5333
        %5335 = vrot.lane.b32.xlu0 %v1337, 32
        %v5336 = vpop.permute.xlu0 %5335
        %5337 = vrot.lane.b32.xlu0 %v1338, 32
        %v5338 = vpop.permute.xlu0 %5337
        %5339 = vrot.lane.b32.xlu0 %v1339, 32
        %v5340 = vpop.permute.xlu0 %5339
        %5341 = vrot.lane.b32.xlu0 %v1340, 32
        %v5342 = vpop.permute.xlu0 %5341
        %5343 = vrot.lane.b32.xlu0 %v1341, 32
        %v5344 = vpop.permute.xlu0 %5343
        %5345 = vrot.lane.b32.xlu0 %v1342, 32
        %v5346 = vpop.permute.xlu0 %5345
        %5347 = vrot.lane.b32.xlu0 %v1343, 32
        %v5348 = vpop.permute.xlu0 %5347
        %5349 = vrot.lane.b32.xlu0 %v1344, 32
        %v5350 = vpop.permute.xlu0 %5349
        %5351 = vrot.lane.b32.xlu0 %v1345, 32
        %v5352 = vpop.permute.xlu0 %5351
        %5353 = vrot.lane.b32.xlu0 %v1346, 32
        %v5354 = vpop.permute.xlu0 %5353
        %5355 = vrot.lane.b32.xlu0 %v1347, 32
        %v5356 = vpop.permute.xlu0 %5355
        %5357 = vrot.lane.b32.xlu0 %v1348, 32
        %v5358 = vpop.permute.xlu0 %5357
        %5359 = vrot.lane.b32.xlu0 %v1349, 32
        %v5360 = vpop.permute.xlu0 %5359
        %v5362 = vsel %vm1350, %v5298, 0
        %v5365 = vsel %vm1350, %v5300, 0
        %v5368 = vsel %vm1350, %v5302, 0
        %v5371 = vsel %vm1350, %v5304, 0
        %v5374 = vsel %vm1350, %v5306, 0
        %v5377 = vsel %vm1350, %v5308, 0
        %v5380 = vsel %vm1350, %v5310, 0
        %v5383 = vsel %vm1350, %v5312, 0
        %v5386 = vsel %vm1350, %v5314, 0
        %v5389 = vsel %vm1350, %v5316, 0
        %v5392 = vsel %vm1350, %v5318, 0
        %v5395 = vsel %vm1350, %v5320, 0
        %v5398 = vsel %vm1350, %v5322, 0
        %v5401 = vsel %vm1350, %v5324, 0
        %v5404 = vsel %vm1350, %v5326, 0
        %v5407 = vsel %vm1350, %v5328, 0
        %v5410 = vsel %vm1350, %v5330, 0
        %v5413 = vsel %vm1350, %v5332, 0
        %v5416 = vsel %vm1350, %v5334, 0
        %v5419 = vsel %vm1350, %v5336, 0
        %v5422 = vsel %vm1350, %v5338, 0
        %v5425 = vsel %vm1350, %v5340, 0
        %v5428 = vsel %vm1350, %v5342, 0
        %v5431 = vsel %vm1350, %v5344, 0
        %v5434 = vsel %vm1350, %v5346, 0
        %v5437 = vsel %vm1350, %v5348, 0
        %v5440 = vsel %vm1350, %v5350, 0
        %v5443 = vsel %vm1350, %v5352, 0
        %v5446 = vsel %vm1350, %v5354, 0
        %v5449 = vsel %vm1350, %v5356, 0
        %v5452 = vsel %vm1350, %v5358, 0
        %v5455 = vsel %vm1350, %v5360, 0
        %5457 = vmatpush.bf16.xpose.msra.mxu0 %v5431
        %5458 = vmatpush.bf16.xpose.msra.mxu0 %v5428
        %5459 = vmatpush.bf16.xpose.msra.mxu0 %v5425
        %5460 = vmatpush.bf16.xpose.msra.mxu0 %v5422
        %5461 = vmatpush.bf16.xpose.msra.mxu0 %v5419
        %5462 = vmatpush.bf16.xpose.msra.mxu0 %v5416
        %5463 = vmatpush.bf16.xpose.msra.mxu0 %v5413
        %5464 = vmatpush.bf16.xpose.msra.mxu0 %v5410
        %5465 = vmatmul.bf16.gmra.mxu0 %v5362
        %v5466 = vpop.f32.mrf.mxu0
        %v5467 = vadd.f32 %v5233, %v5466
        %v5468 = vpop.f32.mrf.mxu0
        %v5469 = vadd.f32 %v5235, %v5468
        %5470 = vmatmul.bf16.gmra.mxu0 %v5365
        %v5471 = vpop.f32.mrf.mxu0
        %v5472 = vadd.f32 %v5237, %v5471
        %v5473 = vpop.f32.mrf.mxu0
        %v5474 = vadd.f32 %v5239, %v5473
        %5475 = vmatmul.bf16.gmra.mxu0 %v5368
        %v5476 = vpop.f32.mrf.mxu0
        %v5477 = vadd.f32 %v5241, %v5476
        %v5478 = vpop.f32.mrf.mxu0
        %v5479 = vadd.f32 %v5243, %v5478
        %5480 = vmatmul.bf16.gmra.mxu0 %v5371
        %v5481 = vpop.f32.mrf.mxu0
        %v5482 = vadd.f32 %v5245, %v5481
        %v5483 = vpop.f32.mrf.mxu0
        %v5484 = vadd.f32 %v5247, %v5483
        %5485 = vmatmul.bf16.gmra.mxu0 %v5374
        %v5486 = vpop.f32.mrf.mxu0
        %v5487 = vadd.f32 %v5249, %v5486
        %v5488 = vpop.f32.mrf.mxu0
        %v5489 = vadd.f32 %v5251, %v5488
        %5490 = vmatmul.bf16.gmra.mxu0 %v5377
        %v5491 = vpop.f32.mrf.mxu0
        %v5492 = vadd.f32 %v5253, %v5491
        %v5493 = vpop.f32.mrf.mxu0
        %v5494 = vadd.f32 %v5255, %v5493
        %5495 = vmatmul.bf16.gmra.mxu0 %v5380
        %v5496 = vpop.f32.mrf.mxu0
        %v5497 = vadd.f32 %v5257, %v5496
        %v5498 = vpop.f32.mrf.mxu0
        %v5499 = vadd.f32 %v5259, %v5498
        %5500 = vmatmul.bf16.gmra.mxu0 %v5383
        %v5501 = vpop.f32.mrf.mxu0
        %v5502 = vadd.f32 %v5261, %v5501
        %v5503 = vpop.f32.mrf.mxu0
        %v5504 = vadd.f32 %v5263, %v5503
        %5505 = vmatmul.bf16.gmra.mxu0 %v5386
        %v5506 = vpop.f32.mrf.mxu0
        %v5507 = vadd.f32 %v5265, %v5506
        %v5508 = vpop.f32.mrf.mxu0
        %v5509 = vadd.f32 %v5267, %v5508
        %5510 = vmatmul.bf16.gmra.mxu0 %v5389
        %v5511 = vpop.f32.mrf.mxu0
        %v5512 = vadd.f32 %v5269, %v5511
        %v5513 = vpop.f32.mrf.mxu0
        %v5514 = vadd.f32 %v5271, %v5513
        %5515 = vmatmul.bf16.gmra.mxu0 %v5392
        %v5516 = vpop.f32.mrf.mxu0
        %v5517 = vadd.f32 %v5273, %v5516
        %v5518 = vpop.f32.mrf.mxu0
        %v5519 = vadd.f32 %v5275, %v5518
        %5520 = vmatmul.bf16.gmra.mxu0 %v5395
        %v5521 = vpop.f32.mrf.mxu0
        %v5522 = vadd.f32 %v5277, %v5521
        %v5523 = vpop.f32.mrf.mxu0
        %v5524 = vadd.f32 %v5279, %v5523
        %5525 = vmatmul.bf16.gmra.mxu0 %v5398
        %v5526 = vpop.f32.mrf.mxu0
        %v5527 = vadd.f32 %v5281, %v5526
        %v5528 = vpop.f32.mrf.mxu0
        %v5529 = vadd.f32 %v5283, %v5528
        %5530 = vmatmul.bf16.gmra.mxu0 %v5401
        %v5531 = vpop.f32.mrf.mxu0
        %v5532 = vadd.f32 %v5285, %v5531
        %v5533 = vpop.f32.mrf.mxu0
        %v5534 = vadd.f32 %v5287, %v5533
        %5535 = vmatmul.bf16.gmra.mxu0 %v5404
        %v5536 = vpop.f32.mrf.mxu0
        %v5537 = vadd.f32 %v5289, %v5536
        %v5538 = vpop.f32.mrf.mxu0
        %v5539 = vadd.f32 %v5291, %v5538
        %5540 = vmatmul.bf16.gmra.mxu0 %v5407
        %v5541 = vpop.f32.mrf.mxu0
        %v5542 = vadd.f32 %v5293, %v5541
        %v5543 = vpop.f32.mrf.mxu0
        %v5544 = vadd.f32 %v5295, %v5543
        %5545 = vdwg.mxu0
        %5546 = vmatpush.bf16.xpose.msra.mxu0 %v5455
        %5547 = vmatpush.bf16.xpose.msra.mxu0 %v5452
        %5548 = vmatpush.bf16.xpose.msra.mxu0 %v5449
        %5549 = vmatpush.bf16.xpose.msra.mxu0 %v5446
        %5550 = vmatpush.bf16.xpose.msra.mxu0 %v5443
        %5551 = vmatpush.bf16.xpose.msra.mxu0 %v5440
        %5552 = vmatpush.bf16.xpose.msra.mxu0 %v5437
        %5553 = vmatpush.bf16.xpose.msra.mxu0 %v5434
        %5554 = vmatmul.bf16.gmra.mxu0 %v5362
        %v5555 = vpop.f32.mrf.mxu0
        %v5556 = vadd.f32 %v5234, %v5555
        %v5557 = vpop.f32.mrf.mxu0
        %v5558 = vadd.f32 %v5236, %v5557
        %5559 = vmatmul.bf16.gmra.mxu0 %v5365
        %v5560 = vpop.f32.mrf.mxu0
        %v5561 = vadd.f32 %v5238, %v5560
        %v5562 = vpop.f32.mrf.mxu0
        %v5563 = vadd.f32 %v5240, %v5562
        %5564 = vmatmul.bf16.gmra.mxu0 %v5368
        %v5565 = vpop.f32.mrf.mxu0
        %v5566 = vadd.f32 %v5242, %v5565
        %v5567 = vpop.f32.mrf.mxu0
        %v5568 = vadd.f32 %v5244, %v5567
        %5569 = vmatmul.bf16.gmra.mxu0 %v5371
        %v5570 = vpop.f32.mrf.mxu0
        %v5571 = vadd.f32 %v5246, %v5570
        %v5572 = vpop.f32.mrf.mxu0
        %v5573 = vadd.f32 %v5248, %v5572
        %5574 = vmatmul.bf16.gmra.mxu0 %v5374
        %v5575 = vpop.f32.mrf.mxu0
        %v5576 = vadd.f32 %v5250, %v5575
        %v5577 = vpop.f32.mrf.mxu0
        %v5578 = vadd.f32 %v5252, %v5577
        %5579 = vmatmul.bf16.gmra.mxu0 %v5377
        %v5580 = vpop.f32.mrf.mxu0
        %v5581 = vadd.f32 %v5254, %v5580
        %v5582 = vpop.f32.mrf.mxu0
        %v5583 = vadd.f32 %v5256, %v5582
        %5584 = vmatmul.bf16.gmra.mxu0 %v5380
        %v5585 = vpop.f32.mrf.mxu0
        %v5586 = vadd.f32 %v5258, %v5585
        %v5587 = vpop.f32.mrf.mxu0
        %v5588 = vadd.f32 %v5260, %v5587
        %5589 = vmatmul.bf16.gmra.mxu0 %v5383
        %v5590 = vpop.f32.mrf.mxu0
        %v5591 = vadd.f32 %v5262, %v5590
        %v5592 = vpop.f32.mrf.mxu0
        %v5593 = vadd.f32 %v5264, %v5592
        %5594 = vmatmul.bf16.gmra.mxu0 %v5386
        %v5595 = vpop.f32.mrf.mxu0
        %v5596 = vadd.f32 %v5266, %v5595
        %v5597 = vpop.f32.mrf.mxu0
        %v5598 = vadd.f32 %v5268, %v5597
        %5599 = vmatmul.bf16.gmra.mxu0 %v5389
        %v5600 = vpop.f32.mrf.mxu0
        %v5601 = vadd.f32 %v5270, %v5600
        %v5602 = vpop.f32.mrf.mxu0
        %v5603 = vadd.f32 %v5272, %v5602
        %5604 = vmatmul.bf16.gmra.mxu0 %v5392
        %v5605 = vpop.f32.mrf.mxu0
        %v5606 = vadd.f32 %v5274, %v5605
        %v5607 = vpop.f32.mrf.mxu0
        %v5608 = vadd.f32 %v5276, %v5607
        %5609 = vmatmul.bf16.gmra.mxu0 %v5395
        %v5610 = vpop.f32.mrf.mxu0
        %v5611 = vadd.f32 %v5278, %v5610
        %v5612 = vpop.f32.mrf.mxu0
        %v5613 = vadd.f32 %v5280, %v5612
        %5614 = vmatmul.bf16.gmra.mxu0 %v5398
        %v5615 = vpop.f32.mrf.mxu0
        %v5616 = vadd.f32 %v5282, %v5615
        %v5617 = vpop.f32.mrf.mxu0
        %v5618 = vadd.f32 %v5284, %v5617
        %5619 = vmatmul.bf16.gmra.mxu0 %v5401
        %v5620 = vpop.f32.mrf.mxu0
        %v5621 = vadd.f32 %v5286, %v5620
        %v5622 = vpop.f32.mrf.mxu0
        %v5623 = vadd.f32 %v5288, %v5622
        %5624 = vmatmul.bf16.gmra.mxu0 %v5404
        %v5625 = vpop.f32.mrf.mxu0
        %v5626 = vadd.f32 %v5290, %v5625
        %v5627 = vpop.f32.mrf.mxu0
        %v5628 = vadd.f32 %v5292, %v5627
        %5629 = vmatmul.bf16.gmra.mxu0 %v5407
        %v5630 = vpop.f32.mrf.mxu0
        %v5631 = vadd.f32 %v5294, %v5630
        %v5632 = vpop.f32.mrf.mxu0
        %v5633 = vadd.f32 %v5296, %v5632
        %5634 = vdwg.mxu0
        %v5635 = vmax.f32 %v5467, %v5556
        %5636 = vmax.xlane.f32.xlu0 %v5635
        %v5637 = vpop.xlane.xlu0 %5636
        %v5638 = vmax.f32 %v5469, %v5558
        %5639 = vmax.xlane.f32.xlu0 %v5638
        %v5640 = vpop.xlane.xlu0 %5639
        %v5641 = vmax.f32 %v5472, %v5561
        %5642 = vmax.xlane.f32.xlu0 %v5641
        %v5643 = vpop.xlane.xlu0 %5642
        %v5644 = vmax.f32 %v5474, %v5563
        %5645 = vmax.xlane.f32.xlu0 %v5644
        %v5646 = vpop.xlane.xlu0 %5645
        %v5647 = vmax.f32 %v5477, %v5566
        %5648 = vmax.xlane.f32.xlu0 %v5647
        %v5649 = vpop.xlane.xlu0 %5648
        %v5650 = vmax.f32 %v5479, %v5568
        %5651 = vmax.xlane.f32.xlu0 %v5650
        %v5652 = vpop.xlane.xlu0 %5651
        %v5653 = vmax.f32 %v5482, %v5571
        %5654 = vmax.xlane.f32.xlu0 %v5653
        %v5655 = vpop.xlane.xlu0 %5654
        %v5656 = vmax.f32 %v5484, %v5573
        %5657 = vmax.xlane.f32.xlu0 %v5656
        %v5658 = vpop.xlane.xlu0 %5657
        %v5659 = vmax.f32 %v5487, %v5576
        %5660 = vmax.xlane.f32.xlu0 %v5659
        %v5661 = vpop.xlane.xlu0 %5660
        %v5662 = vmax.f32 %v5489, %v5578
        %5663 = vmax.xlane.f32.xlu0 %v5662
        %v5664 = vpop.xlane.xlu0 %5663
        %v5665 = vmax.f32 %v5492, %v5581
        %5666 = vmax.xlane.f32.xlu0 %v5665
        %v5667 = vpop.xlane.xlu0 %5666
        %v5668 = vmax.f32 %v5494, %v5583
        %5669 = vmax.xlane.f32.xlu0 %v5668
        %v5670 = vpop.xlane.xlu0 %5669
        %v5671 = vmax.f32 %v5497, %v5586
        %5672 = vmax.xlane.f32.xlu0 %v5671
        %v5673 = vpop.xlane.xlu0 %5672
        %v5674 = vmax.f32 %v5499, %v5588
        %5675 = vmax.xlane.f32.xlu0 %v5674
        %v5676 = vpop.xlane.xlu0 %5675
        %v5677 = vmax.f32 %v5502, %v5591
        %5678 = vmax.xlane.f32.xlu0 %v5677
        %v5679 = vpop.xlane.xlu0 %5678
        %v5680 = vmax.f32 %v5504, %v5593
        %5681 = vmax.xlane.f32.xlu0 %v5680
        %v5682 = vpop.xlane.xlu0 %5681
        %v5683 = vmax.f32 %v5507, %v5596
        %5684 = vmax.xlane.f32.xlu0 %v5683
        %v5685 = vpop.xlane.xlu0 %5684
        %v5686 = vmax.f32 %v5509, %v5598
        %5687 = vmax.xlane.f32.xlu0 %v5686
        %v5688 = vpop.xlane.xlu0 %5687
        %v5689 = vmax.f32 %v5512, %v5601
        %5690 = vmax.xlane.f32.xlu0 %v5689
        %v5691 = vpop.xlane.xlu0 %5690
        %v5692 = vmax.f32 %v5514, %v5603
        %5693 = vmax.xlane.f32.xlu0 %v5692
        %v5694 = vpop.xlane.xlu0 %5693
        %v5695 = vmax.f32 %v5517, %v5606
        %5696 = vmax.xlane.f32.xlu0 %v5695
        %v5697 = vpop.xlane.xlu0 %5696
        %v5698 = vmax.f32 %v5519, %v5608
        %5699 = vmax.xlane.f32.xlu0 %v5698
        %v5700 = vpop.xlane.xlu0 %5699
        %v5701 = vmax.f32 %v5522, %v5611
        %5702 = vmax.xlane.f32.xlu0 %v5701
        %v5703 = vpop.xlane.xlu0 %5702
        %v5704 = vmax.f32 %v5524, %v5613
        %5705 = vmax.xlane.f32.xlu0 %v5704
        %v5706 = vpop.xlane.xlu0 %5705
        %v5707 = vmax.f32 %v5527, %v5616
        %5708 = vmax.xlane.f32.xlu0 %v5707
        %v5709 = vpop.xlane.xlu0 %5708
        %v5710 = vmax.f32 %v5529, %v5618
        %5711 = vmax.xlane.f32.xlu0 %v5710
        %v5712 = vpop.xlane.xlu0 %5711
        %v5713 = vmax.f32 %v5532, %v5621
        %5714 = vmax.xlane.f32.xlu0 %v5713
        %v5715 = vpop.xlane.xlu0 %5714
        %v5716 = vmax.f32 %v5534, %v5623
        %5717 = vmax.xlane.f32.xlu0 %v5716
        %v5718 = vpop.xlane.xlu0 %5717
        %v5719 = vmax.f32 %v5537, %v5626
        %5720 = vmax.xlane.f32.xlu0 %v5719
        %v5721 = vpop.xlane.xlu0 %5720
        %v5722 = vmax.f32 %v5539, %v5628
        %5723 = vmax.xlane.f32.xlu0 %v5722
        %v5724 = vpop.xlane.xlu0 %5723
        %v5725 = vmax.f32 %v5542, %v5631
        %5726 = vmax.xlane.f32.xlu0 %v5725
        %v5727 = vpop.xlane.xlu0 %5726
        %v5728 = vmax.f32 %v5544, %v5633
        %5729 = vmax.xlane.f32.xlu0 %v5728
        %v5730 = vpop.xlane.xlu0 %5729
        %v5731 = vsub.f32 %v5467, %v5637
        %v5732 = vsub.f32 %v5556, %v5637
        %v5733 = vsub.f32 %v5469, %v5640
        %v5734 = vsub.f32 %v5558, %v5640
        %v5735 = vsub.f32 %v5472, %v5643
        %v5736 = vsub.f32 %v5561, %v5643
        %v5737 = vsub.f32 %v5474, %v5646
        %v5738 = vsub.f32 %v5563, %v5646
        %v5739 = vsub.f32 %v5477, %v5649
        %v5740 = vsub.f32 %v5566, %v5649
        %v5741 = vsub.f32 %v5479, %v5652
        %v5742 = vsub.f32 %v5568, %v5652
        %v5743 = vsub.f32 %v5482, %v5655
        %v5744 = vsub.f32 %v5571, %v5655
        %v5745 = vsub.f32 %v5484, %v5658
        %v5746 = vsub.f32 %v5573, %v5658
        %v5747 = vsub.f32 %v5487, %v5661
        %v5748 = vsub.f32 %v5576, %v5661
        %v5749 = vsub.f32 %v5489, %v5664
        %v5750 = vsub.f32 %v5578, %v5664
        %v5751 = vsub.f32 %v5492, %v5667
        %v5752 = vsub.f32 %v5581, %v5667
        %v5753 = vsub.f32 %v5494, %v5670
        %v5754 = vsub.f32 %v5583, %v5670
        %v5755 = vsub.f32 %v5497, %v5673
        %v5756 = vsub.f32 %v5586, %v5673
        %v5757 = vsub.f32 %v5499, %v5676
        %v5758 = vsub.f32 %v5588, %v5676
        %v5759 = vsub.f32 %v5502, %v5679
        %v5760 = vsub.f32 %v5591, %v5679
        %v5761 = vsub.f32 %v5504, %v5682
        %v5762 = vsub.f32 %v5593, %v5682
        %v5763 = vsub.f32 %v5507, %v5685
        %v5764 = vsub.f32 %v5596, %v5685
        %v5765 = vsub.f32 %v5509, %v5688
        %v5766 = vsub.f32 %v5598, %v5688
        %v5767 = vsub.f32 %v5512, %v5691
        %v5768 = vsub.f32 %v5601, %v5691
        %v5769 = vsub.f32 %v5514, %v5694
        %v5770 = vsub.f32 %v5603, %v5694
        %v5771 = vsub.f32 %v5517, %v5697
        %v5772 = vsub.f32 %v5606, %v5697
        %v5773 = vsub.f32 %v5519, %v5700
        %v5774 = vsub.f32 %v5608, %v5700
        %v5775 = vsub.f32 %v5522, %v5703
        %v5776 = vsub.f32 %v5611, %v5703
        %v5777 = vsub.f32 %v5524, %v5706
        %v5778 = vsub.f32 %v5613, %v5706
        %v5779 = vsub.f32 %v5527, %v5709
        %v5780 = vsub.f32 %v5616, %v5709
        %v5781 = vsub.f32 %v5529, %v5712
        %v5782 = vsub.f32 %v5618, %v5712
        %v5783 = vsub.f32 %v5532, %v5715
        %v5784 = vsub.f32 %v5621, %v5715
        %v5785 = vsub.f32 %v5534, %v5718
        %v5786 = vsub.f32 %v5623, %v5718
        %v5787 = vsub.f32 %v5537, %v5721
        %v5788 = vsub.f32 %v5626, %v5721
        %v5789 = vsub.f32 %v5539, %v5724
        %v5790 = vsub.f32 %v5628, %v5724
        %v5791 = vsub.f32 %v5542, %v5727
        %v5792 = vsub.f32 %v5631, %v5727
        %v5793 = vsub.f32 %v5544, %v5730
        %v5794 = vsub.f32 %v5633, %v5730
        %v5795 = vmul.f32 %v5731, 1.442695
        %v5796 = vpow.pop %v5795
        %v5797 = vmul.f32 %v5732, 1.442695
        %v5798 = vpow.pop %v5797
        %v5799 = vmul.f32 %v5733, 1.442695
        %v5800 = vpow.pop %v5799
        %v5801 = vmul.f32 %v5734, 1.442695
        %v5802 = vpow.pop %v5801
        %v5803 = vmul.f32 %v5735, 1.442695
        %v5804 = vpow.pop %v5803
        %v5805 = vmul.f32 %v5736, 1.442695
        %v5806 = vpow.pop %v5805
        %v5807 = vmul.f32 %v5737, 1.442695
        %v5808 = vpow.pop %v5807
        %v5809 = vmul.f32 %v5738, 1.442695
        %v5810 = vpow.pop %v5809
        %v5811 = vmul.f32 %v5739, 1.442695
        %v5812 = vpow.pop %v5811
        %v5813 = vmul.f32 %v5740, 1.442695
        %v5814 = vpow.pop %v5813
        %v5815 = vmul.f32 %v5741, 1.442695
        %v5816 = vpow.pop %v5815
        %v5817 = vmul.f32 %v5742, 1.442695
        %v5818 = vpow.pop %v5817
        %v5819 = vmul.f32 %v5743, 1.442695
        %v5820 = vpow.pop %v5819
        %v5821 = vmul.f32 %v5744, 1.442695
        %v5822 = vpow.pop %v5821
        %v5823 = vmul.f32 %v5745, 1.442695
        %v5824 = vpow.pop %v5823
        %v5825 = vmul.f32 %v5746, 1.442695
        %v5826 = vpow.pop %v5825
        %v5827 = vmul.f32 %v5747, 1.442695
        %v5828 = vpow.pop %v5827
        %v5829 = vmul.f32 %v5748, 1.442695
        %v5830 = vpow.pop %v5829
        %v5831 = vmul.f32 %v5749, 1.442695
        %v5832 = vpow.pop %v5831
        %v5833 = vmul.f32 %v5750, 1.442695
        %v5834 = vpow.pop %v5833
        %v5835 = vmul.f32 %v5751, 1.442695
        %v5836 = vpow.pop %v5835
        %v5837 = vmul.f32 %v5752, 1.442695
        %v5838 = vpow.pop %v5837
        %v5839 = vmul.f32 %v5753, 1.442695
        %v5840 = vpow.pop %v5839
        %v5841 = vmul.f32 %v5754, 1.442695
        %v5842 = vpow.pop %v5841
        %v5843 = vmul.f32 %v5755, 1.442695
        %v5844 = vpow.pop %v5843
        %v5845 = vmul.f32 %v5756, 1.442695
        %v5846 = vpow.pop %v5845
        %v5847 = vmul.f32 %v5757, 1.442695
        %v5848 = vpow.pop %v5847
        %v5849 = vmul.f32 %v5758, 1.442695
        %v5850 = vpow.pop %v5849
        %v5851 = vmul.f32 %v5759, 1.442695
        %v5852 = vpow.pop %v5851
        %v5853 = vmul.f32 %v5760, 1.442695
        %v5854 = vpow.pop %v5853
        %v5855 = vmul.f32 %v5761, 1.442695
        %v5856 = vpow.pop %v5855
        %v5857 = vmul.f32 %v5762, 1.442695
        %v5858 = vpow.pop %v5857
        %v5859 = vmul.f32 %v5763, 1.442695
        %v5860 = vpow.pop %v5859
        %v5861 = vmul.f32 %v5764, 1.442695
        %v5862 = vpow.pop %v5861
        %v5863 = vmul.f32 %v5765, 1.442695
        %v5864 = vpow.pop %v5863
        %v5865 = vmul.f32 %v5766, 1.442695
        %v5866 = vpow.pop %v5865
        %v5867 = vmul.f32 %v5767, 1.442695
        %v5868 = vpow.pop %v5867
        %v5869 = vmul.f32 %v5768, 1.442695
        %v5870 = vpow.pop %v5869
        %v5871 = vmul.f32 %v5769, 1.442695
        %v5872 = vpow.pop %v5871
        %v5873 = vmul.f32 %v5770, 1.442695
        %v5874 = vpow.pop %v5873
        %v5875 = vmul.f32 %v5771, 1.442695
        %v5876 = vpow.pop %v5875
        %v5877 = vmul.f32 %v5772, 1.442695
        %v5878 = vpow.pop %v5877
        %v5879 = vmul.f32 %v5773, 1.442695
        %v5880 = vpow.pop %v5879
        %v5881 = vmul.f32 %v5774, 1.442695
        %v5882 = vpow.pop %v5881
        %v5883 = vmul.f32 %v5775, 1.442695
        %v5884 = vpow.pop %v5883
        %v5885 = vmul.f32 %v5776, 1.442695
        %v5886 = vpow.pop %v5885
        %v5887 = vmul.f32 %v5777, 1.442695
        %v5888 = vpow.pop %v5887
        %v5889 = vmul.f32 %v5778, 1.442695
        %v5890 = vpow.pop %v5889
        %v5891 = vmul.f32 %v5779, 1.442695
        %v5892 = vpow.pop %v5891
        %v5893 = vmul.f32 %v5780, 1.442695
        %v5894 = vpow.pop %v5893
        %v5895 = vmul.f32 %v5781, 1.442695
        %v5896 = vpow.pop %v5895
        %v5897 = vmul.f32 %v5782, 1.442695
        %v5898 = vpow.pop %v5897
        %v5899 = vmul.f32 %v5783, 1.442695
        %v5900 = vpow.pop %v5899
        %v5901 = vmul.f32 %v5784, 1.442695
        %v5902 = vpow.pop %v5901
        %v5903 = vmul.f32 %v5785, 1.442695
        %v5904 = vpow.pop %v5903
        %v5905 = vmul.f32 %v5786, 1.442695
        %v5906 = vpow.pop %v5905
        %v5907 = vmul.f32 %v5787, 1.442695
        %v5908 = vpow.pop %v5907
        %v5909 = vmul.f32 %v5788, 1.442695
        %v5910 = vpow.pop %v5909
        %v5911 = vmul.f32 %v5789, 1.442695
        %v5912 = vpow.pop %v5911
        %v5913 = vmul.f32 %v5790, 1.442695
        %v5914 = vpow.pop %v5913
        %v5915 = vmul.f32 %v5791, 1.442695
        %v5916 = vpow.pop %v5915
        %v5917 = vmul.f32 %v5792, 1.442695
        %v5918 = vpow.pop %v5917
        %v5919 = vmul.f32 %v5793, 1.442695
        %v5920 = vpow.pop %v5919
        %v5921 = vmul.f32 %v5794, 1.442695
        %v5922 = vpow.pop %v5921
        %v5923 = vadd.f32 %v5796, %v5798
        %5924 = vadd.xlane.f32.xlu0 %v5923
        %v5925 = vpop.xlane.xlu0 %5924
        %v5926 = vadd.f32 %v5800, %v5802
        %5927 = vadd.xlane.f32.xlu0 %v5926
        %v5928 = vpop.xlane.xlu0 %5927
        %v5929 = vadd.f32 %v5804, %v5806
        %5930 = vadd.xlane.f32.xlu0 %v5929
        %v5931 = vpop.xlane.xlu0 %5930
        %v5932 = vadd.f32 %v5808, %v5810
        %5933 = vadd.xlane.f32.xlu0 %v5932
        %v5934 = vpop.xlane.xlu0 %5933
        %v5935 = vadd.f32 %v5812, %v5814
        %5936 = vadd.xlane.f32.xlu0 %v5935
        %v5937 = vpop.xlane.xlu0 %5936
        %v5938 = vadd.f32 %v5816, %v5818
        %5939 = vadd.xlane.f32.xlu0 %v5938
        %v5940 = vpop.xlane.xlu0 %5939
        %v5941 = vadd.f32 %v5820, %v5822
        %5942 = vadd.xlane.f32.xlu0 %v5941
        %v5943 = vpop.xlane.xlu0 %5942
        %v5944 = vadd.f32 %v5824, %v5826
        %5945 = vadd.xlane.f32.xlu0 %v5944
        %v5946 = vpop.xlane.xlu0 %5945
        %v5947 = vadd.f32 %v5828, %v5830
        %5948 = vadd.xlane.f32.xlu0 %v5947
        %v5949 = vpop.xlane.xlu0 %5948
        %v5950 = vadd.f32 %v5832, %v5834
        %5951 = vadd.xlane.f32.xlu0 %v5950
        %v5952 = vpop.xlane.xlu0 %5951
        %v5953 = vadd.f32 %v5836, %v5838
        %5954 = vadd.xlane.f32.xlu0 %v5953
        %v5955 = vpop.xlane.xlu0 %5954
        %v5956 = vadd.f32 %v5840, %v5842
        %5957 = vadd.xlane.f32.xlu0 %v5956
        %v5958 = vpop.xlane.xlu0 %5957
        %v5959 = vadd.f32 %v5844, %v5846
        %5960 = vadd.xlane.f32.xlu0 %v5959
        %v5961 = vpop.xlane.xlu0 %5960
        %v5962 = vadd.f32 %v5848, %v5850
        %5963 = vadd.xlane.f32.xlu0 %v5962
        %v5964 = vpop.xlane.xlu0 %5963
        %v5965 = vadd.f32 %v5852, %v5854
        %5966 = vadd.xlane.f32.xlu0 %v5965
        %v5967 = vpop.xlane.xlu0 %5966
        %v5968 = vadd.f32 %v5856, %v5858
        %5969 = vadd.xlane.f32.xlu0 %v5968
        %v5970 = vpop.xlane.xlu0 %5969
        %v5971 = vadd.f32 %v5860, %v5862
        %5972 = vadd.xlane.f32.xlu0 %v5971
        %v5973 = vpop.xlane.xlu0 %5972
        %v5974 = vadd.f32 %v5864, %v5866
        %5975 = vadd.xlane.f32.xlu0 %v5974
        %v5976 = vpop.xlane.xlu0 %5975
        %v5977 = vadd.f32 %v5868, %v5870
        %5978 = vadd.xlane.f32.xlu0 %v5977
        %v5979 = vpop.xlane.xlu0 %5978
        %v5980 = vadd.f32 %v5872, %v5874
        %5981 = vadd.xlane.f32.xlu0 %v5980
        %v5982 = vpop.xlane.xlu0 %5981
        %v5983 = vadd.f32 %v5876, %v5878
        %5984 = vadd.xlane.f32.xlu0 %v5983
        %v5985 = vpop.xlane.xlu0 %5984
        %v5986 = vadd.f32 %v5880, %v5882
        %5987 = vadd.xlane.f32.xlu0 %v5986
        %v5988 = vpop.xlane.xlu0 %5987
        %v5989 = vadd.f32 %v5884, %v5886
        %5990 = vadd.xlane.f32.xlu0 %v5989
        %v5991 = vpop.xlane.xlu0 %5990
        %v5992 = vadd.f32 %v5888, %v5890
        %5993 = vadd.xlane.f32.xlu0 %v5992
        %v5994 = vpop.xlane.xlu0 %5993
        %v5995 = vadd.f32 %v5892, %v5894
        %5996 = vadd.xlane.f32.xlu0 %v5995
        %v5997 = vpop.xlane.xlu0 %5996
        %v5998 = vadd.f32 %v5896, %v5898
        %5999 = vadd.xlane.f32.xlu0 %v5998
        %v6000 = vpop.xlane.xlu0 %5999
        %v6001 = vadd.f32 %v5900, %v5902
        %6002 = vadd.xlane.f32.xlu0 %v6001
        %v6003 = vpop.xlane.xlu0 %6002
        %v6004 = vadd.f32 %v5904, %v5906
        %6005 = vadd.xlane.f32.xlu0 %v6004
        %v6006 = vpop.xlane.xlu0 %6005
        %v6007 = vadd.f32 %v5908, %v5910
        %6008 = vadd.xlane.f32.xlu0 %v6007
        %v6009 = vpop.xlane.xlu0 %6008
        %v6010 = vadd.f32 %v5912, %v5914
        %6011 = vadd.xlane.f32.xlu0 %v6010
        %v6012 = vpop.xlane.xlu0 %6011
        %v6013 = vadd.f32 %v5916, %v5918
        %6014 = vadd.xlane.f32.xlu0 %v6013
        %v6015 = vpop.xlane.xlu0 %6014
        %v6016 = vadd.f32 %v5920, %v5922
        %6017 = vadd.xlane.f32.xlu0 %v6016
        %v6018 = vpop.xlane.xlu0 %6017
        %v6019 = vrcp.pop %v5925
        %v6020 = vrcp.pop %v5928
        %v6021 = vrcp.pop %v5931
        %v6022 = vrcp.pop %v5934
        %v6023 = vrcp.pop %v5937
        %v6024 = vrcp.pop %v5940
        %v6025 = vrcp.pop %v5943
        %v6026 = vrcp.pop %v5946
        %v6027 = vrcp.pop %v5949
        %v6028 = vrcp.pop %v5952
        %v6029 = vrcp.pop %v5955
        %v6030 = vrcp.pop %v5958
        %v6031 = vrcp.pop %v5961
        %v6032 = vrcp.pop %v5964
        %v6033 = vrcp.pop %v5967
        %v6034 = vrcp.pop %v5970
        %v6035 = vrcp.pop %v5973
        %v6036 = vrcp.pop %v5976
        %v6037 = vrcp.pop %v5979
        %v6038 = vrcp.pop %v5982
        %v6039 = vrcp.pop %v5985
        %v6040 = vrcp.pop %v5988
        %v6041 = vrcp.pop %v5991
        %v6042 = vrcp.pop %v5994
        %v6043 = vrcp.pop %v5997
        %v6044 = vrcp.pop %v6000
        %v6045 = vrcp.pop %v6003
        %v6046 = vrcp.pop %v6006
        %v6047 = vrcp.pop %v6009
        %v6048 = vrcp.pop %v6012
        %v6049 = vrcp.pop %v6015
        %v6050 = vrcp.pop %v6018
        %v6051 = vmul.f32 %v5796, %v6019
        %v6052 = vmul.f32 %v5798, %v6019
        %v6053 = vmul.f32 %v5800, %v6020
        %v6054 = vmul.f32 %v5802, %v6020
        %v6055 = vmul.f32 %v5804, %v6021
        %v6056 = vmul.f32 %v5806, %v6021
        %v6057 = vmul.f32 %v5808, %v6022
        %v6058 = vmul.f32 %v5810, %v6022
        %v6059 = vmul.f32 %v5812, %v6023
        %v6060 = vmul.f32 %v5814, %v6023
        %v6061 = vmul.f32 %v5816, %v6024
        %v6062 = vmul.f32 %v5818, %v6024
        %v6063 = vmul.f32 %v5820, %v6025
        %v6064 = vmul.f32 %v5822, %v6025
        %v6065 = vmul.f32 %v5824, %v6026
        %v6066 = vmul.f32 %v5826, %v6026
        %v6067 = vmul.f32 %v5828, %v6027
        %v6068 = vmul.f32 %v5830, %v6027
        %v6069 = vmul.f32 %v5832, %v6028
        %v6070 = vmul.f32 %v5834, %v6028
        %v6071 = vmul.f32 %v5836, %v6029
        %v6072 = vmul.f32 %v5838, %v6029
        %v6073 = vmul.f32 %v5840, %v6030
        %v6074 = vmul.f32 %v5842, %v6030
        %v6075 = vmul.f32 %v5844, %v6031
        %v6076 = vmul.f32 %v5846, %v6031
        %v6077 = vmul.f32 %v5848, %v6032
        %v6078 = vmul.f32 %v5850, %v6032
        %v6079 = vmul.f32 %v5852, %v6033
        %v6080 = vmul.f32 %v5854, %v6033
        %v6081 = vmul.f32 %v5856, %v6034
        %v6082 = vmul.f32 %v5858, %v6034
        %v6083 = vmul.f32 %v5860, %v6035
        %v6084 = vmul.f32 %v5862, %v6035
        %v6085 = vmul.f32 %v5864, %v6036
        %v6086 = vmul.f32 %v5866, %v6036
        %v6087 = vmul.f32 %v5868, %v6037
        %v6088 = vmul.f32 %v5870, %v6037
        %v6089 = vmul.f32 %v5872, %v6038
        %v6090 = vmul.f32 %v5874, %v6038
        %v6091 = vmul.f32 %v5876, %v6039
        %v6092 = vmul.f32 %v5878, %v6039
        %v6093 = vmul.f32 %v5880, %v6040
        %v6094 = vmul.f32 %v5882, %v6040
        %v6095 = vmul.f32 %v5884, %v6041
        %v6096 = vmul.f32 %v5886, %v6041
        %v6097 = vmul.f32 %v5888, %v6042
        %v6098 = vmul.f32 %v5890, %v6042
        %v6099 = vmul.f32 %v5892, %v6043
        %v6100 = vmul.f32 %v5894, %v6043
        %v6101 = vmul.f32 %v5896, %v6044
        %v6102 = vmul.f32 %v5898, %v6044
        %v6103 = vmul.f32 %v5900, %v6045
        %v6104 = vmul.f32 %v5902, %v6045
        %v6105 = vmul.f32 %v5904, %v6046
        %v6106 = vmul.f32 %v5906, %v6046
        %v6107 = vmul.f32 %v5908, %v6047
        %v6108 = vmul.f32 %v5910, %v6047
        %v6109 = vmul.f32 %v5912, %v6048
        %v6110 = vmul.f32 %v5914, %v6048
        %v6111 = vmul.f32 %v5916, %v6049
        %v6112 = vmul.f32 %v5918, %v6049
        %v6113 = vmul.f32 %v5920, %v6050
        %v6114 = vmul.f32 %v5922, %v6050
        %v6115 = vpack.c.bf16 %v6053, %v6051
        %v6116 = vpack.c.bf16 %v6054, %v6052
        %v6117 = vpack.c.bf16 %v6057, %v6055
        %v6118 = vpack.c.bf16 %v6058, %v6056
        %v6119 = vpack.c.bf16 %v6061, %v6059
        %v6120 = vpack.c.bf16 %v6062, %v6060
        %v6121 = vpack.c.bf16 %v6065, %v6063
        %v6122 = vpack.c.bf16 %v6066, %v6064
        %v6123 = vpack.c.bf16 %v6069, %v6067
        %v6124 = vpack.c.bf16 %v6070, %v6068
        %v6125 = vpack.c.bf16 %v6073, %v6071
        %v6126 = vpack.c.bf16 %v6074, %v6072
        %v6127 = vpack.c.bf16 %v6077, %v6075
        %v6128 = vpack.c.bf16 %v6078, %v6076
        %v6129 = vpack.c.bf16 %v6081, %v6079
        %v6130 = vpack.c.bf16 %v6082, %v6080
        %v6131 = vpack.c.bf16 %v6085, %v6083
        %v6132 = vpack.c.bf16 %v6086, %v6084
        %v6133 = vpack.c.bf16 %v6089, %v6087
        %v6134 = vpack.c.bf16 %v6090, %v6088
        %v6135 = vpack.c.bf16 %v6093, %v6091
        %v6136 = vpack.c.bf16 %v6094, %v6092
        %v6137 = vpack.c.bf16 %v6097, %v6095
        %v6138 = vpack.c.bf16 %v6098, %v6096
        %v6139 = vpack.c.bf16 %v6101, %v6099
        %v6140 = vpack.c.bf16 %v6102, %v6100
        %v6141 = vpack.c.bf16 %v6105, %v6103
        %v6142 = vpack.c.bf16 %v6106, %v6104
        %v6143 = vpack.c.bf16 %v6109, %v6107
        %v6144 = vpack.c.bf16 %v6110, %v6108
        %v6145 = vpack.c.bf16 %v6113, %v6111
        %v6146 = vpack.c.bf16 %v6114, %v6112
        %6147 = vrot.lane.b32.xlu0 %v2201, 32
        %v6148 = vpop.permute.xlu0 %6147
        %6149 = vrot.lane.b32.xlu0 %v2202, 32
        %v6150 = vpop.permute.xlu0 %6149
        %6151 = vrot.lane.b32.xlu0 %v2203, 32
        %v6152 = vpop.permute.xlu0 %6151
        %6153 = vrot.lane.b32.xlu0 %v2204, 32
        %v6154 = vpop.permute.xlu0 %6153
        %6155 = vrot.lane.b32.xlu0 %v2205, 32
        %v6156 = vpop.permute.xlu0 %6155
        %6157 = vrot.lane.b32.xlu0 %v2206, 32
        %v6158 = vpop.permute.xlu0 %6157
        %6159 = vrot.lane.b32.xlu0 %v2207, 32
        %v6160 = vpop.permute.xlu0 %6159
        %6161 = vrot.lane.b32.xlu0 %v2208, 32
        %v6162 = vpop.permute.xlu0 %6161
        %6163 = vrot.lane.b32.xlu0 %v2209, 32
        %v6164 = vpop.permute.xlu0 %6163
        %6165 = vrot.lane.b32.xlu0 %v2210, 32
        %v6166 = vpop.permute.xlu0 %6165
        %6167 = vrot.lane.b32.xlu0 %v2211, 32
        %v6168 = vpop.permute.xlu0 %6167
        %6169 = vrot.lane.b32.xlu0 %v2212, 32
        %v6170 = vpop.permute.xlu0 %6169
        %6171 = vrot.lane.b32.xlu0 %v2213, 32
        %v6172 = vpop.permute.xlu0 %6171
        %6173 = vrot.lane.b32.xlu0 %v2214, 32
        %v6174 = vpop.permute.xlu0 %6173
        %6175 = vrot.lane.b32.xlu0 %v2215, 32
        %v6176 = vpop.permute.xlu0 %6175
        %6177 = vrot.lane.b32.xlu0 %v2216, 32
        %v6178 = vpop.permute.xlu0 %6177
        %6195 = vmatpush.bf16.msra.mxu0 %v6162
        %6196 = vmatpush.bf16.msra.mxu0 %v6160
        %6197 = vmatpush.bf16.msra.mxu0 %v6158
        %6198 = vmatpush.bf16.msra.mxu0 %v6156
        %6199 = vmatpush.bf16.msra.mxu0 %v6154
        %6200 = vmatpush.bf16.msra.mxu0 %v6152
        %6201 = vmatpush.bf16.msra.mxu0 %v6150
        %6202 = vmatpush.bf16.msra.mxu0 %v6148
        %6203 = vmatmul.bf16.gmra.mxu0 %v6115
        %v6204 = vpop.f32.mrf.mxu0
        %v6205 = vadd.f32 0.0, %v6204
        %v6206 = vpop.f32.mrf.mxu0
        %v6207 = vadd.f32 0.0, %v6206
        %6208 = vmatmul.bf16.gmra.mxu0 %v6117
        %v6209 = vpop.f32.mrf.mxu0
        %v6210 = vadd.f32 0.0, %v6209
        %v6211 = vpop.f32.mrf.mxu0
        %v6212 = vadd.f32 0.0, %v6211
        %6213 = vmatmul.bf16.gmra.mxu0 %v6119
        %v6214 = vpop.f32.mrf.mxu0
        %v6215 = vadd.f32 0.0, %v6214
        %v6216 = vpop.f32.mrf.mxu0
        %v6217 = vadd.f32 0.0, %v6216
        %6218 = vmatmul.bf16.gmra.mxu0 %v6121
        %v6219 = vpop.f32.mrf.mxu0
        %v6220 = vadd.f32 0.0, %v6219
        %v6221 = vpop.f32.mrf.mxu0
        %v6222 = vadd.f32 0.0, %v6221
        %6223 = vmatmul.bf16.gmra.mxu0 %v6123
        %v6224 = vpop.f32.mrf.mxu0
        %v6225 = vadd.f32 0.0, %v6224
        %v6226 = vpop.f32.mrf.mxu0
        %v6227 = vadd.f32 0.0, %v6226
        %6228 = vmatmul.bf16.gmra.mxu0 %v6125
        %v6229 = vpop.f32.mrf.mxu0
        %v6230 = vadd.f32 0.0, %v6229
        %v6231 = vpop.f32.mrf.mxu0
        %v6232 = vadd.f32 0.0, %v6231
        %6233 = vmatmul.bf16.gmra.mxu0 %v6127
        %v6234 = vpop.f32.mrf.mxu0
        %v6235 = vadd.f32 0.0, %v6234
        %v6236 = vpop.f32.mrf.mxu0
        %v6237 = vadd.f32 0.0, %v6236
        %6238 = vmatmul.bf16.gmra.mxu0 %v6129
        %v6239 = vpop.f32.mrf.mxu0
        %v6240 = vadd.f32 0.0, %v6239
        %v6241 = vpop.f32.mrf.mxu0
        %v6242 = vadd.f32 0.0, %v6241
        %6243 = vmatmul.bf16.gmra.mxu0 %v6131
        %v6244 = vpop.f32.mrf.mxu0
        %v6245 = vadd.f32 0.0, %v6244
        %v6246 = vpop.f32.mrf.mxu0
        %v6247 = vadd.f32 0.0, %v6246
        %6248 = vmatmul.bf16.gmra.mxu0 %v6133
        %v6249 = vpop.f32.mrf.mxu0
        %v6250 = vadd.f32 0.0, %v6249
        %v6251 = vpop.f32.mrf.mxu0
        %v6252 = vadd.f32 0.0, %v6251
        %6253 = vmatmul.bf16.gmra.mxu0 %v6135
        %v6254 = vpop.f32.mrf.mxu0
        %v6255 = vadd.f32 0.0, %v6254
        %v6256 = vpop.f32.mrf.mxu0
        %v6257 = vadd.f32 0.0, %v6256
        %6258 = vmatmul.bf16.gmra.mxu0 %v6137
        %v6259 = vpop.f32.mrf.mxu0
        %v6260 = vadd.f32 0.0, %v6259
        %v6261 = vpop.f32.mrf.mxu0
        %v6262 = vadd.f32 0.0, %v6261
        %6263 = vmatmul.bf16.gmra.mxu0 %v6139
        %v6264 = vpop.f32.mrf.mxu0
        %v6265 = vadd.f32 0.0, %v6264
        %v6266 = vpop.f32.mrf.mxu0
        %v6267 = vadd.f32 0.0, %v6266
        %6268 = vmatmul.bf16.gmra.mxu0 %v6141
        %v6269 = vpop.f32.mrf.mxu0
        %v6270 = vadd.f32 0.0, %v6269
        %v6271 = vpop.f32.mrf.mxu0
        %v6272 = vadd.f32 0.0, %v6271
        %6273 = vmatmul.bf16.gmra.mxu0 %v6143
        %v6274 = vpop.f32.mrf.mxu0
        %v6275 = vadd.f32 0.0, %v6274
        %v6276 = vpop.f32.mrf.mxu0
        %v6277 = vadd.f32 0.0, %v6276
        %6278 = vmatmul.bf16.gmra.mxu0 %v6145
        %v6279 = vpop.f32.mrf.mxu0
        %v6280 = vadd.f32 0.0, %v6279
        %v6281 = vpop.f32.mrf.mxu0
        %v6282 = vadd.f32 0.0, %v6281
        %6283 = vdwg.mxu0
        %6284 = vmatpush.bf16.msra.mxu0 %v6178
        %6285 = vmatpush.bf16.msra.mxu0 %v6176
        %6286 = vmatpush.bf16.msra.mxu0 %v6174
        %6287 = vmatpush.bf16.msra.mxu0 %v6172
        %6288 = vmatpush.bf16.msra.mxu0 %v6170
        %6289 = vmatpush.bf16.msra.mxu0 %v6168
        %6290 = vmatpush.bf16.msra.mxu0 %v6166
        %6291 = vmatpush.bf16.msra.mxu0 %v6164
        %6292 = vmatmul.bf16.gmra.mxu0 %v6116
        %v6293 = vpop.f32.mrf.mxu0
        %v6294 = vadd.f32 %v6205, %v6293
        %v6295 = vpop.f32.mrf.mxu0
        %v6296 = vadd.f32 %v6207, %v6295
        %6297 = vmatmul.bf16.gmra.mxu0 %v6118
        %v6298 = vpop.f32.mrf.mxu0
        %v6299 = vadd.f32 %v6210, %v6298
        %v6300 = vpop.f32.mrf.mxu0
        %v6301 = vadd.f32 %v6212, %v6300
        %6302 = vmatmul.bf16.gmra.mxu0 %v6120
        %v6303 = vpop.f32.mrf.mxu0
        %v6304 = vadd.f32 %v6215, %v6303
        %v6305 = vpop.f32.mrf.mxu0
        %v6306 = vadd.f32 %v6217, %v6305
        %6307 = vmatmul.bf16.gmra.mxu0 %v6122
        %v6308 = vpop.f32.mrf.mxu0
        %v6309 = vadd.f32 %v6220, %v6308
        %v6310 = vpop.f32.mrf.mxu0
        %v6311 = vadd.f32 %v6222, %v6310
        %6312 = vmatmul.bf16.gmra.mxu0 %v6124
        %v6313 = vpop.f32.mrf.mxu0
        %v6314 = vadd.f32 %v6225, %v6313
        %v6315 = vpop.f32.mrf.mxu0
        %v6316 = vadd.f32 %v6227, %v6315
        %6317 = vmatmul.bf16.gmra.mxu0 %v6126
        %v6318 = vpop.f32.mrf.mxu0
        %v6319 = vadd.f32 %v6230, %v6318
        %v6320 = vpop.f32.mrf.mxu0
        %v6321 = vadd.f32 %v6232, %v6320
        %6322 = vmatmul.bf16.gmra.mxu0 %v6128
        %v6323 = vpop.f32.mrf.mxu0
        %v6324 = vadd.f32 %v6235, %v6323
        %v6325 = vpop.f32.mrf.mxu0
        %v6326 = vadd.f32 %v6237, %v6325
        %6327 = vmatmul.bf16.gmra.mxu0 %v6130
        %v6328 = vpop.f32.mrf.mxu0
        %v6329 = vadd.f32 %v6240, %v6328
        %v6330 = vpop.f32.mrf.mxu0
        %v6331 = vadd.f32 %v6242, %v6330
        %6332 = vmatmul.bf16.gmra.mxu0 %v6132
        %v6333 = vpop.f32.mrf.mxu0
        %v6334 = vadd.f32 %v6245, %v6333
        %v6335 = vpop.f32.mrf.mxu0
        %v6336 = vadd.f32 %v6247, %v6335
        %6337 = vmatmul.bf16.gmra.mxu0 %v6134
        %v6338 = vpop.f32.mrf.mxu0
        %v6339 = vadd.f32 %v6250, %v6338
        %v6340 = vpop.f32.mrf.mxu0
        %v6341 = vadd.f32 %v6252, %v6340
        %6342 = vmatmul.bf16.gmra.mxu0 %v6136
        %v6343 = vpop.f32.mrf.mxu0
        %v6344 = vadd.f32 %v6255, %v6343
        %v6345 = vpop.f32.mrf.mxu0
        %v6346 = vadd.f32 %v6257, %v6345
        %6347 = vmatmul.bf16.gmra.mxu0 %v6138
        %v6348 = vpop.f32.mrf.mxu0
        %v6349 = vadd.f32 %v6260, %v6348
        %v6350 = vpop.f32.mrf.mxu0
        %v6351 = vadd.f32 %v6262, %v6350
        %6352 = vmatmul.bf16.gmra.mxu0 %v6140
        %v6353 = vpop.f32.mrf.mxu0
        %v6354 = vadd.f32 %v6265, %v6353
        %v6355 = vpop.f32.mrf.mxu0
        %v6356 = vadd.f32 %v6267, %v6355
        %6357 = vmatmul.bf16.gmra.mxu0 %v6142
        %v6358 = vpop.f32.mrf.mxu0
        %v6359 = vadd.f32 %v6270, %v6358
        %v6360 = vpop.f32.mrf.mxu0
        %v6361 = vadd.f32 %v6272, %v6360
        %6362 = vmatmul.bf16.gmra.mxu0 %v6144
        %v6363 = vpop.f32.mrf.mxu0
        %v6364 = vadd.f32 %v6275, %v6363
        %v6365 = vpop.f32.mrf.mxu0
        %v6366 = vadd.f32 %v6277, %v6365
        %6367 = vmatmul.bf16.gmra.mxu0 %v6146
        %v6368 = vpop.f32.mrf.mxu0
        %v6369 = vadd.f32 %v6280, %v6368
        %v6370 = vpop.f32.mrf.mxu0
        %v6371 = vadd.f32 %v6282, %v6370
        %6372 = vdwg.mxu0
        %v6373 = vpack.c.bf16 %v6296, %v6294
        %v6374 = vpack.c.bf16 %v6301, %v6299
        %v6375 = vpack.c.bf16 %v6306, %v6304
        %v6376 = vpack.c.bf16 %v6311, %v6309
        %v6377 = vpack.c.bf16 %v6316, %v6314
        %v6378 = vpack.c.bf16 %v6321, %v6319
        %v6379 = vpack.c.bf16 %v6326, %v6324
        %v6380 = vpack.c.bf16 %v6331, %v6329
        %v6381 = vpack.c.bf16 %v6336, %v6334
        %v6382 = vpack.c.bf16 %v6341, %v6339
        %v6383 = vpack.c.bf16 %v6346, %v6344
        %v6384 = vpack.c.bf16 %v6351, %v6349
        %v6385 = vpack.c.bf16 %v6356, %v6354
        %v6386 = vpack.c.bf16 %v6361, %v6359
        %v6387 = vpack.c.bf16 %v6366, %v6364
        %v6388 = vpack.c.bf16 %v6371, %v6369
        %v6389 = vld [vmem:[#allocation9 + $0x30] sm:$0xf]
        %v6390 = vld [vmem:[#allocation9 + $0x34] sm:$0xf]
        %v6391 = vld [vmem:[#allocation9 + $0x38] sm:$0xf]
        %v6392 = vld [vmem:[#allocation9 + $0x3c] sm:$0xf]
        %v6397 = vunpack.c.l.b16 %v6389
        %v6398 = vunpack.c.l.b16 %v6390
        %v6399 = vunpack.c.l.b16 %v6391
        %v6400 = vunpack.c.l.b16 %v6392
        %v6401 = vpack.c.b16 %v6398, %v6397
        %v6402 = vpack.c.b16 %v6400, %v6399
        %v6406 = vsel %vm1350, %v6373, 0
        %v6409 = vsel %vm1350, %v6374, 0
        %v6412 = vsel %vm1350, %v6375, 0
        %v6415 = vsel %vm1350, %v6376, 0
        %v6418 = vsel %vm1350, %v6377, 0
        %v6421 = vsel %vm1350, %v6378, 0
        %v6424 = vsel %vm1350, %v6379, 0
        %v6427 = vsel %vm1350, %v6380, 0
        %v6430 = vsel %vm1350, %v6381, 0
        %v6433 = vsel %vm1350, %v6382, 0
        %v6436 = vsel %vm1350, %v6383, 0
        %v6439 = vsel %vm1350, %v6384, 0
        %v6442 = vsel %vm1350, %v6385, 0
        %v6445 = vsel %vm1350, %v6386, 0
        %v6448 = vsel %vm1350, %v6387, 0
        %v6451 = vsel %vm1350, %v6388, 0
        %6453 = vmatpush.bf16.msra.mxu0 0
        %6454 = vmatpush.bf16.msra.mxu0 0
        %6455 = vmatpush.bf16.msra.mxu0 0
        %6456 = vmatpush.bf16.msra.mxu0 0
        %6457 = vmatpush.bf16.msra.mxu0 0
        %6458 = vmatpush.bf16.msra.mxu0 0
        %6459 = vmatpush.bf16.msra.mxu0 %v6402
        %6460 = vmatpush.bf16.msra.mxu0 %v6401
        %6461 = vmatmul.bf16.gmra.mxu0 %v6406
        %v6462 = vpop.f32.mrf.mxu0
        %v6463 = vadd.f32 0.0, %v6462
        %v6464 = vpop.f32.mrf.mxu0
        %v6465 = vadd.f32 0.0, %v6464
        %6466 = vmatmul.bf16.gmra.mxu0 %v6409
        %v6467 = vpop.f32.mrf.mxu0
        %v6468 = vadd.f32 0.0, %v6467
        %v6469 = vpop.f32.mrf.mxu0
        %v6470 = vadd.f32 0.0, %v6469
        %6471 = vmatmul.bf16.gmra.mxu0 %v6412
        %v6472 = vpop.f32.mrf.mxu0
        %v6473 = vadd.f32 0.0, %v6472
        %v6474 = vpop.f32.mrf.mxu0
        %v6475 = vadd.f32 0.0, %v6474
        %6476 = vmatmul.bf16.gmra.mxu0 %v6415
        %v6477 = vpop.f32.mrf.mxu0
        %v6478 = vadd.f32 0.0, %v6477
        %v6479 = vpop.f32.mrf.mxu0
        %v6480 = vadd.f32 0.0, %v6479
        %6481 = vmatmul.bf16.gmra.mxu0 %v6418
        %v6482 = vpop.f32.mrf.mxu0
        %v6483 = vadd.f32 0.0, %v6482
        %v6484 = vpop.f32.mrf.mxu0
        %v6485 = vadd.f32 0.0, %v6484
        %6486 = vmatmul.bf16.gmra.mxu0 %v6421
        %v6487 = vpop.f32.mrf.mxu0
        %v6488 = vadd.f32 0.0, %v6487
        %v6489 = vpop.f32.mrf.mxu0
        %v6490 = vadd.f32 0.0, %v6489
        %6491 = vmatmul.bf16.gmra.mxu0 %v6424
        %v6492 = vpop.f32.mrf.mxu0
        %v6493 = vadd.f32 0.0, %v6492
        %v6494 = vpop.f32.mrf.mxu0
        %v6495 = vadd.f32 0.0, %v6494
        %6496 = vmatmul.bf16.gmra.mxu0 %v6427
        %v6497 = vpop.f32.mrf.mxu0
        %v6498 = vadd.f32 0.0, %v6497
        %v6499 = vpop.f32.mrf.mxu0
        %v6500 = vadd.f32 0.0, %v6499
        %6501 = vmatmul.bf16.gmra.mxu0 %v6430
        %v6502 = vpop.f32.mrf.mxu0
        %v6503 = vadd.f32 0.0, %v6502
        %v6504 = vpop.f32.mrf.mxu0
        %v6505 = vadd.f32 0.0, %v6504
        %6506 = vmatmul.bf16.gmra.mxu0 %v6433
        %v6507 = vpop.f32.mrf.mxu0
        %v6508 = vadd.f32 0.0, %v6507
        %v6509 = vpop.f32.mrf.mxu0
        %v6510 = vadd.f32 0.0, %v6509
        %6511 = vmatmul.bf16.gmra.mxu0 %v6436
        %v6512 = vpop.f32.mrf.mxu0
        %v6513 = vadd.f32 0.0, %v6512
        %v6514 = vpop.f32.mrf.mxu0
        %v6515 = vadd.f32 0.0, %v6514
        %6516 = vmatmul.bf16.gmra.mxu0 %v6439
        %v6517 = vpop.f32.mrf.mxu0
        %v6518 = vadd.f32 0.0, %v6517
        %v6519 = vpop.f32.mrf.mxu0
        %v6520 = vadd.f32 0.0, %v6519
        %6521 = vmatmul.bf16.gmra.mxu0 %v6442
        %v6522 = vpop.f32.mrf.mxu0
        %v6523 = vadd.f32 0.0, %v6522
        %v6524 = vpop.f32.mrf.mxu0
        %v6525 = vadd.f32 0.0, %v6524
        %6526 = vmatmul.bf16.gmra.mxu0 %v6445
        %v6527 = vpop.f32.mrf.mxu0
        %v6528 = vadd.f32 0.0, %v6527
        %v6529 = vpop.f32.mrf.mxu0
        %v6530 = vadd.f32 0.0, %v6529
        %6531 = vmatmul.bf16.gmra.mxu0 %v6448
        %v6532 = vpop.f32.mrf.mxu0
        %v6533 = vadd.f32 0.0, %v6532
        %v6534 = vpop.f32.mrf.mxu0
        %v6535 = vadd.f32 0.0, %v6534
        %6536 = vmatmul.bf16.gmra.mxu0 %v6451
        %v6537 = vpop.f32.mrf.mxu0
        %v6538 = vadd.f32 0.0, %v6537
        %v6539 = vpop.f32.mrf.mxu0
        %v6540 = vadd.f32 0.0, %v6539
        %6541 = vdwg.mxu0
        %v6542 = vadd.f32 %v5200, %v6463
        %v6543 = vadd.f32 %v5201, %v6465
        %v6544 = vadd.f32 %v5202, %v6468
        %v6545 = vadd.f32 %v5203, %v6470
        %v6546 = vadd.f32 %v5204, %v6473
        %v6547 = vadd.f32 %v5205, %v6475
        %v6548 = vadd.f32 %v5206, %v6478
        %v6549 = vadd.f32 %v5207, %v6480
        %v6550 = vadd.f32 %v5208, %v6483
        %v6551 = vadd.f32 %v5209, %v6485
        %v6552 = vadd.f32 %v5210, %v6488
        %v6553 = vadd.f32 %v5211, %v6490
        %v6554 = vadd.f32 %v5212, %v6493
        %v6555 = vadd.f32 %v5213, %v6495
        %v6556 = vadd.f32 %v5214, %v6498
        %v6557 = vadd.f32 %v5215, %v6500
        %v6558 = vadd.f32 %v5216, %v6503
        %v6559 = vadd.f32 %v5217, %v6505
        %v6560 = vadd.f32 %v5218, %v6508
        %v6561 = vadd.f32 %v5219, %v6510
        %v6562 = vadd.f32 %v5220, %v6513
        %v6563 = vadd.f32 %v5221, %v6515
        %v6564 = vadd.f32 %v5222, %v6518
        %v6565 = vadd.f32 %v5223, %v6520
        %v6566 = vadd.f32 %v5224, %v6523
        %v6567 = vadd.f32 %v5225, %v6525
        %v6568 = vadd.f32 %v5226, %v6528
        %v6569 = vadd.f32 %v5227, %v6530
        %v6570 = vadd.f32 %v5228, %v6533
        %v6571 = vadd.f32 %v5229, %v6535
        %v6572 = vadd.f32 %v5230, %v6538
        %v6573 = vadd.f32 %v5231, %v6540
        %v6574 = vld [vmem:[%s4] sm:$0x1]
        %v6576 = vperm.slane %v6574, 0
        %v6578 = vadd.f32 %v6542, %v6576
        %v6579 = vadd.f32 %v6543, %v6576
        %v6580 = vadd.f32 %v6544, %v6576
        %v6581 = vadd.f32 %v6545, %v6576
        %v6582 = vadd.f32 %v6546, %v6576
        %v6583 = vadd.f32 %v6547, %v6576
        %v6584 = vadd.f32 %v6548, %v6576
        %v6585 = vadd.f32 %v6549, %v6576
        %v6586 = vadd.f32 %v6550, %v6576
        %v6587 = vadd.f32 %v6551, %v6576
        %v6588 = vadd.f32 %v6552, %v6576
        %v6589 = vadd.f32 %v6553, %v6576
        %v6590 = vadd.f32 %v6554, %v6576
        %v6591 = vadd.f32 %v6555, %v6576
        %v6592 = vadd.f32 %v6556, %v6576
        %v6593 = vadd.f32 %v6557, %v6576
        %v6594 = vadd.f32 %v6558, %v6576
        %v6595 = vadd.f32 %v6559, %v6576
        %v6596 = vadd.f32 %v6560, %v6576
        %v6597 = vadd.f32 %v6561, %v6576
        %v6598 = vadd.f32 %v6562, %v6576
        %v6599 = vadd.f32 %v6563, %v6576
        %v6600 = vadd.f32 %v6564, %v6576
        %v6601 = vadd.f32 %v6565, %v6576
        %v6602 = vadd.f32 %v6566, %v6576
        %v6603 = vadd.f32 %v6567, %v6576
        %v6604 = vadd.f32 %v6568, %v6576
        %v6605 = vadd.f32 %v6569, %v6576
        %v6606 = vadd.f32 %v6570, %v6576
        %v6607 = vadd.f32 %v6571, %v6576
        %v6608 = vadd.f32 %v6572, %v6576
        %v6609 = vadd.f32 %v6573, %v6576
        %6610 = vst [vmem:[%s335] sm:$0xff] %v6578
        %6611 = vst [vmem:[%s335 + $0x8] sm:$0xff] %v6579
        %6612 = vst [vmem:[%s335 + $0x10] sm:$0xff] %v6580
        %6613 = vst [vmem:[%s335 + $0x18] sm:$0xff] %v6581
        %6614 = vst [vmem:[%s335 + $0x20] sm:$0xff] %v6582
        %6615 = vst [vmem:[%s335 + $0x28] sm:$0xff] %v6583
        %6616 = vst [vmem:[%s335 + $0x30] sm:$0xff] %v6584
        %6617 = vst [vmem:[%s335 + $0x38] sm:$0xff] %v6585
        %6618 = vst [vmem:[%s335 + $0x40] sm:$0xff] %v6586
        %6619 = vst [vmem:[%s335 + $0x48] sm:$0xff] %v6587
        %6620 = vst [vmem:[%s335 + $0x50] sm:$0xff] %v6588
        %6621 = vst [vmem:[%s335 + $0x58] sm:$0xff] %v6589
        %6622 = vst [vmem:[%s335 + $0x60] sm:$0xff] %v6590
        %6623 = vst [vmem:[%s335 + $0x68] sm:$0xff] %v6591
        %6624 = vst [vmem:[%s335 + $0x70] sm:$0xff] %v6592
        %6625 = vst [vmem:[%s335 + $0x78] sm:$0xff] %v6593
        %6626 = vst [vmem:[%s335 + $0x80] sm:$0xff] %v6594
        %6627 = vst [vmem:[%s335 + $0x88] sm:$0xff] %v6595
        %6628 = vst [vmem:[%s335 + $0x90] sm:$0xff] %v6596
        %6629 = vst [vmem:[%s335 + $0x98] sm:$0xff] %v6597
        %6630 = vst [vmem:[%s335 + $0xa0] sm:$0xff] %v6598
        %6631 = vst [vmem:[%s335 + $0xa8] sm:$0xff] %v6599
        %6632 = vst [vmem:[%s335 + $0xb0] sm:$0xff] %v6600
        %6633 = vst [vmem:[%s335 + $0xb8] sm:$0xff] %v6601
        %6634 = vst [vmem:[%s335 + $0xc0] sm:$0xff] %v6602
        %6635 = vst [vmem:[%s335 + $0xc8] sm:$0xff] %v6603
        %6636 = vst [vmem:[%s335 + $0xd0] sm:$0xff] %v6604
        %6637 = vst [vmem:[%s335 + $0xd8] sm:$0xff] %v6605
        %6638 = vst [vmem:[%s335 + $0xe0] sm:$0xff] %v6606
        %6639 = vst [vmem:[%s335 + $0xe8] sm:$0xff] %v6607
        %6640 = vst [vmem:[%s335 + $0xf0] sm:$0xff] %v6608
        %6641 = vst [vmem:[%s335 + $0xf8] sm:$0xff] %v6609
        %s6642 = sand.u32 %s164, 1
        %s6643 = scalar_lea.sflag [#allocation5], %s6642
        %s6644 = sand.u32 %s164, 1
        %s6645 = smul.addr %s6644, 256
        %s6646 = scalar_lea.vmem [#allocation12], %s6645
        // Predicated region
        $region65: #{tpu_custom_call.1} parent=43 // pred_check
          %p6647 = pneg %p174
        $region66: #{tpu_custom_call.1} parent=43 // pred_check_branch
          %6649 = sbr.rel (%p6647) target = $region68
        $region67: #{tpu_custom_call.1} parent=43 // pred_region
          %s6650 = smul.u32 32, %s25
          %6652 = vsyncadd %s6643, 0
          %s6653 = smul.addr %s6650, 8
          %s6654 = scalar_lea.hbm %s6, %s6653
          %s6655 = sshll.u32 %s6646, 4
          %s6656 = int_to_ptr.vmem [resolvable:$true] %s6655
          %s6657 = sshll.u32 %s6654, 4
          %s6658 = int_to_ptr.hbm [resolvable:$true] %s6657
          %6663 = dma.vmem_to_hbm [thread:$0]  %s6656, 4096, %s6658, %s6643, 128, 128, 8
        $region68: #{tpu_custom_call.1} parent=43 // pred_fallthru
          _
      $region44: #{tpu_custom_call.1} parent=5 // pred_fallthru
        _
      %p6664 = scmp.le.s32.totalorder 2, %s20
      // Predicated region
      $region69: #{tpu_custom_call.1} parent=5 // pred_check
        %p6665 = pneg %p6664
      $region70: #{tpu_custom_call.1} parent=5 // pred_check_branch
        %6667 = sbr.rel (%p6665) target = $region72
      $region71: #{tpu_custom_call.1} parent=5 // pred_region
        %s6668 = ssub.s32 %s20, 2
        // Predicated region
        $region73: #{tpu_custom_call.1} parent=71 // pred_check
          %p6669 = pneg %p180
        $region74: #{tpu_custom_call.1} parent=71 // pred_check_branch
          %6671 = sbr.rel (%p6669) target = $region76
        $region75: #{tpu_custom_call.1} parent=71 // pred_region
          %s6672 = sand.u32 %s165, 1
          %s6673 = scalar_lea.sflag [#allocation5], %s6672
          %s6674 = sand.u32 %s165, 1
          %s6675 = smul.addr %s6674, 256
          %s6676 = scalar_lea.vmem [#allocation12], %s6675
          %6678 = dma.done %s6673, 4096
        $region76: #{tpu_custom_call.1} parent=71 // pred_fallthru
          _
      $region72: #{tpu_custom_call.1} parent=5 // pred_fallthru
        _
    $region6: #{tpu_custom_call.1} parent=1 // loop_footer
      %s24 = sadd.s32 1, %s20
    $region7: #{tpu_custom_call.1} parent=1 // loop_footer_branch
      %19 = sbr.rel target = $region3
    $region8: #{tpu_custom_call.1} parent=1 // loop_exit
      _
    %6679 = vsyncpa [#allocation4], 1
    %s6680 = scalar_lea.sflag [#allocation4], 1
    %6681 = vsyncpa %s6680, 1
    %6682 = vsyncpa [#allocation7], 1
    %6683 = vsyncpa [#allocation10], 1
    %6684 = vsyncpa [#allocation5], 1
    %s6685 = scalar_lea.sflag [#allocation5], 1
    %6686 = vsyncpa %s6685, 1

</llo_original>
